<compile_context>
chip_gen: v7x
topology: tpu7x:2x2x1
jax: 0.10.0
libtpu: 0.0.40
codegen_flags: <defaults>
</compile_context>

<pallas_src>
import functools

import jax
import jax.numpy as jnp
from jax import lax
from jax.experimental import pallas as pl
from jax.experimental.pallas import tpu as pltpu


def _cnn_feaproc_kernel(x_ref, w1e_ref, b1e_ref, w2e_ref, b2e_ref, out_ref,
                        *, NB, H, W, K1, C1, K2, C2, OUT_PAD):
    # Derived static sizes.
    H1, W1 = H - K1 + 1, W - K1 + 1          # conv1 output
    Hp1 = H1 // 2                            # after maxpool (2, 1)
    H2, W2 = Hp1 - K2 + 1, W1 - K2 + 1       # conv2 output
    Hf, Wf = H2 // 2, W2 // 2                # after maxpool (2, 2)

    x = x_ref[...].astype(jnp.bfloat16)      # (H, NB, W), bf16 for the MXU

    # ---- conv1 on the MXU: row-im2col x structured weight (bf16, f32 acc) ---
    # rows[i, n, dh*W + w] = x[i + dh, n, w];  leading-axis slices are free.
    rows = jnp.concatenate([x[dh:dh + H1] for dh in range(K1)], axis=-1)
    rows = rows.reshape(H1 * NB, K1 * W)                       # (H1*NB, 33)
    o1 = jnp.dot(rows, w1e_ref[...], preferred_element_type=jnp.float32)
    # o1: (H1*NB, W1*C1) f32, lane index = j*C1 + c

    # ---- max pool (2, 1) over H, then bias (commutes with the pool) ---------
    o1 = o1.reshape(H1, NB, W1 * C1)[:2 * Hp1]
    o1 = o1.reshape(Hp1, 2, NB, W1 * C1)
    o1p = jnp.maximum(o1[:, 0], o1[:, 1])                      # (Hp1, NB, 900)
    o1p = (o1p + b1e_ref[...].reshape(1, 1, W1 * C1)).astype(jnp.bfloat16)

    # ---- conv2 on the MXU: K2 structured matmuls, f32 accumulation ----------
    # Each per-dh LHS is a leading-axis slab slice + layout-preserving reshape.
    acc = jnp.dot(o1p[0:H2].reshape(H2 * NB, W1 * C1), w2e_ref[0],
                  preferred_element_type=jnp.float32)
    for dh in range(1, K2):
        lhs = o1p[dh:dh + H2].reshape(H2 * NB, W1 * C1)
        acc = acc + jnp.dot(lhs, w2e_ref[dh],
                            preferred_element_type=jnp.float32)
    # acc: (H2*NB, W2*C2) f32, lane index = j*C2 + c2

    # ---- max pool (2, 2): H first, then W -----------------------------------
    o2 = acc.reshape(H2, NB, W2 * C2)[:2 * Hf]
    o2 = o2.reshape(Hf, 2, NB, W2 * C2)
    o2 = jnp.maximum(o2[:, 0], o2[:, 1])                       # (Hf, NB, 250)
    o2 = o2.reshape(Hf, NB, W2, C2)[:, :, :2 * Wf, :]
    o2 = o2.reshape(Hf, NB, Wf, 2, C2)
    o2 = jnp.maximum(o2[:, :, :, 0, :], o2[:, :, :, 1, :])     # (Hf, NB, Wf, C2)

    # ---- bias after the full pool, single lane-dense padded store -----------
    o2 = o2.reshape(Hf, NB, Wf * C2) + b2e_ref[...].reshape(1, 1, Wf * C2)
    if OUT_PAD:
        o2 = jnp.concatenate(
            [o2, jnp.zeros((Hf, NB, OUT_PAD), jnp.float32)], axis=-1)
    out_ref[...] = o2


def _round_up(n, m):
    return (n + m - 1) // m * m


def _pack_conv1_weight(w1, W, W1):
    """w1 (C1,1,K1,K1) -> (K1*W, W1*C1) bf16; column index = j*C1 + c."""
    C1, _, K1, _ = w1.shape
    w1_t = jnp.transpose(w1[:, 0], (1, 2, 0)).astype(jnp.float32)   # (K1,K1,C1)
    dh_i = jnp.arange(K1)[:, None, None, None]
    w_i = jnp.arange(W)[None, :, None, None]
    j_i = jnp.arange(W1)[None, None, :, None]
    c_i = jnp.arange(C1)[None, None, None, :]
    dw = w_i - j_i
    valid = (dw >= 0) & (dw < K1)
    taps = w1_t[dh_i, jnp.clip(dw, 0, K1 - 1), c_i]                 # (K1,W,W1,C1)
    w1e = jnp.where(valid, taps, 0.0)
    return w1e.reshape(K1 * W, W1 * C1).astype(jnp.bfloat16)


def _pack_conv2_weight(w2, W1, W2):
    """w2 (C2,C1,K2,K2) -> (K2, W1*C1, W2*C2) bf16; row = w*C1+c1, col = j*C2+c2."""
    C2, C1, K2, _ = w2.shape
    w2_t = jnp.transpose(w2, (2, 3, 1, 0)).astype(jnp.float32)      # (K2,K2,C1,C2)
    w_i = jnp.arange(W1)[:, None, None, None]
    c1_i = jnp.arange(C1)[None, :, None, None]
    j_i = jnp.arange(W2)[None, None, :, None]
    c2_i = jnp.arange(C2)[None, None, None, :]
    dw = w_i - j_i
    valid = (dw >= 0) & (dw < K2)
    dwc = jnp.clip(dw, 0, K2 - 1)
    slabs = []
    for dh in range(K2):
        taps = w2_t[dh][dwc, c1_i, c2_i]                            # (W1,C1,W2,C2)
        slabs.append(jnp.where(valid, taps, 0.0).reshape(W1 * C1, W2 * C2))
    return jnp.stack(slabs, axis=0).astype(jnp.bfloat16)


def cnn_feaproc(x, w1, b1, w2, b2, *, block_n=256):
    """x: (steps, batch, feat) with feat % 11 == 0. Params in PyTorch layout."""
    steps, batch = x.shape[0], x.shape[1]
    W = 11
    feat = 1
    for d in x.shape[2:]:
        feat *= d
    H = feat // W
    N = steps * batch

    C1, K1 = w1.shape[0], w1.shape[2]        # (100, 1, 3, 3)
    C2, K2 = w2.shape[0], w2.shape[2]        # (50, 100, 5, 5)
    H1, W1 = H - K1 + 1, W - K1 + 1
    Hp1 = H1 // 2
    H2, W2 = Hp1 - K2 + 1, W1 - K2 + 1
    Hf, Wf = H2 // 2, W2 // 2
    assert H2 >= 1 and Hf >= 1 and Wf >= 1, "input height too small"

    # Batch-block size: multiple of 8, capped, with N padded up to a multiple.
    NB = _round_up(min(block_n, _round_up(N, 8)), 8)
    Npad = _round_up(N, NB)

    out_lanes = _round_up(Wf * C2, 128)
    out_pad = out_lanes - Wf * C2

    # Glue: layout preparation only. (S,B,feat) -> (H, Npad, W): samples are
    # contiguous in the second-to-minor dim, so each grid step DMAs H
    # contiguous chunks of NB*W*4 bytes.
    x_im = x.reshape(N, H, W).astype(jnp.float32)
    x_im = jnp.transpose(x_im, (1, 0, 2))
    if Npad != N:
        x_im = jnp.pad(x_im, ((0, 0), (0, Npad - N), (0, 0)))

    w1e = _pack_conv1_weight(w1, W, W1)                              # bf16
    b1e = jnp.tile(b1.astype(jnp.float32), W1).reshape(1, W1 * C1)   # f32
    w2e = _pack_conv2_weight(w2, W1, W2)                             # bf16
    b2e = jnp.tile(b2.astype(jnp.float32), Wf).reshape(1, Wf * C2)   # f32

    kernel = functools.partial(_cnn_feaproc_kernel, NB=NB, H=H, W=W,
                               K1=K1, C1=C1, K2=K2, C2=C2, OUT_PAD=out_pad)

    # Per-step VMEM estimate (lane dims rounded up to 128): conv1 output +
    # pooled activations + double-buffered input + weights/acc/misc headroom.
    lanes1 = _round_up(W1 * C1, 128)
    est = (4 * NB * H1 * lanes1          # o1 f32
           + 6 * NB * Hp1 * lanes1       # pooled f32 + bf16 copy
           + 8 * H * NB * 128            # x double buffer (lane-padded f32)
           + (8 << 20))                  # weights, acc, output, misc
    vmem_limit = max(32 << 20, min(56 << 20, int(est * 1.25)))

    out = pl.pallas_call(
        kernel,
        out_shape=jax.ShapeDtypeStruct((Hf, Npad, out_lanes), jnp.float32),
        grid_spec=pltpu.PrefetchScalarGridSpec(
            num_scalar_prefetch=0,
            grid=(Npad // NB,),
            in_specs=[
                pl.BlockSpec((H, NB, W), lambda n: (0, n, 0)),
                pl.BlockSpec((K1 * W, W1 * C1), lambda n: (0, 0)),
                pl.BlockSpec((1, W1 * C1), lambda n: (0, 0)),
                pl.BlockSpec((K2, W1 * C1, W2 * C2), lambda n: (0, 0, 0)),
                pl.BlockSpec((1, Wf * C2), lambda n: (0, 0)),
            ],
            out_specs=pl.BlockSpec((Hf, NB, out_lanes), lambda n: (0, n, 0)),
        ),
        compiler_params=pltpu.CompilerParams(
            dimension_semantics=("parallel",),
            vmem_limit_bytes=vmem_limit),
    )(x_im, w1e, b1e, w2e, b2e)

    # Glue: strip lane pad and reproduce PyTorch's NCHW flatten:
    # (Hf, N, Wf, C2) -> (N, C2, Hf, Wf) -> (S, B, -1).
    out = out[:, :N, :Wf * C2].reshape(Hf, N, Wf, C2)
    out = jnp.transpose(out, (1, 3, 0, 2))
    return out.reshape(steps, batch, C2 * Hf * Wf)


def cnn_feaproc_reference(x, w1, b1, w2, b2):
    """Pure-JAX reference mirroring the PyTorch forward."""
    steps, batch = x.shape[0], x.shape[1]
    xi = x.reshape(steps * batch, 1, -1, 11).astype(jnp.float32)
    dn = ('NCHW', 'OIHW', 'NCHW')
    o = lax.conv_general_dilated(xi, w1.astype(jnp.float32), (1, 1), 'VALID',
                                 dimension_numbers=dn)
    o = o + b1.reshape(1, -1, 1, 1)
    o = lax.reduce_window(o, -jnp.inf, lax.max,
                          (1, 1, 2, 1), (1, 1, 2, 1), 'VALID')
    o = lax.conv_general_dilated(o, w2.astype(jnp.float32), (1, 1), 'VALID',
                                 dimension_numbers=dn)
    o = o + b2.reshape(1, -1, 1, 1)
    o = lax.reduce_window(o, -jnp.inf, lax.max,
                          (1, 1, 2, 2), (1, 1, 2, 2), 'VALID')
    return o.reshape(steps, batch, -1)


if __name__ == "__main__":
    key = jax.random.PRNGKey(0)
    k1, k2, k3, k4, k5 = jax.random.split(key, 5)

    steps, batch, H, W = 4, 2, 16, 11           # feat = H * 11 = 176
    x = jax.random.normal(k1, (steps, batch, H * W), jnp.float32)

    # Deterministic PyTorch-style fan-in scaled uniform init.
    w1 = jax.random.uniform(k2, (100, 1, 3, 3), jnp.float32, -1.0, 1.0) / 3.0
    b1 = jax.random.uniform(k3, (100,), jnp.float32, -1.0, 1.0) / 3.0
    w2 = jax.random.uniform(k4, (50, 100, 5, 5), jnp.float32, -1.0, 1.0) / 50.0
    b2 = jax.random.uniform(k5, (50,), jnp.float32, -1.0, 1.0) / 50.0

    out = jax.block_until_ready(cnn_feaproc(x, w1, b1, w2, b2))
    ref = jax.block_until_ready(cnn_feaproc_reference(x, w1, b1, w2, b2))

    assert out.shape == ref.shape == (steps, batch, 50 * 1 * 2), out.shape
    if not bool(jnp.allclose(out, ref, rtol=2e-2, atol=2e-2)):
        raise AssertionError(
            f"mismatch, max abs err = {float(jnp.max(jnp.abs(out - ref)))}")
    print("KERNEL_OK")
</pallas_src>

<mosaic_0001>
module attributes {stable_mosaic.version = 11 : i64} {
  func.func @_cnn_feaproc_kernel(%arg0: i32, %arg1: memref<16x8x11xf32, #tpu.memory_space<vmem>>, %arg2: memref<33x900xbf16, #tpu.memory_space<vmem>>, %arg3: memref<1x900xf32, #tpu.memory_space<vmem>>, %arg4: memref<5x900x250xbf16, #tpu.memory_space<vmem>>, %arg5: memref<1x100xf32, #tpu.memory_space<vmem>>, %arg6: memref<1x8x128xf32, #tpu.memory_space<vmem>>) attributes {dimension_semantics = [#tpu.dimension_semantics<parallel>], iteration_bounds = array<i64: 1>, scalar_prefetch = 0 : i64, scratch_operands = 0 : i64, tpu.core_type = #tpu.core_type<tc>, window_params = [{transform_indices = @transform_0, window_bounds = array<i64: 16, 8, 11>}, {pipeline_mode = #tpu.pipeline_mode<synchronous>, transform_indices = @transform_1, window_bounds = array<i64: 33, 900>}, {pipeline_mode = #tpu.pipeline_mode<synchronous>, transform_indices = @transform_2, window_bounds = array<i64: 1, 900>}, {pipeline_mode = #tpu.pipeline_mode<synchronous>, transform_indices = @transform_3, window_bounds = array<i64: 5, 900, 250>}, {pipeline_mode = #tpu.pipeline_mode<synchronous>, transform_indices = @transform_4, window_bounds = array<i64: 1, 100>}, {transform_indices = @transform_5, window_bounds = array<i64: 1, 8, 128>}]} {
    %c0 = arith.constant 0 : index
    %c0_0 = arith.constant 0 : index
    %c0_1 = arith.constant 0 : index
    %0 = vector.load %arg1[%c0, %c0_0, %c0_1] : memref<16x8x11xf32, #tpu.memory_space<vmem>>, vector<16x8x11xf32>
    %1 = arith.truncf %0 : vector<16x8x11xf32> to vector<16x8x11xbf16>
    %2 = vector.extract_strided_slice %1 {offsets = [0, 0, 0], sizes = [14, 8, 11], strides = [1, 1, 1]} : vector<16x8x11xbf16> to vector<14x8x11xbf16>
    %3 = vector.extract_strided_slice %1 {offsets = [1, 0, 0], sizes = [14, 8, 11], strides = [1, 1, 1]} : vector<16x8x11xbf16> to vector<14x8x11xbf16>
    %4 = vector.extract_strided_slice %1 {offsets = [2, 0, 0], sizes = [14, 8, 11], strides = [1, 1, 1]} : vector<16x8x11xbf16> to vector<14x8x11xbf16>
    %5 = tpu.concatenate %2, %3, %4 in 2 : vector<14x8x11xbf16>, vector<14x8x11xbf16>, vector<14x8x11xbf16> -> vector<14x8x33xbf16>
    %6 = vector.shape_cast %5 : vector<14x8x33xbf16> to vector<112x33xbf16>
    %c0_2 = arith.constant 0 : index
    %c0_3 = arith.constant 0 : index
    %7 = vector.load %arg2[%c0_2, %c0_3] : memref<33x900xbf16, #tpu.memory_space<vmem>>, vector<33x900xbf16>
    %cst = arith.constant dense<0.000000e+00> : vector<112x900xf32>
    %8 = tpu.matmul %6, %7, %cst {dimension_numbers = #tpu.dot_dimension_numbers<[1], [0], [0], [1], [0, 0, 1, 1], [], []>} : vector<112x33xbf16>, vector<33x900xbf16>, vector<112x900xf32> -> vector<112x900xf32>
    %9 = vector.shape_cast %8 : vector<112x900xf32> to vector<14x8x900xf32>
    %10 = vector.shape_cast %9 : vector<14x8x900xf32> to vector<7x2x8x900xf32>
    %11 = vector.extract_strided_slice %10 {offsets = [0, 0, 0, 0], sizes = [7, 1, 8, 900], strides = [1, 1, 1, 1]} : vector<7x2x8x900xf32> to vector<7x1x8x900xf32>
    %12 = vector.shape_cast %11 : vector<7x1x8x900xf32> to vector<7x8x900xf32>
    %13 = vector.extract_strided_slice %10 {offsets = [0, 1, 0, 0], sizes = [7, 1, 8, 900], strides = [1, 1, 1, 1]} : vector<7x2x8x900xf32> to vector<7x1x8x900xf32>
    %14 = vector.shape_cast %13 : vector<7x1x8x900xf32> to vector<7x8x900xf32>
    %15 = arith.maximumf %12, %14 : vector<7x8x900xf32>
    %c0_4 = arith.constant 0 : index
    %c0_5 = arith.constant 0 : index
    %16 = vector.load %arg3[%c0_4, %c0_5] : memref<1x900xf32, #tpu.memory_space<vmem>>, vector<1x900xf32>
    %17 = vector.shape_cast %16 : vector<1x900xf32> to vector<1x1x900xf32>
    %18 = vector.broadcast %17 : vector<1x1x900xf32> to vector<7x8x900xf32>
    %19 = arith.addf %15, %18 : vector<7x8x900xf32>
    %20 = arith.truncf %19 : vector<7x8x900xf32> to vector<7x8x900xbf16>
    %21 = vector.extract_strided_slice %20 {offsets = [0, 0, 0], sizes = [3, 8, 900], strides = [1, 1, 1]} : vector<7x8x900xbf16> to vector<3x8x900xbf16>
    %22 = vector.shape_cast %21 : vector<3x8x900xbf16> to vector<24x900xbf16>
    %c0_6 = arith.constant 0 : index
    %c0_7 = arith.constant 0 : index
    %c0_8 = arith.constant 0 : index
    %23 = vector.load %arg4[%c0_6, %c0_7, %c0_8] : memref<5x900x250xbf16, #tpu.memory_space<vmem>>, vector<1x900x250xbf16>
    %24 = vector.shape_cast %23 : vector<1x900x250xbf16> to vector<900x250xbf16>
    %cst_9 = arith.constant dense<0.000000e+00> : vector<24x250xf32>
    %25 = tpu.matmul %22, %24, %cst_9 {dimension_numbers = #tpu.dot_dimension_numbers<[1], [0], [0], [1], [0, 0, 1, 1], [], []>} : vector<24x900xbf16>, vector<900x250xbf16>, vector<24x250xf32> -> vector<24x250xf32>
    %26 = vector.extract_strided_slice %20 {offsets = [1, 0, 0], sizes = [3, 8, 900], strides = [1, 1, 1]} : vector<7x8x900xbf16> to vector<3x8x900xbf16>
    %27 = vector.shape_cast %26 : vector<3x8x900xbf16> to vector<24x900xbf16>
    %c1 = arith.constant 1 : index
    %c0_10 = arith.constant 0 : index
    %c0_11 = arith.constant 0 : index
    %28 = vector.load %arg4[%c1, %c0_10, %c0_11] : memref<5x900x250xbf16, #tpu.memory_space<vmem>>, vector<1x900x250xbf16>
    %29 = vector.shape_cast %28 : vector<1x900x250xbf16> to vector<900x250xbf16>
    %cst_12 = arith.constant dense<0.000000e+00> : vector<24x250xf32>
    %30 = tpu.matmul %27, %29, %cst_12 {dimension_numbers = #tpu.dot_dimension_numbers<[1], [0], [0], [1], [0, 0, 1, 1], [], []>} : vector<24x900xbf16>, vector<900x250xbf16>, vector<24x250xf32> -> vector<24x250xf32>
    %31 = arith.addf %25, %30 : vector<24x250xf32>
    %32 = vector.extract_strided_slice %20 {offsets = [2, 0, 0], sizes = [3, 8, 900], strides = [1, 1, 1]} : vector<7x8x900xbf16> to vector<3x8x900xbf16>
    %33 = vector.shape_cast %32 : vector<3x8x900xbf16> to vector<24x900xbf16>
    %c2 = arith.constant 2 : index
    %c0_13 = arith.constant 0 : index
    %c0_14 = arith.constant 0 : index
    %34 = vector.load %arg4[%c2, %c0_13, %c0_14] : memref<5x900x250xbf16, #tpu.memory_space<vmem>>, vector<1x900x250xbf16>
    %35 = vector.shape_cast %34 : vector<1x900x250xbf16> to vector<900x250xbf16>
    %cst_15 = arith.constant dense<0.000000e+00> : vector<24x250xf32>
    %36 = tpu.matmul %33, %35, %cst_15 {dimension_numbers = #tpu.dot_dimension_numbers<[1], [0], [0], [1], [0, 0, 1, 1], [], []>} : vector<24x900xbf16>, vector<900x250xbf16>, vector<24x250xf32> -> vector<24x250xf32>
    %37 = arith.addf %31, %36 : vector<24x250xf32>
    %38 = vector.extract_strided_slice %20 {offsets = [3, 0, 0], sizes = [3, 8, 900], strides = [1, 1, 1]} : vector<7x8x900xbf16> to vector<3x8x900xbf16>
    %39 = vector.shape_cast %38 : vector<3x8x900xbf16> to vector<24x900xbf16>
    %c3 = arith.constant 3 : index
    %c0_16 = arith.constant 0 : index
    %c0_17 = arith.constant 0 : index
    %40 = vector.load %arg4[%c3, %c0_16, %c0_17] : memref<5x900x250xbf16, #tpu.memory_space<vmem>>, vector<1x900x250xbf16>
    %41 = vector.shape_cast %40 : vector<1x900x250xbf16> to vector<900x250xbf16>
    %cst_18 = arith.constant dense<0.000000e+00> : vector<24x250xf32>
    %42 = tpu.matmul %39, %41, %cst_18 {dimension_numbers = #tpu.dot_dimension_numbers<[1], [0], [0], [1], [0, 0, 1, 1], [], []>} : vector<24x900xbf16>, vector<900x250xbf16>, vector<24x250xf32> -> vector<24x250xf32>
    %43 = arith.addf %37, %42 : vector<24x250xf32>
    %44 = vector.extract_strided_slice %20 {offsets = [4, 0, 0], sizes = [3, 8, 900], strides = [1, 1, 1]} : vector<7x8x900xbf16> to vector<3x8x900xbf16>
    %45 = vector.shape_cast %44 : vector<3x8x900xbf16> to vector<24x900xbf16>
    %c4 = arith.constant 4 : index
    %c0_19 = arith.constant 0 : index
    %c0_20 = arith.constant 0 : index
    %46 = vector.load %arg4[%c4, %c0_19, %c0_20] : memref<5x900x250xbf16, #tpu.memory_space<vmem>>, vector<1x900x250xbf16>
    %47 = vector.shape_cast %46 : vector<1x900x250xbf16> to vector<900x250xbf16>
    %cst_21 = arith.constant dense<0.000000e+00> : vector<24x250xf32>
    %48 = tpu.matmul %45, %47, %cst_21 {dimension_numbers = #tpu.dot_dimension_numbers<[1], [0], [0], [1], [0, 0, 1, 1], [], []>} : vector<24x900xbf16>, vector<900x250xbf16>, vector<24x250xf32> -> vector<24x250xf32>
    %49 = arith.addf %43, %48 : vector<24x250xf32>
    %50 = vector.shape_cast %49 : vector<24x250xf32> to vector<3x8x250xf32>
    %51 = vector.extract_strided_slice %50 {offsets = [0, 0, 0], sizes = [2, 8, 250], strides = [1, 1, 1]} : vector<3x8x250xf32> to vector<2x8x250xf32>
    %52 = vector.shape_cast %51 : vector<2x8x250xf32> to vector<1x2x8x250xf32>
    %53 = vector.extract_strided_slice %52 {offsets = [0, 0, 0, 0], sizes = [1, 1, 8, 250], strides = [1, 1, 1, 1]} : vector<1x2x8x250xf32> to vector<1x1x8x250xf32>
    %54 = vector.shape_cast %53 : vector<1x1x8x250xf32> to vector<1x8x250xf32>
    %55 = vector.extract_strided_slice %52 {offsets = [0, 1, 0, 0], sizes = [1, 1, 8, 250], strides = [1, 1, 1, 1]} : vector<1x2x8x250xf32> to vector<1x1x8x250xf32>
    %56 = vector.shape_cast %55 : vector<1x1x8x250xf32> to vector<1x8x250xf32>
    %57 = arith.maximumf %54, %56 : vector<1x8x250xf32>
    %58 = vector.shape_cast %57 : vector<1x8x250xf32> to vector<1x8x5x50xf32>
    %59 = vector.extract_strided_slice %58 {offsets = [0, 0, 0, 0], sizes = [1, 8, 4, 50], strides = [1, 1, 1, 1]} : vector<1x8x5x50xf32> to vector<1x8x4x50xf32>
    %60 = vector.shape_cast %59 : vector<1x8x4x50xf32> to vector<1x8x2x2x50xf32>
    %61 = vector.extract_strided_slice %60 {offsets = [0, 0, 0, 0, 0], sizes = [1, 8, 2, 1, 50], strides = [1, 1, 1, 1, 1]} : vector<1x8x2x2x50xf32> to vector<1x8x2x1x50xf32>
    %62 = vector.shape_cast %61 : vector<1x8x2x1x50xf32> to vector<1x8x2x50xf32>
    %63 = vector.extract_strided_slice %60 {offsets = [0, 0, 0, 1, 0], sizes = [1, 8, 2, 1, 50], strides = [1, 1, 1, 1, 1]} : vector<1x8x2x2x50xf32> to vector<1x8x2x1x50xf32>
    %64 = vector.shape_cast %63 : vector<1x8x2x1x50xf32> to vector<1x8x2x50xf32>
    %65 = arith.maximumf %62, %64 : vector<1x8x2x50xf32>
    %66 = vector.shape_cast %65 : vector<1x8x2x50xf32> to vector<1x8x100xf32>
    %c0_22 = arith.constant 0 : index
    %c0_23 = arith.constant 0 : index
    %67 = vector.load %arg5[%c0_22, %c0_23] : memref<1x100xf32, #tpu.memory_space<vmem>>, vector<1x100xf32>
    %68 = vector.shape_cast %67 : vector<1x100xf32> to vector<1x1x100xf32>
    %69 = vector.broadcast %68 : vector<1x1x100xf32> to vector<1x8x100xf32>
    %70 = arith.addf %66, %69 : vector<1x8x100xf32>
    %cst_24 = arith.constant 0.000000e+00 : f32
    %71 = vector.broadcast %cst_24 : f32 to vector<1x8x28xf32>
    %72 = tpu.concatenate %70, %71 in 2 : vector<1x8x100xf32>, vector<1x8x28xf32> -> vector<1x8x128xf32>
    %c0_25 = arith.constant 0 : index
    %c0_26 = arith.constant 0 : index
    %c0_27 = arith.constant 0 : index
    %73 = vector.load %arg6[%c0_25, %c0_26, %c0_27] : memref<1x8x128xf32, #tpu.memory_space<vmem>>, vector<1x8x128xf32>
    tpu.vector_store %arg6[%c0_25, %c0_26, %c0_27], %72 {strides = array<i32>} : memref<1x8x128xf32, #tpu.memory_space<vmem>>, vector<1x8x128xf32>,
    return
  }
  func.func @transform_0(%arg0: i32) -> (i32, i32, i32) {
    %c0_i32 = arith.constant 0 : i32
    %c0_i32_0 = arith.constant 0 : i32
    %c0_i32_1 = arith.constant 0 : i32
    return %c0_i32, %arg0, %c0_i32_0 : i32, i32, i32
  }
  func.func @transform_1(%arg0: i32) -> (i32, i32) {
    %c0_i32 = arith.constant 0 : i32
    %c0_i32_0 = arith.constant 0 : i32
    %c0_i32_1 = arith.constant 0 : i32
    return %c0_i32, %c0_i32_0 : i32, i32
  }
  func.func @transform_2(%arg0: i32) -> (i32, i32) {
    %c0_i32 = arith.constant 0 : i32
    %c0_i32_0 = arith.constant 0 : i32
    %c0_i32_1 = arith.constant 0 : i32
    return %c0_i32, %c0_i32_0 : i32, i32
  }
  func.func @transform_3(%arg0: i32) -> (i32, i32, i32) {
    %c0_i32 = arith.constant 0 : i32
    %c0_i32_0 = arith.constant 0 : i32
    %c0_i32_1 = arith.constant 0 : i32
    %c0_i32_2 = arith.constant 0 : i32
    return %c0_i32, %c0_i32_0, %c0_i32_1 : i32, i32, i32
  }
  func.func @transform_4(%arg0: i32) -> (i32, i32) {
    %c0_i32 = arith.constant 0 : i32
    %c0_i32_0 = arith.constant 0 : i32
    %c0_i32_1 = arith.constant 0 : i32
    return %c0_i32, %c0_i32_0 : i32, i32
  }
  func.func @transform_5(%arg0: i32) -> (i32, i32, i32) {
    %c0_i32 = arith.constant 0 : i32
    %c0_i32_0 = arith.constant 0 : i32
    %c0_i32_1 = arith.constant 0 : i32
    return %c0_i32, %arg0, %c0_i32_0 : i32, i32, i32
  }
}

</mosaic_0001>

<llo_original>
// kernel: tpu_custom_call.1
$region0: #{tpu_custom_call.1}
  #allocation0 [shape = 'u32[]', space=smem, size = 0x4, offset = 0x4, fixed_abs, tag = 'smem constant byte address 0x4 - core index']
  #allocation1 [shape = 'u32[144,128]{1,0:T(1,128)}', space=vmem, size = 0x12000, scoped, tag = 'internal scratch']
  %s0 = inlined_call_operand.vmem [shape: f32[16,8,11], index: 0, kind: input, shape index: {}]
  %s1 = inlined_call_operand.hbm [shape: bf16[33,900], index: 1, kind: input, shape index: {}]
  %s2 = inlined_call_operand.hbm [shape: f32[1,900], index: 2, kind: input, shape index: {}]
  %s3 = inlined_call_operand.hbm [shape: bf16[5,900,250], index: 3, kind: input, shape index: {}]
  %s4 = inlined_call_operand.hbm [shape: f32[1,100], index: 4, kind: input, shape index: {}]
  %s5 = inlined_call_operand.hbm [shape: f32[1,8,128], index: 5, kind: output, shape index: {}]
  %s6 = sld [smem:[#allocation0]]
  $region46: #{tpu_custom_call.1} parent=0
    _
  %s8 = ssub.s32 1, %s6
  %s9 = scalar_select 0, %s8, %s6
  $region1: #{tpu_custom_call.1} parent=0
    #allocation2 [shape = 'u8[81920]{0}', space=vmem, size = 0x14000, scoped, tag = 'input window, operand 1, single buffered']
    #allocation3 [shape = 's32[1]{0}', space=sflag, size = 0x4, scoped, tag = 'scoped memory for tpu_custom_call.1']
    #allocation4 [shape = 's32[1]{0}', space=sflag, size = 0x4, scoped, tag = 'scoped memory for tpu_custom_call.1']
    #allocation5 [shape = 'u8[4096]{0}', space=vmem, size = 0x1000, scoped, tag = 'input window, operand 2, single buffered']
    #allocation6 [shape = 's32[1]{0}', space=sflag, size = 0x4, scoped, tag = 'scoped memory for tpu_custom_call.1']
    #allocation7 [shape = 'u8[2314240]{0}', space=vmem, size = 0x235000, scoped, tag = 'input window, operand 3, single buffered']
    #allocation8 [shape = 'u8[512]{0}', space=vmem, size = 0x400, scoped, tag = 'input window, operand 4, single buffered']
    #allocation9 [shape = 's32[1]{0}', space=sflag, size = 0x4, scoped, tag = 'scoped memory for tpu_custom_call.1']
    #allocation10 [shape = 'u8[4096]{0}', space=vmem, size = 0x1000, scoped, tag = 'output window, operand 0, single buffered']
    %10 = vsyncpa [#allocation3], 0
    %11 = vsyncpa [#allocation6], 0
    %12 = vsyncpa [#allocation9], 0
    %13 = vsyncpa [#allocation4], 0
    // Predicated region
    $region2: #{tpu_custom_call.1} parent=1 // pred_check
      _
    $region3: #{tpu_custom_call.1} parent=1 // pred_check_branch
      %15 = sbr.rel (0) target = $region5
    $region4: #{tpu_custom_call.1} parent=1 // pred_region
      _
    $region5: #{tpu_custom_call.1} parent=1 // pred_fallthru
      _
    // Predicated region
    $region6: #{tpu_custom_call.1} parent=1 // pred_check
      _
    $region7: #{tpu_custom_call.1} parent=1 // pred_check_branch
      %17 = sbr.rel (0) target = $region9
    $region8: #{tpu_custom_call.1} parent=1 // pred_region
      %s19 = ssub.s32 2560, 2560
      %20 = vsyncadd [#allocation3], %s19
      %s21 = sshll.u32 [#allocation2], 4
      %s22 = int_to_ptr.vmem [resolvable:$true] %s21
      %27 = dma.hbm_to_vmem [thread:$0]  %s1, 2560, %s22, [#allocation3], 512, 512, 32
    $region9: #{tpu_custom_call.1} parent=1 // pred_fallthru
      _
    // Predicated region
    $region10: #{tpu_custom_call.1} parent=1 // pred_check
      _
    $region11: #{tpu_custom_call.1} parent=1 // pred_check_branch
      %29 = sbr.rel (0) target = $region13
    $region12: #{tpu_custom_call.1} parent=1 // pred_region
      %s31 = ssub.s32 128, 128
      %32 = vsyncadd [#allocation6], %s31
      %s34 = sshll.u32 [#allocation5], 4
      %s35 = int_to_ptr.vmem [resolvable:$true] %s34
      %37 = dma.hbm_to_vmem [thread:$0]  %s2, 128, %s35, [#allocation6]
    $region13: #{tpu_custom_call.1} parent=1 // pred_fallthru
      _
    // Predicated region
    $region14: #{tpu_custom_call.1} parent=1 // pred_check
      _
    $region15: #{tpu_custom_call.1} parent=1 // pred_check_branch
      %39 = sbr.rel (0) target = $region17
    $region16: #{tpu_custom_call.1} parent=1 // pred_region
      %s41 = ssub.s32 72320, 72320
      %42 = vsyncadd [#allocation6], %s41
      %s43 = sshll.u32 [#allocation7], 4
      %s44 = int_to_ptr.vmem [resolvable:$true] %s43
      %49 = dma.hbm_to_vmem [thread:$0]  %s3, 72320, %s44, [#allocation6], 128, 128, 8
    $region17: #{tpu_custom_call.1} parent=1 // pred_fallthru
      _
    // Predicated region
    $region18: #{tpu_custom_call.1} parent=1 // pred_check
      _
    $region19: #{tpu_custom_call.1} parent=1 // pred_check_branch
      %51 = sbr.rel (0) target = $region21
    $region20: #{tpu_custom_call.1} parent=1 // pred_region
      %s53 = ssub.s32 16, 16
      %54 = vsyncadd [#allocation9], %s53
      %s56 = sshll.u32 [#allocation8], 4
      %s57 = int_to_ptr.vmem [resolvable:$true] %s56
      %59 = dma.hbm_to_vmem [thread:$0]  %s4, 16, %s57, [#allocation9]
    $region21: #{tpu_custom_call.1} parent=1 // pred_fallthru
      _
    // Predicated region
    $region22: #{tpu_custom_call.1} parent=1 // pred_check
      _
    $region23: #{tpu_custom_call.1} parent=1 // pred_check_branch
      %61 = sbr.rel (0) target = $region25
    $region24: #{tpu_custom_call.1} parent=1 // pred_region
      %62 = dma.done [#allocation3], 2560
    $region25: #{tpu_custom_call.1} parent=1 // pred_fallthru
      _
    // Predicated region
    $region26: #{tpu_custom_call.1} parent=1 // pred_check
      _
    $region27: #{tpu_custom_call.1} parent=1 // pred_check_branch
      %64 = sbr.rel (0) target = $region29
    $region28: #{tpu_custom_call.1} parent=1 // pred_region
      %65 = dma.done [#allocation6], 128
    $region29: #{tpu_custom_call.1} parent=1 // pred_fallthru
      _
    // Predicated region
    $region30: #{tpu_custom_call.1} parent=1 // pred_check
      _
    $region31: #{tpu_custom_call.1} parent=1 // pred_check_branch
      %67 = sbr.rel (0) target = $region33
    $region32: #{tpu_custom_call.1} parent=1 // pred_region
      %68 = dma.done [#allocation6], 72320
    $region33: #{tpu_custom_call.1} parent=1 // pred_fallthru
      _
    // Predicated region
    $region34: #{tpu_custom_call.1} parent=1 // pred_check
      _
    $region35: #{tpu_custom_call.1} parent=1 // pred_check_branch
      %70 = sbr.rel (0) target = $region37
    $region36: #{tpu_custom_call.1} parent=1 // pred_region
      %71 = dma.done [#allocation9], 16
    $region37: #{tpu_custom_call.1} parent=1 // pred_fallthru
      _
    %v73 = vld [vmem:[%s0] sm:$0xff]
    %v74 = vld [vmem:[%s0 + $0x8] sm:$0xff]
    %v75 = vld [vmem:[%s0 + $0x10] sm:$0xff]
    %v76 = vld [vmem:[%s0 + $0x18] sm:$0xff]
    %v77 = vld [vmem:[%s0 + $0x20] sm:$0xff]
    %v78 = vld [vmem:[%s0 + $0x28] sm:$0xff]
    %v79 = vld [vmem:[%s0 + $0x30] sm:$0xff]
    %v80 = vld [vmem:[%s0 + $0x38] sm:$0xff]
    %v81 = vld [vmem:[%s0 + $0x40] sm:$0xff]
    %v82 = vld [vmem:[%s0 + $0x48] sm:$0xff]
    %v83 = vld [vmem:[%s0 + $0x50] sm:$0xff]
    %v84 = vld [vmem:[%s0 + $0x58] sm:$0xff]
    %v85 = vld [vmem:[%s0 + $0x60] sm:$0xff]
    %v86 = vld [vmem:[%s0 + $0x68] sm:$0xff]
    %v87 = vld [vmem:[%s0 + $0x70] sm:$0xff]
    %v88 = vld [vmem:[%s0 + $0x78] sm:$0xff]
    %v89 = vpack.c.bf16 %v73, %v73
    %v90 = vpack.c.bf16 %v74, %v74
    %v91 = vpack.c.bf16 %v75, %v75
    %v92 = vpack.c.bf16 %v76, %v76
    %v93 = vpack.c.bf16 %v77, %v77
    %v94 = vpack.c.bf16 %v78, %v78
    %v95 = vpack.c.bf16 %v79, %v79
    %v96 = vpack.c.bf16 %v80, %v80
    %v97 = vpack.c.bf16 %v81, %v81
    %v98 = vpack.c.bf16 %v82, %v82
    %v99 = vpack.c.bf16 %v83, %v83
    %v100 = vpack.c.bf16 %v84, %v84
    %v101 = vpack.c.bf16 %v85, %v85
    %v102 = vpack.c.bf16 %v86, %v86
    %v103 = vpack.c.bf16 %v87, %v87
    %v104 = vpack.c.bf16 %v88, %v88
    %119 = vrot.lane.b32.xlu0 %v90, 11
    %v120 = vpop.permute.xlu0 %119
    %121 = vrot.lane.b32.xlu0 %v91, 11
    %v122 = vpop.permute.xlu0 %121
    %123 = vrot.lane.b32.xlu0 %v92, 11
    %v124 = vpop.permute.xlu0 %123
    %125 = vrot.lane.b32.xlu0 %v93, 11
    %v126 = vpop.permute.xlu0 %125
    %127 = vrot.lane.b32.xlu0 %v94, 11
    %v128 = vpop.permute.xlu0 %127
    %129 = vrot.lane.b32.xlu0 %v95, 11
    %v130 = vpop.permute.xlu0 %129
    %131 = vrot.lane.b32.xlu0 %v96, 11
    %v132 = vpop.permute.xlu0 %131
    %133 = vrot.lane.b32.xlu0 %v97, 11
    %v134 = vpop.permute.xlu0 %133
    %135 = vrot.lane.b32.xlu0 %v98, 11
    %v136 = vpop.permute.xlu0 %135
    %137 = vrot.lane.b32.xlu0 %v99, 11
    %v138 = vpop.permute.xlu0 %137
    %139 = vrot.lane.b32.xlu0 %v100, 11
    %v140 = vpop.permute.xlu0 %139
    %141 = vrot.lane.b32.xlu0 %v101, 11
    %v142 = vpop.permute.xlu0 %141
    %143 = vrot.lane.b32.xlu0 %v102, 11
    %v144 = vpop.permute.xlu0 %143
    %145 = vrot.lane.b32.xlu0 %v103, 11
    %v146 = vpop.permute.xlu0 %145
    %148 = vrot.lane.b32.xlu0 %v91, 22
    %v149 = vpop.permute.xlu0 %148
    %150 = vrot.lane.b32.xlu0 %v92, 22
    %v151 = vpop.permute.xlu0 %150
    %152 = vrot.lane.b32.xlu0 %v93, 22
    %v153 = vpop.permute.xlu0 %152
    %154 = vrot.lane.b32.xlu0 %v94, 22
    %v155 = vpop.permute.xlu0 %154
    %156 = vrot.lane.b32.xlu0 %v95, 22
    %v157 = vpop.permute.xlu0 %156
    %158 = vrot.lane.b32.xlu0 %v96, 22
    %v159 = vpop.permute.xlu0 %158
    %160 = vrot.lane.b32.xlu0 %v97, 22
    %v161 = vpop.permute.xlu0 %160
    %162 = vrot.lane.b32.xlu0 %v98, 22
    %v163 = vpop.permute.xlu0 %162
    %164 = vrot.lane.b32.xlu0 %v99, 22
    %v165 = vpop.permute.xlu0 %164
    %166 = vrot.lane.b32.xlu0 %v100, 22
    %v167 = vpop.permute.xlu0 %166
    %168 = vrot.lane.b32.xlu0 %v101, 22
    %v169 = vpop.permute.xlu0 %168
    %170 = vrot.lane.b32.xlu0 %v102, 22
    %v171 = vpop.permute.xlu0 %170
    %172 = vrot.lane.b32.xlu0 %v103, 22
    %v173 = vpop.permute.xlu0 %172
    %174 = vrot.lane.b32.xlu0 %v104, 22
    %v175 = vpop.permute.xlu0 %174
    %vm176 = vcmask 89088
    %v179 = vsel %vm176, %v89, %v120
    %v182 = vsel %vm176, %v90, %v122
    %v185 = vsel %vm176, %v91, %v124
    %v188 = vsel %vm176, %v92, %v126
    %v191 = vsel %vm176, %v93, %v128
    %v194 = vsel %vm176, %v94, %v130
    %v197 = vsel %vm176, %v95, %v132
    %v200 = vsel %vm176, %v96, %v134
    %v203 = vsel %vm176, %v97, %v136
    %v206 = vsel %vm176, %v98, %v138
    %v209 = vsel %vm176, %v99, %v140
    %v212 = vsel %vm176, %v100, %v142
    %v215 = vsel %vm176, %v101, %v144
    %v218 = vsel %vm176, %v102, %v146
    %vm219 = vcmask 179200
    %v221 = vsel %vm219, %v179, %v149
    %v223 = vsel %vm219, %v182, %v151
    %v225 = vsel %vm219, %v185, %v153
    %v227 = vsel %vm219, %v188, %v155
    %v229 = vsel %vm219, %v191, %v157
    %v231 = vsel %vm219, %v194, %v159
    %v233 = vsel %vm219, %v197, %v161
    %v235 = vsel %vm219, %v200, %v163
    %v237 = vsel %vm219, %v203, %v165
    %v239 = vsel %vm219, %v206, %v167
    %v241 = vsel %vm219, %v209, %v169
    %v243 = vsel %vm219, %v212, %v171
    %v245 = vsel %vm219, %v215, %v173
    %v247 = vsel %vm219, %v218, %v175
    %v248 = vld [vmem:[#allocation2] sm:$0xff]
    %v249 = vld [vmem:[#allocation2 + $0x8] sm:$0xff]
    %v250 = vld [vmem:[#allocation2 + $0x10] sm:$0xff]
    %v251 = vld [vmem:[#allocation2 + $0x18] sm:$0xff]
    %v252 = vld [vmem:[#allocation2 + $0x20] sm:$0xff]
    %v253 = vld [vmem:[#allocation2 + $0x28] sm:$0xff]
    %v254 = vld [vmem:[#allocation2 + $0x30] sm:$0xff]
    %v255 = vld [vmem:[#allocation2 + $0x38] sm:$0xff]
    %v256 = vld [vmem:[#allocation2 + $0x40] sm:$0xff]
    %v257 = vld [vmem:[#allocation2 + $0x48] sm:$0xff]
    %v258 = vld [vmem:[#allocation2 + $0x50] sm:$0xff]
    %v259 = vld [vmem:[#allocation2 + $0x58] sm:$0xff]
    %v260 = vld [vmem:[#allocation2 + $0x60] sm:$0xff]
    %v261 = vld [vmem:[#allocation2 + $0x68] sm:$0xff]
    %v262 = vld [vmem:[#allocation2 + $0x70] sm:$0xff]
    %v263 = vld [vmem:[#allocation2 + $0x78] sm:$0xff]
    %v264 = vld [vmem:[#allocation2 + $0x80] sm:$0x11]
    %v265 = vld [vmem:[#allocation2 + $0x88] sm:$0x11]
    %v266 = vld [vmem:[#allocation2 + $0x90] sm:$0x11]
    %v267 = vld [vmem:[#allocation2 + $0x98] sm:$0x11]
    %v282 = vunpack.c.l.b16 %v221
    %v283 = vunpack.c.l.b16 %v223
    %v284 = vunpack.c.l.b16 %v225
    %v285 = vunpack.c.l.b16 %v227
    %v286 = vunpack.c.l.b16 %v229
    %v287 = vunpack.c.l.b16 %v231
    %v288 = vunpack.c.l.b16 %v233
    %v289 = vunpack.c.l.b16 %v235
    %v290 = vunpack.c.l.b16 %v237
    %v291 = vunpack.c.l.b16 %v239
    %v292 = vunpack.c.l.b16 %v241
    %v293 = vunpack.c.l.b16 %v243
    %v294 = vunpack.c.l.b16 %v245
    %v295 = vunpack.c.l.b16 %v247
    %v296 = vpack.c.b16 %v283, %v282
    %v297 = vpack.c.b16 %v285, %v284
    %v298 = vpack.c.b16 %v287, %v286
    %v299 = vpack.c.b16 %v289, %v288
    %v300 = vpack.c.b16 %v291, %v290
    %v301 = vpack.c.b16 %v293, %v292
    %v302 = vpack.c.b16 %v295, %v294
    %v323 = vunpack.c.l.b16 %v248
    %v324 = vunpack.c.h.b16 %v248
    %v325 = vunpack.c.l.b16 %v249
    %v326 = vunpack.c.h.b16 %v249
    %v327 = vunpack.c.l.b16 %v250
    %v328 = vunpack.c.h.b16 %v250
    %v329 = vunpack.c.l.b16 %v251
    %v330 = vunpack.c.h.b16 %v251
    %v331 = vunpack.c.l.b16 %v252
    %v332 = vunpack.c.h.b16 %v252
    %v333 = vunpack.c.l.b16 %v253
    %v334 = vunpack.c.h.b16 %v253
    %v335 = vunpack.c.l.b16 %v254
    %v336 = vunpack.c.h.b16 %v254
    %v337 = vunpack.c.l.b16 %v255
    %v338 = vunpack.c.h.b16 %v255
    %v339 = vunpack.c.l.b16 %v256
    %v340 = vunpack.c.h.b16 %v256
    %v341 = vunpack.c.l.b16 %v257
    %v342 = vunpack.c.h.b16 %v257
    %v343 = vunpack.c.l.b16 %v258
    %v344 = vunpack.c.h.b16 %v258
    %v345 = vunpack.c.l.b16 %v259
    %v346 = vunpack.c.h.b16 %v259
    %v347 = vunpack.c.l.b16 %v260
    %v348 = vunpack.c.h.b16 %v260
    %v349 = vunpack.c.l.b16 %v261
    %v350 = vunpack.c.h.b16 %v261
    %v351 = vunpack.c.l.b16 %v262
    %v352 = vunpack.c.h.b16 %v262
    %v353 = vunpack.c.l.b16 %v263
    %v354 = vunpack.c.h.b16 %v263
    %v355 = vunpack.c.l.b16 %v264
    %v356 = vunpack.c.h.b16 %v264
    %v357 = vunpack.c.l.b16 %v265
    %v358 = vunpack.c.h.b16 %v265
    %v359 = vunpack.c.l.b16 %v266
    %v360 = vunpack.c.h.b16 %v266
    %v361 = vunpack.c.l.b16 %v267
    %v362 = vunpack.c.h.b16 %v267
    %v363 = vpack.c.b16 %v331, %v323
    %v364 = vpack.c.b16 %v332, %v324
    %v365 = vpack.c.b16 %v333, %v325
    %v366 = vpack.c.b16 %v334, %v326
    %v367 = vpack.c.b16 %v335, %v327
    %v368 = vpack.c.b16 %v336, %v328
    %v369 = vpack.c.b16 %v337, %v329
    %v370 = vpack.c.b16 %v338, %v330
    %v371 = vpack.c.b16 %v347, %v339
    %v372 = vpack.c.b16 %v348, %v340
    %v373 = vpack.c.b16 %v349, %v341
    %v374 = vpack.c.b16 %v350, %v342
    %v375 = vpack.c.b16 %v351, %v343
    %v376 = vpack.c.b16 %v352, %v344
    %v377 = vpack.c.b16 %v353, %v345
    %v378 = vpack.c.b16 %v354, %v346
    %v379 = vpack.c.b16 %v355, %v355
    %v380 = vpack.c.b16 %v356, %v356
    %v381 = vpack.c.b16 %v357, %v357
    %v382 = vpack.c.b16 %v358, %v358
    %v383 = vpack.c.b16 %v359, %v359
    %v384 = vpack.c.b16 %v360, %v360
    %v385 = vpack.c.b16 %v361, %v361
    %v386 = vpack.c.b16 %v362, %v362
    %vm403 = vcmask 269312
    %v405 = vsel %vm403, %v296, 0
    %v408 = vsel %vm403, %v297, 0
    %v411 = vsel %vm403, %v298, 0
    %v414 = vsel %vm403, %v299, 0
    %v417 = vsel %vm403, %v300, 0
    %v420 = vsel %vm403, %v301, 0
    %v423 = vsel %vm403, %v302, 0
    %vm425 = vcmask 1040384
    %v426 = vsel 0, 4294967295, 65535
    %v427 = vsel %vm425, %v426, 0
    %v429 = vand.u32 %v379, %v427
    %v432 = vand.u32 %v380, %v427
    %v435 = vand.u32 %v381, %v427
    %v438 = vand.u32 %v382, %v427
    %v441 = vand.u32 %v383, %v427
    %v444 = vand.u32 %v384, %v427
    %v447 = vand.u32 %v385, %v427
    %v450 = vand.u32 %v386, %v427
    %452 = vmatprep.subr.bf16.mxu0 %v364
    %453 = vmatpush1.bf16.msra.mxu0 %v363
    %454 = vmatprep.subr.bf16.mxu0 %v372
    %455 = vmatpush1.bf16.msra.mxu0 %v371
    %456 = vmatprep.subr.bf16.mxu0 %v432
    %457 = vmatpush1.bf16.msra.mxu0 %v429
    %458 = vmatprep.subr.bf16.mxu0 0
    %459 = vmatpush1.bf16.msra.mxu0 0
    %460 = vmatprep.subr.bf16.mxu0 0
    %461 = vmatpush1.bf16.msra.mxu0 0
    %462 = vmatprep.subr.bf16.mxu0 0
    %463 = vmatpush1.bf16.msra.mxu0 0
    %464 = vmatprep.subr.bf16.mxu0 0
    %465 = vmatpush1.bf16.msra.mxu0 0
    %466 = vmatprep.subr.bf16.mxu0 0
    %467 = vmatpush1.bf16.msra.mxu0 0
    %468 = vmatprep.subr.bf16.mxu0 0
    %469 = vmatpush1.bf16.msra.mxu0 0
    %470 = vmatprep.subr.bf16.mxu0 0
    %471 = vmatpush1.bf16.msra.mxu0 0
    %472 = vmatprep.subr.bf16.mxu0 0
    %473 = vmatpush1.bf16.msra.mxu0 0
    %474 = vmatprep.subr.bf16.mxu0 0
    %475 = vmatpush1.bf16.msra.mxu0 0
    %476 = vmatprep.subr.bf16.mxu0 0
    %477 = vmatpush1.bf16.msra.mxu0 0
    %478 = vmatprep.subr.bf16.mxu0 0
    %479 = vmatpush1.bf16.msra.mxu0 0
    %480 = vmatprep.subr.bf16.mxu0 0
    %481 = vmatpush1.bf16.msra.mxu0 0
    %482 = vmatprep.subr.bf16.mxu0 0
    %483 = vmatpush1.bf16.msra.mxu0 0
    %484 = vmatprep.mubr.bf16.mxu0 0
    %485 = vmatmul.mubr.bf16.gmra.mrb[0].mxu0 %v405
    %v486 = vpop.f32.mrb[0].mxu0
    %v487 = vadd.f32 0.0, %v486
    %v488 = vpop.f32.mrb[0].mxu0
    %v489 = vadd.f32 0.0, %v488
    %v490 = vpop.f32.mrb[0].mxu0
    %v491 = vadd.f32 0.0, %v490
    %v492 = vpop.f32.mrb[0].mxu0
    %v493 = vadd.f32 0.0, %v492
    %494 = vmatprep.mubr.bf16.mxu0 0
    %495 = vmatmul.mubr.bf16.gmra.mrb[0].mxu0 %v408
    %v496 = vpop.f32.mrb[0].mxu0
    %v497 = vadd.f32 0.0, %v496
    %v498 = vpop.f32.mrb[0].mxu0
    %v499 = vadd.f32 0.0, %v498
    %v500 = vpop.f32.mrb[0].mxu0
    %v501 = vadd.f32 0.0, %v500
    %v502 = vpop.f32.mrb[0].mxu0
    %v503 = vadd.f32 0.0, %v502
    %504 = vmatprep.mubr.bf16.mxu0 0
    %505 = vmatmul.mubr.bf16.gmra.mrb[0].mxu0 %v411
    %v506 = vpop.f32.mrb[0].mxu0
    %v507 = vadd.f32 0.0, %v506
    %v508 = vpop.f32.mrb[0].mxu0
    %v509 = vadd.f32 0.0, %v508
    %v510 = vpop.f32.mrb[0].mxu0
    %v511 = vadd.f32 0.0, %v510
    %v512 = vpop.f32.mrb[0].mxu0
    %v513 = vadd.f32 0.0, %v512
    %514 = vmatprep.mubr.bf16.mxu0 0
    %515 = vmatmul.mubr.bf16.gmra.mrb[0].mxu0 %v414
    %v516 = vpop.f32.mrb[0].mxu0
    %v517 = vadd.f32 0.0, %v516
    %v518 = vpop.f32.mrb[0].mxu0
    %v519 = vadd.f32 0.0, %v518
    %v520 = vpop.f32.mrb[0].mxu0
    %v521 = vadd.f32 0.0, %v520
    %v522 = vpop.f32.mrb[0].mxu0
    %v523 = vadd.f32 0.0, %v522
    %524 = vmatprep.mubr.bf16.mxu0 0
    %525 = vmatmul.mubr.bf16.gmra.mrb[0].mxu0 %v417
    %v526 = vpop.f32.mrb[0].mxu0
    %v527 = vadd.f32 0.0, %v526
    %v528 = vpop.f32.mrb[0].mxu0
    %v529 = vadd.f32 0.0, %v528
    %v530 = vpop.f32.mrb[0].mxu0
    %v531 = vadd.f32 0.0, %v530
    %v532 = vpop.f32.mrb[0].mxu0
    %v533 = vadd.f32 0.0, %v532
    %534 = vmatprep.mubr.bf16.mxu0 0
    %535 = vmatmul.mubr.bf16.gmra.mrb[0].mxu0 %v420
    %v536 = vpop.f32.mrb[0].mxu0
    %v537 = vadd.f32 0.0, %v536
    %v538 = vpop.f32.mrb[0].mxu0
    %v539 = vadd.f32 0.0, %v538
    %v540 = vpop.f32.mrb[0].mxu0
    %v541 = vadd.f32 0.0, %v540
    %v542 = vpop.f32.mrb[0].mxu0
    %v543 = vadd.f32 0.0, %v542
    %544 = vmatprep.mubr.bf16.mxu0 0
    %545 = vmatmul.mubr.bf16.gmra.mrb[0].mxu0 %v423
    %v546 = vpop.f32.mrb[0].mxu0
    %v547 = vadd.f32 0.0, %v546
    %v548 = vpop.f32.mrb[0].mxu0
    %v549 = vadd.f32 0.0, %v548
    %v550 = vpop.f32.mrb[0].mxu0
    %v551 = vadd.f32 0.0, %v550
    %v552 = vpop.f32.mrb[0].mxu0
    %v553 = vadd.f32 0.0, %v552
    %554 = vdwg.mxu0
    %555 = vmatprep.subr.bf16.mxu0 %v366
    %556 = vmatpush1.bf16.msra.mxu0 %v365
    %557 = vmatprep.subr.bf16.mxu0 %v374
    %558 = vmatpush1.bf16.msra.mxu0 %v373
    %559 = vmatprep.subr.bf16.mxu0 %v438
    %560 = vmatpush1.bf16.msra.mxu0 %v435
    %561 = vmatprep.subr.bf16.mxu0 0
    %562 = vmatpush1.bf16.msra.mxu0 0
    %563 = vmatprep.subr.bf16.mxu0 0
    %564 = vmatpush1.bf16.msra.mxu0 0
    %565 = vmatprep.subr.bf16.mxu0 0
    %566 = vmatpush1.bf16.msra.mxu0 0
    %567 = vmatprep.subr.bf16.mxu0 0
    %568 = vmatpush1.bf16.msra.mxu0 0
    %569 = vmatprep.subr.bf16.mxu0 0
    %570 = vmatpush1.bf16.msra.mxu0 0
    %571 = vmatprep.subr.bf16.mxu0 0
    %572 = vmatpush1.bf16.msra.mxu0 0
    %573 = vmatprep.subr.bf16.mxu0 0
    %574 = vmatpush1.bf16.msra.mxu0 0
    %575 = vmatprep.subr.bf16.mxu0 0
    %576 = vmatpush1.bf16.msra.mxu0 0
    %577 = vmatprep.subr.bf16.mxu0 0
    %578 = vmatpush1.bf16.msra.mxu0 0
    %579 = vmatprep.subr.bf16.mxu0 0
    %580 = vmatpush1.bf16.msra.mxu0 0
    %581 = vmatprep.subr.bf16.mxu0 0
    %582 = vmatpush1.bf16.msra.mxu0 0
    %583 = vmatprep.subr.bf16.mxu0 0
    %584 = vmatpush1.bf16.msra.mxu0 0
    %585 = vmatprep.subr.bf16.mxu0 0
    %586 = vmatpush1.bf16.msra.mxu0 0
    %587 = vmatprep.mubr.bf16.mxu0 0
    %588 = vmatmul.mubr.bf16.gmra.mrb[0].mxu0 %v405
    %v589 = vpop.f32.mrb[0].mxu0
    %v590 = vadd.f32 0.0, %v589
    %v591 = vpop.f32.mrb[0].mxu0
    %v592 = vadd.f32 0.0, %v591
    %v593 = vpop.f32.mrb[0].mxu0
    %v594 = vadd.f32 0.0, %v593
    %v595 = vpop.f32.mrb[0].mxu0
    %v596 = vadd.f32 0.0, %v595
    %597 = vmatprep.mubr.bf16.mxu0 0
    %598 = vmatmul.mubr.bf16.gmra.mrb[0].mxu0 %v408
    %v599 = vpop.f32.mrb[0].mxu0
    %v600 = vadd.f32 0.0, %v599
    %v601 = vpop.f32.mrb[0].mxu0
    %v602 = vadd.f32 0.0, %v601
    %v603 = vpop.f32.mrb[0].mxu0
    %v604 = vadd.f32 0.0, %v603
    %v605 = vpop.f32.mrb[0].mxu0
    %v606 = vadd.f32 0.0, %v605
    %607 = vmatprep.mubr.bf16.mxu0 0
    %608 = vmatmul.mubr.bf16.gmra.mrb[0].mxu0 %v411
    %v609 = vpop.f32.mrb[0].mxu0
    %v610 = vadd.f32 0.0, %v609
    %v611 = vpop.f32.mrb[0].mxu0
    %v612 = vadd.f32 0.0, %v611
    %v613 = vpop.f32.mrb[0].mxu0
    %v614 = vadd.f32 0.0, %v613
    %v615 = vpop.f32.mrb[0].mxu0
    %v616 = vadd.f32 0.0, %v615
    %617 = vmatprep.mubr.bf16.mxu0 0
    %618 = vmatmul.mubr.bf16.gmra.mrb[0].mxu0 %v414
    %v619 = vpop.f32.mrb[0].mxu0
    %v620 = vadd.f32 0.0, %v619
    %v621 = vpop.f32.mrb[0].mxu0
    %v622 = vadd.f32 0.0, %v621
    %v623 = vpop.f32.mrb[0].mxu0
    %v624 = vadd.f32 0.0, %v623
    %v625 = vpop.f32.mrb[0].mxu0
    %v626 = vadd.f32 0.0, %v625
    %627 = vmatprep.mubr.bf16.mxu0 0
    %628 = vmatmul.mubr.bf16.gmra.mrb[0].mxu0 %v417
    %v629 = vpop.f32.mrb[0].mxu0
    %v630 = vadd.f32 0.0, %v629
    %v631 = vpop.f32.mrb[0].mxu0
    %v632 = vadd.f32 0.0, %v631
    %v633 = vpop.f32.mrb[0].mxu0
    %v634 = vadd.f32 0.0, %v633
    %v635 = vpop.f32.mrb[0].mxu0
    %v636 = vadd.f32 0.0, %v635
    %637 = vmatprep.mubr.bf16.mxu0 0
    %638 = vmatmul.mubr.bf16.gmra.mrb[0].mxu0 %v420
    %v639 = vpop.f32.mrb[0].mxu0
    %v640 = vadd.f32 0.0, %v639
    %v641 = vpop.f32.mrb[0].mxu0
    %v642 = vadd.f32 0.0, %v641
    %v643 = vpop.f32.mrb[0].mxu0
    %v644 = vadd.f32 0.0, %v643
    %v645 = vpop.f32.mrb[0].mxu0
    %v646 = vadd.f32 0.0, %v645
    %647 = vmatprep.mubr.bf16.mxu0 0
    %648 = vmatmul.mubr.bf16.gmra.mrb[0].mxu0 %v423
    %v649 = vpop.f32.mrb[0].mxu0
    %v650 = vadd.f32 0.0, %v649
    %v651 = vpop.f32.mrb[0].mxu0
    %v652 = vadd.f32 0.0, %v651
    %v653 = vpop.f32.mrb[0].mxu0
    %v654 = vadd.f32 0.0, %v653
    %v655 = vpop.f32.mrb[0].mxu0
    %v656 = vadd.f32 0.0, %v655
    %657 = vdwg.mxu0
    %658 = vmatprep.subr.bf16.mxu0 %v368
    %659 = vmatpush1.bf16.msra.mxu0 %v367
    %660 = vmatprep.subr.bf16.mxu0 %v376
    %661 = vmatpush1.bf16.msra.mxu0 %v375
    %662 = vmatprep.subr.bf16.mxu0 %v444
    %663 = vmatpush1.bf16.msra.mxu0 %v441
    %664 = vmatprep.subr.bf16.mxu0 0
    %665 = vmatpush1.bf16.msra.mxu0 0
    %666 = vmatprep.subr.bf16.mxu0 0
    %667 = vmatpush1.bf16.msra.mxu0 0
    %668 = vmatprep.subr.bf16.mxu0 0
    %669 = vmatpush1.bf16.msra.mxu0 0
    %670 = vmatprep.subr.bf16.mxu0 0
    %671 = vmatpush1.bf16.msra.mxu0 0
    %672 = vmatprep.subr.bf16.mxu0 0
    %673 = vmatpush1.bf16.msra.mxu0 0
    %674 = vmatprep.subr.bf16.mxu0 0
    %675 = vmatpush1.bf16.msra.mxu0 0
    %676 = vmatprep.subr.bf16.mxu0 0
    %677 = vmatpush1.bf16.msra.mxu0 0
    %678 = vmatprep.subr.bf16.mxu0 0
    %679 = vmatpush1.bf16.msra.mxu0 0
    %680 = vmatprep.subr.bf16.mxu0 0
    %681 = vmatpush1.bf16.msra.mxu0 0
    %682 = vmatprep.subr.bf16.mxu0 0
    %683 = vmatpush1.bf16.msra.mxu0 0
    %684 = vmatprep.subr.bf16.mxu0 0
    %685 = vmatpush1.bf16.msra.mxu0 0
    %686 = vmatprep.subr.bf16.mxu0 0
    %687 = vmatpush1.bf16.msra.mxu0 0
    %688 = vmatprep.subr.bf16.mxu0 0
    %689 = vmatpush1.bf16.msra.mxu0 0
    %690 = vmatprep.mubr.bf16.mxu0 0
    %691 = vmatmul.mubr.bf16.gmra.mrb[0].mxu0 %v405
    %v692 = vpop.f32.mrb[0].mxu0
    %v693 = vadd.f32 0.0, %v692
    %v694 = vpop.f32.mrb[0].mxu0
    %v695 = vadd.f32 0.0, %v694
    %v696 = vpop.f32.mrb[0].mxu0
    %v697 = vadd.f32 0.0, %v696
    %v698 = vpop.f32.mrb[0].mxu0
    %v699 = vadd.f32 0.0, %v698
    %700 = vmatprep.mubr.bf16.mxu0 0
    %701 = vmatmul.mubr.bf16.gmra.mrb[0].mxu0 %v408
    %v702 = vpop.f32.mrb[0].mxu0
    %v703 = vadd.f32 0.0, %v702
    %v704 = vpop.f32.mrb[0].mxu0
    %v705 = vadd.f32 0.0, %v704
    %v706 = vpop.f32.mrb[0].mxu0
    %v707 = vadd.f32 0.0, %v706
    %v708 = vpop.f32.mrb[0].mxu0
    %v709 = vadd.f32 0.0, %v708
    %710 = vmatprep.mubr.bf16.mxu0 0
    %711 = vmatmul.mubr.bf16.gmra.mrb[0].mxu0 %v411
    %v712 = vpop.f32.mrb[0].mxu0
    %v713 = vadd.f32 0.0, %v712
    %v714 = vpop.f32.mrb[0].mxu0
    %v715 = vadd.f32 0.0, %v714
    %v716 = vpop.f32.mrb[0].mxu0
    %v717 = vadd.f32 0.0, %v716
    %v718 = vpop.f32.mrb[0].mxu0
    %v719 = vadd.f32 0.0, %v718
    %720 = vmatprep.mubr.bf16.mxu0 0
    %721 = vmatmul.mubr.bf16.gmra.mrb[0].mxu0 %v414
    %v722 = vpop.f32.mrb[0].mxu0
    %v723 = vadd.f32 0.0, %v722
    %v724 = vpop.f32.mrb[0].mxu0
    %v725 = vadd.f32 0.0, %v724
    %v726 = vpop.f32.mrb[0].mxu0
    %v727 = vadd.f32 0.0, %v726
    %v728 = vpop.f32.mrb[0].mxu0
    %v729 = vadd.f32 0.0, %v728
    %730 = vmatprep.mubr.bf16.mxu0 0
    %731 = vmatmul.mubr.bf16.gmra.mrb[0].mxu0 %v417
    %v732 = vpop.f32.mrb[0].mxu0
    %v733 = vadd.f32 0.0, %v732
    %v734 = vpop.f32.mrb[0].mxu0
    %v735 = vadd.f32 0.0, %v734
    %v736 = vpop.f32.mrb[0].mxu0
    %v737 = vadd.f32 0.0, %v736
    %v738 = vpop.f32.mrb[0].mxu0
    %v739 = vadd.f32 0.0, %v738
    %740 = vmatprep.mubr.bf16.mxu0 0
    %741 = vmatmul.mubr.bf16.gmra.mrb[0].mxu0 %v420
    %v742 = vpop.f32.mrb[0].mxu0
    %v743 = vadd.f32 0.0, %v742
    %v744 = vpop.f32.mrb[0].mxu0
    %v745 = vadd.f32 0.0, %v744
    %v746 = vpop.f32.mrb[0].mxu0
    %v747 = vadd.f32 0.0, %v746
    %v748 = vpop.f32.mrb[0].mxu0
    %v749 = vadd.f32 0.0, %v748
    %750 = vmatprep.mubr.bf16.mxu0 0
    %751 = vmatmul.mubr.bf16.gmra.mrb[0].mxu0 %v423
    %v752 = vpop.f32.mrb[0].mxu0
    %v753 = vadd.f32 0.0, %v752
    %v754 = vpop.f32.mrb[0].mxu0
    %v755 = vadd.f32 0.0, %v754
    %v756 = vpop.f32.mrb[0].mxu0
    %v757 = vadd.f32 0.0, %v756
    %v758 = vpop.f32.mrb[0].mxu0
    %v759 = vadd.f32 0.0, %v758
    %760 = vdwg.mxu0
    %761 = vmatprep.subr.bf16.mxu0 %v370
    %762 = vmatpush1.bf16.msra.mxu0 %v369
    %763 = vmatprep.subr.bf16.mxu0 %v378
    %764 = vmatpush1.bf16.msra.mxu0 %v377
    %765 = vmatprep.subr.bf16.mxu0 %v450
    %766 = vmatpush1.bf16.msra.mxu0 %v447
    %767 = vmatprep.subr.bf16.mxu0 0
    %768 = vmatpush1.bf16.msra.mxu0 0
    %769 = vmatprep.subr.bf16.mxu0 0
    %770 = vmatpush1.bf16.msra.mxu0 0
    %771 = vmatprep.subr.bf16.mxu0 0
    %772 = vmatpush1.bf16.msra.mxu0 0
    %773 = vmatprep.subr.bf16.mxu0 0
    %774 = vmatpush1.bf16.msra.mxu0 0
    %775 = vmatprep.subr.bf16.mxu0 0
    %776 = vmatpush1.bf16.msra.mxu0 0
    %777 = vmatprep.subr.bf16.mxu0 0
    %778 = vmatpush1.bf16.msra.mxu0 0
    %779 = vmatprep.subr.bf16.mxu0 0
    %780 = vmatpush1.bf16.msra.mxu0 0
    %781 = vmatprep.subr.bf16.mxu0 0
    %782 = vmatpush1.bf16.msra.mxu0 0
    %783 = vmatprep.subr.bf16.mxu0 0
    %784 = vmatpush1.bf16.msra.mxu0 0
    %785 = vmatprep.subr.bf16.mxu0 0
    %786 = vmatpush1.bf16.msra.mxu0 0
    %787 = vmatprep.subr.bf16.mxu0 0
    %788 = vmatpush1.bf16.msra.mxu0 0
    %789 = vmatprep.subr.bf16.mxu0 0
    %790 = vmatpush1.bf16.msra.mxu0 0
    %791 = vmatprep.subr.bf16.mxu0 0
    %792 = vmatpush1.bf16.msra.mxu0 0
    %793 = vmatprep.mubr.bf16.mxu0 0
    %794 = vmatmul.mubr.bf16.gmra.mrb[0].mxu0 %v405
    %v795 = vpop.f32.mrb[0].mxu0
    %v796 = vadd.f32 0.0, %v795
    %v797 = vpop.f32.mrb[0].mxu0
    %v798 = vadd.f32 0.0, %v797
    %v799 = vpop.f32.mrb[0].mxu0
    %v800 = vadd.f32 0.0, %v799
    %v801 = vpop.f32.mrb[0].mxu0
    %v802 = vadd.f32 0.0, %v801
    %803 = vmatprep.mubr.bf16.mxu0 0
    %804 = vmatmul.mubr.bf16.gmra.mrb[0].mxu0 %v408
    %v805 = vpop.f32.mrb[0].mxu0
    %v806 = vadd.f32 0.0, %v805
    %v807 = vpop.f32.mrb[0].mxu0
    %v808 = vadd.f32 0.0, %v807
    %v809 = vpop.f32.mrb[0].mxu0
    %v810 = vadd.f32 0.0, %v809
    %v811 = vpop.f32.mrb[0].mxu0
    %v812 = vadd.f32 0.0, %v811
    %813 = vmatprep.mubr.bf16.mxu0 0
    %814 = vmatmul.mubr.bf16.gmra.mrb[0].mxu0 %v411
    %v815 = vpop.f32.mrb[0].mxu0
    %v816 = vadd.f32 0.0, %v815
    %v817 = vpop.f32.mrb[0].mxu0
    %v818 = vadd.f32 0.0, %v817
    %v819 = vpop.f32.mrb[0].mxu0
    %v820 = vadd.f32 0.0, %v819
    %v821 = vpop.f32.mrb[0].mxu0
    %v822 = vadd.f32 0.0, %v821
    %823 = vmatprep.mubr.bf16.mxu0 0
    %824 = vmatmul.mubr.bf16.gmra.mrb[0].mxu0 %v414
    %v825 = vpop.f32.mrb[0].mxu0
    %v826 = vadd.f32 0.0, %v825
    %v827 = vpop.f32.mrb[0].mxu0
    %v828 = vadd.f32 0.0, %v827
    %v829 = vpop.f32.mrb[0].mxu0
    %v830 = vadd.f32 0.0, %v829
    %v831 = vpop.f32.mrb[0].mxu0
    %v832 = vadd.f32 0.0, %v831
    %833 = vmatprep.mubr.bf16.mxu0 0
    %834 = vmatmul.mubr.bf16.gmra.mrb[0].mxu0 %v417
    %v835 = vpop.f32.mrb[0].mxu0
    %v836 = vadd.f32 0.0, %v835
    %v837 = vpop.f32.mrb[0].mxu0
    %v838 = vadd.f32 0.0, %v837
    %v839 = vpop.f32.mrb[0].mxu0
    %v840 = vadd.f32 0.0, %v839
    %v841 = vpop.f32.mrb[0].mxu0
    %v842 = vadd.f32 0.0, %v841
    %843 = vmatprep.mubr.bf16.mxu0 0
    %844 = vmatmul.mubr.bf16.gmra.mrb[0].mxu0 %v420
    %v845 = vpop.f32.mrb[0].mxu0
    %v846 = vadd.f32 0.0, %v845
    %v847 = vpop.f32.mrb[0].mxu0
    %v848 = vadd.f32 0.0, %v847
    %v849 = vpop.f32.mrb[0].mxu0
    %v850 = vadd.f32 0.0, %v849
    %v851 = vpop.f32.mrb[0].mxu0
    %v852 = vadd.f32 0.0, %v851
    %853 = vmatprep.mubr.bf16.mxu0 0
    %854 = vmatmul.mubr.bf16.gmra.mrb[0].mxu0 %v423
    %v855 = vpop.f32.mrb[0].mxu0
    %v856 = vadd.f32 0.0, %v855
    %v857 = vpop.f32.mrb[0].mxu0
    %v858 = vadd.f32 0.0, %v857
    %v859 = vpop.f32.mrb[0].mxu0
    %v860 = vadd.f32 0.0, %v859
    %v861 = vpop.f32.mrb[0].mxu0
    %v862 = vadd.f32 0.0, %v861
    %863 = vdwg.mxu0
    %v864 = vmax.f32 %v487, %v491
    %v865 = vmax.f32 %v489, %v493
    %v866 = vmax.f32 %v590, %v594
    %v867 = vmax.f32 %v592, %v596
    %v868 = vmax.f32 %v693, %v697
    %v869 = vmax.f32 %v695, %v699
    %v870 = vmax.f32 %v796, %v800
    %v871 = vmax.f32 %v798, %v802
    %v872 = vmax.f32 %v497, %v501
    %v873 = vmax.f32 %v499, %v503
    %v874 = vmax.f32 %v600, %v604
    %v875 = vmax.f32 %v602, %v606
    %v876 = vmax.f32 %v703, %v707
    %v877 = vmax.f32 %v705, %v709
    %v878 = vmax.f32 %v806, %v810
    %v879 = vmax.f32 %v808, %v812
    %v880 = vmax.f32 %v507, %v511
    %v881 = vmax.f32 %v509, %v513
    %v882 = vmax.f32 %v610, %v614
    %v883 = vmax.f32 %v612, %v616
    %v884 = vmax.f32 %v713, %v717
    %v885 = vmax.f32 %v715, %v719
    %v886 = vmax.f32 %v816, %v820
    %v887 = vmax.f32 %v818, %v822
    %v888 = vmax.f32 %v517, %v521
    %v889 = vmax.f32 %v519, %v523
    %v890 = vmax.f32 %v620, %v624
    %v891 = vmax.f32 %v622, %v626
    %v892 = vmax.f32 %v723, %v727
    %v893 = vmax.f32 %v725, %v729
    %v894 = vmax.f32 %v826, %v830
    %v895 = vmax.f32 %v828, %v832
    %v896 = vmax.f32 %v527, %v531
    %v897 = vmax.f32 %v529, %v533
    %v898 = vmax.f32 %v630, %v634
    %v899 = vmax.f32 %v632, %v636
    %v900 = vmax.f32 %v733, %v737
    %v901 = vmax.f32 %v735, %v739
    %v902 = vmax.f32 %v836, %v840
    %v903 = vmax.f32 %v838, %v842
    %v904 = vmax.f32 %v537, %v541
    %v905 = vmax.f32 %v539, %v543
    %v906 = vmax.f32 %v640, %v644
    %v907 = vmax.f32 %v642, %v646
    %v908 = vmax.f32 %v743, %v747
    %v909 = vmax.f32 %v745, %v749
    %v910 = vmax.f32 %v846, %v850
    %v911 = vmax.f32 %v848, %v852
    %v912 = vmax.f32 %v547, %v551
    %v913 = vmax.f32 %v549, %v553
    %v914 = vmax.f32 %v650, %v654
    %v915 = vmax.f32 %v652, %v656
    %v916 = vmax.f32 %v753, %v757
    %v917 = vmax.f32 %v755, %v759
    %v918 = vmax.f32 %v856, %v860
    %v919 = vmax.f32 %v858, %v862
    %v920 = vld [vmem:[#allocation5] sm:$0xff]
    %v922 = vlaneseq
    %v923 = vshrl.u32 %v922, 7
    %v924 = vsub.s32 0, %v923
    %v925 = vrot.slane %v920, %v924
    %v926 = vlaneseq
    %v927 = vshrl.u32 %v926, 7
    %v928 = vsub.s32 1, %v927
    %v929 = vrot.slane %v920, %v928
    %v930 = vlaneseq
    %v931 = vshrl.u32 %v930, 7
    %v932 = vsub.s32 2, %v931
    %v933 = vrot.slane %v920, %v932
    %v934 = vlaneseq
    %v935 = vshrl.u32 %v934, 7
    %v936 = vsub.s32 3, %v935
    %v937 = vrot.slane %v920, %v936
    %v938 = vlaneseq
    %v939 = vshrl.u32 %v938, 7
    %v940 = vsub.s32 4, %v939
    %v941 = vrot.slane %v920, %v940
    %v942 = vlaneseq
    %v943 = vshrl.u32 %v942, 7
    %v944 = vsub.s32 5, %v943
    %v945 = vrot.slane %v920, %v944
    %v946 = vlaneseq
    %v947 = vshrl.u32 %v946, 7
    %v948 = vsub.s32 6, %v947
    %v949 = vrot.slane %v920, %v948
    %v950 = vlaneseq
    %v951 = vshrl.u32 %v950, 7
    %v952 = vsub.s32 7, %v951
    %v953 = vrot.slane %v920, %v952
    %v962 = vadd.f32 %v864, %v925
    %v963 = vadd.f32 %v865, %v929
    %v964 = vadd.f32 %v866, %v933
    %v965 = vadd.f32 %v867, %v937
    %v966 = vadd.f32 %v868, %v941
    %v967 = vadd.f32 %v869, %v945
    %v968 = vadd.f32 %v870, %v949
    %v969 = vadd.f32 %v871, %v953
    %v970 = vadd.f32 %v872, %v925
    %v971 = vadd.f32 %v873, %v929
    %v972 = vadd.f32 %v874, %v933
    %v973 = vadd.f32 %v875, %v937
    %v974 = vadd.f32 %v876, %v941
    %v975 = vadd.f32 %v877, %v945
    %v976 = vadd.f32 %v878, %v949
    %v977 = vadd.f32 %v879, %v953
    %v978 = vadd.f32 %v880, %v925
    %v979 = vadd.f32 %v881, %v929
    %v980 = vadd.f32 %v882, %v933
    %v981 = vadd.f32 %v883, %v937
    %v982 = vadd.f32 %v884, %v941
    %v983 = vadd.f32 %v885, %v945
    %v984 = vadd.f32 %v886, %v949
    %v985 = vadd.f32 %v887, %v953
    %v986 = vadd.f32 %v888, %v925
    %v987 = vadd.f32 %v889, %v929
    %v988 = vadd.f32 %v890, %v933
    %v989 = vadd.f32 %v891, %v937
    %v990 = vadd.f32 %v892, %v941
    %v991 = vadd.f32 %v893, %v945
    %v992 = vadd.f32 %v894, %v949
    %v993 = vadd.f32 %v895, %v953
    %v994 = vadd.f32 %v896, %v925
    %v995 = vadd.f32 %v897, %v929
    %v996 = vadd.f32 %v898, %v933
    %v997 = vadd.f32 %v899, %v937
    %v998 = vadd.f32 %v900, %v941
    %v999 = vadd.f32 %v901, %v945
    %v1000 = vadd.f32 %v902, %v949
    %v1001 = vadd.f32 %v903, %v953
    %v1002 = vadd.f32 %v904, %v925
    %v1003 = vadd.f32 %v905, %v929
    %v1004 = vadd.f32 %v906, %v933
    %v1005 = vadd.f32 %v907, %v937
    %v1006 = vadd.f32 %v908, %v941
    %v1007 = vadd.f32 %v909, %v945
    %v1008 = vadd.f32 %v910, %v949
    %v1009 = vadd.f32 %v911, %v953
    %v1010 = vadd.f32 %v912, %v925
    %v1011 = vadd.f32 %v913, %v929
    %v1012 = vadd.f32 %v914, %v933
    %v1013 = vadd.f32 %v915, %v937
    %v1014 = vadd.f32 %v916, %v941
    %v1015 = vadd.f32 %v917, %v945
    %v1016 = vadd.f32 %v918, %v949
    %v1017 = vadd.f32 %v919, %v953
    %v1018 = vpack.c.bf16 %v962, %v962
    %v1019 = vpack.c.bf16 %v963, %v963
    %v1020 = vpack.c.bf16 %v964, %v964
    %v1021 = vpack.c.bf16 %v965, %v965
    %v1022 = vpack.c.bf16 %v966, %v966
    %v1023 = vpack.c.bf16 %v967, %v967
    %v1024 = vpack.c.bf16 %v968, %v968
    %v1025 = vpack.c.bf16 %v969, %v969
    %v1026 = vpack.c.bf16 %v970, %v970
    %v1027 = vpack.c.bf16 %v971, %v971
    %v1028 = vpack.c.bf16 %v972, %v972
    %v1029 = vpack.c.bf16 %v973, %v973
    %v1030 = vpack.c.bf16 %v974, %v974
    %v1031 = vpack.c.bf16 %v975, %v975
    %v1032 = vpack.c.bf16 %v976, %v976
    %v1033 = vpack.c.bf16 %v977, %v977
    %v1034 = vpack.c.bf16 %v978, %v978
    %v1035 = vpack.c.bf16 %v979, %v979
    %v1036 = vpack.c.bf16 %v980, %v980
    %v1037 = vpack.c.bf16 %v981, %v981
    %v1038 = vpack.c.bf16 %v982, %v982
    %v1039 = vpack.c.bf16 %v983, %v983
    %v1040 = vpack.c.bf16 %v984, %v984
    %v1041 = vpack.c.bf16 %v985, %v985
    %v1042 = vpack.c.bf16 %v986, %v986
    %v1043 = vpack.c.bf16 %v987, %v987
    %v1044 = vpack.c.bf16 %v988, %v988
    %v1045 = vpack.c.bf16 %v989, %v989
    %v1046 = vpack.c.bf16 %v990, %v990
    %v1047 = vpack.c.bf16 %v991, %v991
    %v1048 = vpack.c.bf16 %v992, %v992
    %v1049 = vpack.c.bf16 %v993, %v993
    %v1050 = vpack.c.bf16 %v994, %v994
    %v1051 = vpack.c.bf16 %v995, %v995
    %v1052 = vpack.c.bf16 %v996, %v996
    %v1053 = vpack.c.bf16 %v997, %v997
    %v1054 = vpack.c.bf16 %v998, %v998
    %v1055 = vpack.c.bf16 %v999, %v999
    %v1056 = vpack.c.bf16 %v1000, %v1000
    %v1057 = vpack.c.bf16 %v1001, %v1001
    %v1058 = vpack.c.bf16 %v1002, %v1002
    %v1059 = vpack.c.bf16 %v1003, %v1003
    %v1060 = vpack.c.bf16 %v1004, %v1004
    %v1061 = vpack.c.bf16 %v1005, %v1005
    %v1062 = vpack.c.bf16 %v1006, %v1006
    %v1063 = vpack.c.bf16 %v1007, %v1007
    %v1064 = vpack.c.bf16 %v1008, %v1008
    %v1065 = vpack.c.bf16 %v1009, %v1009
    %v1066 = vpack.c.bf16 %v1010, %v1010
    %v1067 = vpack.c.bf16 %v1011, %v1011
    %v1068 = vpack.c.bf16 %v1012, %v1012
    %v1069 = vpack.c.bf16 %v1013, %v1013
    %v1070 = vpack.c.bf16 %v1014, %v1014
    %v1071 = vpack.c.bf16 %v1015, %v1015
    %v1072 = vpack.c.bf16 %v1016, %v1016
    %v1073 = vpack.c.bf16 %v1017, %v1017
    %v1098 = vunpack.c.l.b16 %v1018
    %v1099 = vunpack.c.l.b16 %v1019
    %v1100 = vunpack.c.l.b16 %v1020
    %v1101 = vunpack.c.l.b16 %v1021
    %v1102 = vunpack.c.l.b16 %v1022
    %v1103 = vunpack.c.l.b16 %v1023
    %v1104 = vunpack.c.l.b16 %v1024
    %v1105 = vunpack.c.l.b16 %v1025
    %v1106 = vunpack.c.l.b16 %v1026
    %v1107 = vunpack.c.l.b16 %v1027
    %v1108 = vunpack.c.l.b16 %v1028
    %v1109 = vunpack.c.l.b16 %v1029
    %v1110 = vunpack.c.l.b16 %v1030
    %v1111 = vunpack.c.l.b16 %v1031
    %v1112 = vunpack.c.l.b16 %v1032
    %v1113 = vunpack.c.l.b16 %v1033
    %v1114 = vunpack.c.l.b16 %v1034
    %v1115 = vunpack.c.l.b16 %v1035
    %v1116 = vunpack.c.l.b16 %v1036
    %v1117 = vunpack.c.l.b16 %v1037
    %v1118 = vunpack.c.l.b16 %v1038
    %v1119 = vunpack.c.l.b16 %v1039
    %v1120 = vunpack.c.l.b16 %v1040
    %v1121 = vunpack.c.l.b16 %v1041
    %v1122 = vld [vmem:[#allocation7] sm:$0xff]
    %v1123 = vld [vmem:[#allocation7 + $0x8] sm:$0xff]
    %v1124 = vld [vmem:[#allocation7 + $0x10] sm:$0xff]
    %v1125 = vld [vmem:[#allocation7 + $0x18] sm:$0xff]
    %v1126 = vld [vmem:[#allocation7 + $0x20] sm:$0xff]
    %v1127 = vld [vmem:[#allocation7 + $0x28] sm:$0xff]
    %v1128 = vld [vmem:[#allocation7 + $0x30] sm:$0xff]
    %v1129 = vld [vmem:[#allocation7 + $0x38] sm:$0xff]
    %v1130 = vld [vmem:[#allocation7 + $0x40] sm:$0xff]
    %v1131 = vld [vmem:[#allocation7 + $0x48] sm:$0xff]
    %v1132 = vld [vmem:[#allocation7 + $0x50] sm:$0xff]
    %v1133 = vld [vmem:[#allocation7 + $0x58] sm:$0xff]
    %v1134 = vld [vmem:[#allocation7 + $0x60] sm:$0xff]
    %v1135 = vld [vmem:[#allocation7 + $0x68] sm:$0xff]
    %v1136 = vld [vmem:[#allocation7 + $0x70] sm:$0xff]
    %v1137 = vld [vmem:[#allocation7 + $0x78] sm:$0xff]
    %v1138 = vld [vmem:[#allocation7 + $0x80] sm:$0xff]
    %v1139 = vld [vmem:[#allocation7 + $0x88] sm:$0xff]
    %v1140 = vld [vmem:[#allocation7 + $0x90] sm:$0xff]
    %v1141 = vld [vmem:[#allocation7 + $0x98] sm:$0xff]
    %v1142 = vld [vmem:[#allocation7 + $0xa0] sm:$0xff]
    %v1143 = vld [vmem:[#allocation7 + $0xa8] sm:$0xff]
    %v1144 = vld [vmem:[#allocation7 + $0xb0] sm:$0xff]
    %v1145 = vld [vmem:[#allocation7 + $0xb8] sm:$0xff]
    %v1146 = vld [vmem:[#allocation7 + $0xc0] sm:$0xff]
    %v1147 = vld [vmem:[#allocation7 + $0xc8] sm:$0xff]
    %v1148 = vld [vmem:[#allocation7 + $0xd0] sm:$0xff]
    %v1149 = vld [vmem:[#allocation7 + $0xd8] sm:$0xff]
    %v1150 = vld [vmem:[#allocation7 + $0xe0] sm:$0xff]
    %v1151 = vld [vmem:[#allocation7 + $0xe8] sm:$0xff]
    %v1152 = vld [vmem:[#allocation7 + $0xf0] sm:$0xff]
    %v1153 = vld [vmem:[#allocation7 + $0xf8] sm:$0xff]
    %v1154 = vld [vmem:[#allocation7 + $0x100] sm:$0xff]
    %v1155 = vld [vmem:[#allocation7 + $0x108] sm:$0xff]
    %v1156 = vld [vmem:[#allocation7 + $0x110] sm:$0xff]
    %v1157 = vld [vmem:[#allocation7 + $0x118] sm:$0xff]
    %v1158 = vld [vmem:[#allocation7 + $0x120] sm:$0xff]
    %v1159 = vld [vmem:[#allocation7 + $0x128] sm:$0xff]
    %v1160 = vld [vmem:[#allocation7 + $0x130] sm:$0xff]
    %v1161 = vld [vmem:[#allocation7 + $0x138] sm:$0xff]
    %v1162 = vld [vmem:[#allocation7 + $0x140] sm:$0xff]
    %v1163 = vld [vmem:[#allocation7 + $0x148] sm:$0xff]
    %v1164 = vld [vmem:[#allocation7 + $0x150] sm:$0xff]
    %v1165 = vld [vmem:[#allocation7 + $0x158] sm:$0xff]
    %v1166 = vld [vmem:[#allocation7 + $0x160] sm:$0xff]
    %v1167 = vld [vmem:[#allocation7 + $0x168] sm:$0xff]
    %v1168 = vld [vmem:[#allocation7 + $0x170] sm:$0xff]
    %v1169 = vld [vmem:[#allocation7 + $0x178] sm:$0xff]
    %v1170 = vld [vmem:[#allocation7 + $0x180] sm:$0xff]
    %v1171 = vld [vmem:[#allocation7 + $0x188] sm:$0xff]
    %v1172 = vld [vmem:[#allocation7 + $0x190] sm:$0xff]
    %v1173 = vld [vmem:[#allocation7 + $0x198] sm:$0xff]
    %v1174 = vld [vmem:[#allocation7 + $0x1a0] sm:$0xff]
    %v1175 = vld [vmem:[#allocation7 + $0x1a8] sm:$0xff]
    %v1176 = vld [vmem:[#allocation7 + $0x1b0] sm:$0xff]
    %v1177 = vld [vmem:[#allocation7 + $0x1b8] sm:$0xff]
    %v1178 = vld [vmem:[#allocation7 + $0x1c0] sm:$0xff]
    %v1179 = vld [vmem:[#allocation7 + $0x1c8] sm:$0xff]
    %v1180 = vld [vmem:[#allocation7 + $0x1d0] sm:$0xff]
    %v1181 = vld [vmem:[#allocation7 + $0x1d8] sm:$0xff]
    %v1182 = vld [vmem:[#allocation7 + $0x1e0] sm:$0xff]
    %v1183 = vld [vmem:[#allocation7 + $0x1e8] sm:$0xff]
    %v1184 = vld [vmem:[#allocation7 + $0x1f0] sm:$0xff]
    %v1185 = vld [vmem:[#allocation7 + $0x1f8] sm:$0xff]
    %v1186 = vld [vmem:[#allocation7 + $0x200] sm:$0xff]
    %v1187 = vld [vmem:[#allocation7 + $0x208] sm:$0xff]
    %v1188 = vld [vmem:[#allocation7 + $0x210] sm:$0xff]
    %v1189 = vld [vmem:[#allocation7 + $0x218] sm:$0xff]
    %v1190 = vld [vmem:[#allocation7 + $0x220] sm:$0xff]
    %v1191 = vld [vmem:[#allocation7 + $0x228] sm:$0xff]
    %v1192 = vld [vmem:[#allocation7 + $0x230] sm:$0xff]
    %v1193 = vld [vmem:[#allocation7 + $0x238] sm:$0xff]
    %v1194 = vld [vmem:[#allocation7 + $0x240] sm:$0xff]
    %v1195 = vld [vmem:[#allocation7 + $0x248] sm:$0xff]
    %v1196 = vld [vmem:[#allocation7 + $0x250] sm:$0xff]
    %v1197 = vld [vmem:[#allocation7 + $0x258] sm:$0xff]
    %v1198 = vld [vmem:[#allocation7 + $0x260] sm:$0xff]
    %v1199 = vld [vmem:[#allocation7 + $0x268] sm:$0xff]
    %v1200 = vld [vmem:[#allocation7 + $0x270] sm:$0xff]
    %v1201 = vld [vmem:[#allocation7 + $0x278] sm:$0xff]
    %v1202 = vld [vmem:[#allocation7 + $0x280] sm:$0xff]
    %v1203 = vld [vmem:[#allocation7 + $0x288] sm:$0xff]
    %v1204 = vld [vmem:[#allocation7 + $0x290] sm:$0xff]
    %v1205 = vld [vmem:[#allocation7 + $0x298] sm:$0xff]
    %v1206 = vld [vmem:[#allocation7 + $0x2a0] sm:$0xff]
    %v1207 = vld [vmem:[#allocation7 + $0x2a8] sm:$0xff]
    %v1208 = vld [vmem:[#allocation7 + $0x2b0] sm:$0xff]
    %v1209 = vld [vmem:[#allocation7 + $0x2b8] sm:$0xff]
    %v1210 = vld [vmem:[#allocation7 + $0x2c0] sm:$0xff]
    %v1211 = vld [vmem:[#allocation7 + $0x2c8] sm:$0xff]
    %v1212 = vld [vmem:[#allocation7 + $0x2d0] sm:$0xff]
    %v1213 = vld [vmem:[#allocation7 + $0x2d8] sm:$0xff]
    %v1214 = vld [vmem:[#allocation7 + $0x2e0] sm:$0xff]
    %v1215 = vld [vmem:[#allocation7 + $0x2e8] sm:$0xff]
    %v1216 = vld [vmem:[#allocation7 + $0x2f0] sm:$0xff]
    %v1217 = vld [vmem:[#allocation7 + $0x2f8] sm:$0xff]
    %v1218 = vld [vmem:[#allocation7 + $0x300] sm:$0xff]
    %v1219 = vld [vmem:[#allocation7 + $0x308] sm:$0xff]
    %v1220 = vld [vmem:[#allocation7 + $0x310] sm:$0xff]
    %v1221 = vld [vmem:[#allocation7 + $0x318] sm:$0xff]
    %v1222 = vld [vmem:[#allocation7 + $0x320] sm:$0xff]
    %v1223 = vld [vmem:[#allocation7 + $0x328] sm:$0xff]
    %v1224 = vld [vmem:[#allocation7 + $0x330] sm:$0xff]
    %v1225 = vld [vmem:[#allocation7 + $0x338] sm:$0xff]
    %v1226 = vld [vmem:[#allocation7 + $0x340] sm:$0xff]
    %v1227 = vld [vmem:[#allocation7 + $0x348] sm:$0xff]
    %v1228 = vld [vmem:[#allocation7 + $0x350] sm:$0xff]
    %v1229 = vld [vmem:[#allocation7 + $0x358] sm:$0xff]
    %v1230 = vld [vmem:[#allocation7 + $0x360] sm:$0xff]
    %v1231 = vld [vmem:[#allocation7 + $0x368] sm:$0xff]
    %v1232 = vld [vmem:[#allocation7 + $0x370] sm:$0xff]
    %v1233 = vld [vmem:[#allocation7 + $0x378] sm:$0xff]
    %v1234 = vld [vmem:[#allocation7 + $0x380] sm:$0x33]
    %v1243 = vunpack.c.l.b16 %v1042
    %v1244 = vunpack.c.l.b16 %v1043
    %v1245 = vunpack.c.l.b16 %v1044
    %v1246 = vunpack.c.l.b16 %v1045
    %v1247 = vunpack.c.l.b16 %v1046
    %v1248 = vunpack.c.l.b16 %v1047
    %v1249 = vunpack.c.l.b16 %v1048
    %v1250 = vunpack.c.l.b16 %v1049
    %s1251 = scalar_lea.vmem [#allocation7], 904
    %v1252 = vld [vmem:[%s1251] sm:$0xff]
    %v1253 = vld [vmem:[%s1251 + $0x8] sm:$0xff]
    %v1254 = vld [vmem:[%s1251 + $0x10] sm:$0xff]
    %v1255 = vld [vmem:[%s1251 + $0x18] sm:$0xff]
    %v1256 = vld [vmem:[%s1251 + $0x20] sm:$0xff]
    %v1257 = vld [vmem:[%s1251 + $0x28] sm:$0xff]
    %v1258 = vld [vmem:[%s1251 + $0x30] sm:$0xff]
    %v1259 = vld [vmem:[%s1251 + $0x38] sm:$0xff]
    %v1260 = vld [vmem:[%s1251 + $0x40] sm:$0xff]
    %v1261 = vld [vmem:[%s1251 + $0x48] sm:$0xff]
    %v1262 = vld [vmem:[%s1251 + $0x50] sm:$0xff]
    %v1263 = vld [vmem:[%s1251 + $0x58] sm:$0xff]
    %v1264 = vld [vmem:[%s1251 + $0x60] sm:$0xff]
    %v1265 = vld [vmem:[%s1251 + $0x68] sm:$0xff]
    %v1266 = vld [vmem:[%s1251 + $0x70] sm:$0xff]
    %v1267 = vld [vmem:[%s1251 + $0x78] sm:$0xff]
    %v1268 = vld [vmem:[%s1251 + $0x80] sm:$0xff]
    %v1269 = vld [vmem:[%s1251 + $0x88] sm:$0xff]
    %v1270 = vld [vmem:[%s1251 + $0x90] sm:$0xff]
    %v1271 = vld [vmem:[%s1251 + $0x98] sm:$0xff]
    %v1272 = vld [vmem:[%s1251 + $0xa0] sm:$0xff]
    %v1273 = vld [vmem:[%s1251 + $0xa8] sm:$0xff]
    %v1274 = vld [vmem:[%s1251 + $0xb0] sm:$0xff]
    %v1275 = vld [vmem:[%s1251 + $0xb8] sm:$0xff]
    %v1276 = vld [vmem:[%s1251 + $0xc0] sm:$0xff]
    %v1277 = vld [vmem:[%s1251 + $0xc8] sm:$0xff]
    %v1278 = vld [vmem:[%s1251 + $0xd0] sm:$0xff]
    %v1279 = vld [vmem:[%s1251 + $0xd8] sm:$0xff]
    %v1280 = vld [vmem:[%s1251 + $0xe0] sm:$0xff]
    %v1281 = vld [vmem:[%s1251 + $0xe8] sm:$0xff]
    %v1282 = vld [vmem:[%s1251 + $0xf0] sm:$0xff]
    %v1283 = vld [vmem:[%s1251 + $0xf8] sm:$0xff]
    %v1284 = vld [vmem:[%s1251 + $0x100] sm:$0xff]
    %v1285 = vld [vmem:[%s1251 + $0x108] sm:$0xff]
    %v1286 = vld [vmem:[%s1251 + $0x110] sm:$0xff]
    %v1287 = vld [vmem:[%s1251 + $0x118] sm:$0xff]
    %v1288 = vld [vmem:[%s1251 + $0x120] sm:$0xff]
    %v1289 = vld [vmem:[%s1251 + $0x128] sm:$0xff]
    %v1290 = vld [vmem:[%s1251 + $0x130] sm:$0xff]
    %v1291 = vld [vmem:[%s1251 + $0x138] sm:$0xff]
    %v1292 = vld [vmem:[%s1251 + $0x140] sm:$0xff]
    %v1293 = vld [vmem:[%s1251 + $0x148] sm:$0xff]
    %v1294 = vld [vmem:[%s1251 + $0x150] sm:$0xff]
    %v1295 = vld [vmem:[%s1251 + $0x158] sm:$0xff]
    %v1296 = vld [vmem:[%s1251 + $0x160] sm:$0xff]
    %v1297 = vld [vmem:[%s1251 + $0x168] sm:$0xff]
    %v1298 = vld [vmem:[%s1251 + $0x170] sm:$0xff]
    %v1299 = vld [vmem:[%s1251 + $0x178] sm:$0xff]
    %v1300 = vld [vmem:[%s1251 + $0x180] sm:$0xff]
    %v1301 = vld [vmem:[%s1251 + $0x188] sm:$0xff]
    %v1302 = vld [vmem:[%s1251 + $0x190] sm:$0xff]
    %v1303 = vld [vmem:[%s1251 + $0x198] sm:$0xff]
    %v1304 = vld [vmem:[%s1251 + $0x1a0] sm:$0xff]
    %v1305 = vld [vmem:[%s1251 + $0x1a8] sm:$0xff]
    %v1306 = vld [vmem:[%s1251 + $0x1b0] sm:$0xff]
    %v1307 = vld [vmem:[%s1251 + $0x1b8] sm:$0xff]
    %v1308 = vld [vmem:[%s1251 + $0x1c0] sm:$0xff]
    %v1309 = vld [vmem:[%s1251 + $0x1c8] sm:$0xff]
    %v1310 = vld [vmem:[%s1251 + $0x1d0] sm:$0xff]
    %v1311 = vld [vmem:[%s1251 + $0x1d8] sm:$0xff]
    %v1312 = vld [vmem:[%s1251 + $0x1e0] sm:$0xff]
    %v1313 = vld [vmem:[%s1251 + $0x1e8] sm:$0xff]
    %v1314 = vld [vmem:[%s1251 + $0x1f0] sm:$0xff]
    %v1315 = vld [vmem:[%s1251 + $0x1f8] sm:$0xff]
    %v1316 = vld [vmem:[%s1251 + $0x200] sm:$0xff]
    %v1317 = vld [vmem:[%s1251 + $0x208] sm:$0xff]
    %v1318 = vld [vmem:[%s1251 + $0x210] sm:$0xff]
    %v1319 = vld [vmem:[%s1251 + $0x218] sm:$0xff]
    %v1320 = vld [vmem:[%s1251 + $0x220] sm:$0xff]
    %v1321 = vld [vmem:[%s1251 + $0x228] sm:$0xff]
    %v1322 = vld [vmem:[%s1251 + $0x230] sm:$0xff]
    %v1323 = vld [vmem:[%s1251 + $0x238] sm:$0xff]
    %v1324 = vld [vmem:[%s1251 + $0x240] sm:$0xff]
    %v1325 = vld [vmem:[%s1251 + $0x248] sm:$0xff]
    %v1326 = vld [vmem:[%s1251 + $0x250] sm:$0xff]
    %v1327 = vld [vmem:[%s1251 + $0x258] sm:$0xff]
    %v1328 = vld [vmem:[%s1251 + $0x260] sm:$0xff]
    %v1329 = vld [vmem:[%s1251 + $0x268] sm:$0xff]
    %v1330 = vld [vmem:[%s1251 + $0x270] sm:$0xff]
    %v1331 = vld [vmem:[%s1251 + $0x278] sm:$0xff]
    %v1332 = vld [vmem:[%s1251 + $0x280] sm:$0xff]
    %v1333 = vld [vmem:[%s1251 + $0x288] sm:$0xff]
    %v1334 = vld [vmem:[%s1251 + $0x290] sm:$0xff]
    %v1335 = vld [vmem:[%s1251 + $0x298] sm:$0xff]
    %v1336 = vld [vmem:[%s1251 + $0x2a0] sm:$0xff]
    %v1337 = vld [vmem:[%s1251 + $0x2a8] sm:$0xff]
    %v1338 = vld [vmem:[%s1251 + $0x2b0] sm:$0xff]
    %v1339 = vld [vmem:[%s1251 + $0x2b8] sm:$0xff]
    %v1340 = vld [vmem:[%s1251 + $0x2c0] sm:$0xff]
    %v1341 = vld [vmem:[%s1251 + $0x2c8] sm:$0xff]
    %v1342 = vld [vmem:[%s1251 + $0x2d0] sm:$0xff]
    %v1343 = vld [vmem:[%s1251 + $0x2d8] sm:$0xff]
    %v1344 = vld [vmem:[%s1251 + $0x2e0] sm:$0xff]
    %v1345 = vld [vmem:[%s1251 + $0x2e8] sm:$0xff]
    %v1346 = vld [vmem:[%s1251 + $0x2f0] sm:$0xff]
    %v1347 = vld [vmem:[%s1251 + $0x2f8] sm:$0xff]
    %v1348 = vld [vmem:[%s1251 + $0x300] sm:$0xff]
    %v1349 = vld [vmem:[%s1251 + $0x308] sm:$0xff]
    %v1350 = vld [vmem:[%s1251 + $0x310] sm:$0xff]
    %v1351 = vld [vmem:[%s1251 + $0x318] sm:$0xff]
    %v1352 = vld [vmem:[%s1251 + $0x320] sm:$0xff]
    %v1353 = vld [vmem:[%s1251 + $0x328] sm:$0xff]
    %v1354 = vld [vmem:[%s1251 + $0x330] sm:$0xff]
    %v1355 = vld [vmem:[%s1251 + $0x338] sm:$0xff]
    %v1356 = vld [vmem:[%s1251 + $0x340] sm:$0xff]
    %v1357 = vld [vmem:[%s1251 + $0x348] sm:$0xff]
    %v1358 = vld [vmem:[%s1251 + $0x350] sm:$0xff]
    %v1359 = vld [vmem:[%s1251 + $0x358] sm:$0xff]
    %v1360 = vld [vmem:[%s1251 + $0x360] sm:$0xff]
    %v1361 = vld [vmem:[%s1251 + $0x368] sm:$0xff]
    %v1362 = vld [vmem:[%s1251 + $0x370] sm:$0xff]
    %v1363 = vld [vmem:[%s1251 + $0x378] sm:$0xff]
    %v1364 = vld [vmem:[%s1251 + $0x380] sm:$0x33]
    %v1365 = vpack.c.b16 %v1114, %v1106
    %v1366 = vpack.c.b16 %v1115, %v1107
    %v1367 = vpack.c.b16 %v1116, %v1108
    %v1368 = vpack.c.b16 %v1117, %v1109
    %v1369 = vpack.c.b16 %v1118, %v1110
    %v1370 = vpack.c.b16 %v1119, %v1111
    %v1371 = vpack.c.b16 %v1120, %v1112
    %v1372 = vpack.c.b16 %v1121, %v1113
    %v1373 = vpack.c.b16 %v1243, %v1243
    %v1374 = vpack.c.b16 %v1244, %v1244
    %v1375 = vpack.c.b16 %v1245, %v1245
    %v1376 = vpack.c.b16 %v1246, %v1246
    %v1377 = vpack.c.b16 %v1247, %v1247
    %v1378 = vpack.c.b16 %v1248, %v1248
    %v1379 = vpack.c.b16 %v1249, %v1249
    %v1380 = vpack.c.b16 %v1250, %v1250
    %v1508 = vunpack.c.l.b16 %v1252
    %v1509 = vunpack.c.h.b16 %v1252
    %v1510 = vunpack.c.l.b16 %v1253
    %v1511 = vunpack.c.h.b16 %v1253
    %v1512 = vunpack.c.l.b16 %v1254
    %v1513 = vunpack.c.h.b16 %v1254
    %v1514 = vunpack.c.l.b16 %v1255
    %v1515 = vunpack.c.h.b16 %v1255
    %v1516 = vunpack.c.l.b16 %v1256
    %v1517 = vunpack.c.h.b16 %v1256
    %v1518 = vunpack.c.l.b16 %v1257
    %v1519 = vunpack.c.h.b16 %v1257
    %v1520 = vunpack.c.l.b16 %v1258
    %v1521 = vunpack.c.h.b16 %v1258
    %v1522 = vunpack.c.l.b16 %v1259
    %v1523 = vunpack.c.h.b16 %v1259
    %v1524 = vunpack.c.l.b16 %v1260
    %v1525 = vunpack.c.h.b16 %v1260
    %v1526 = vunpack.c.l.b16 %v1261
    %v1527 = vunpack.c.h.b16 %v1261
    %v1528 = vunpack.c.l.b16 %v1262
    %v1529 = vunpack.c.h.b16 %v1262
    %v1530 = vunpack.c.l.b16 %v1263
    %v1531 = vunpack.c.h.b16 %v1263
    %v1532 = vunpack.c.l.b16 %v1264
    %v1533 = vunpack.c.h.b16 %v1264
    %v1534 = vunpack.c.l.b16 %v1265
    %v1535 = vunpack.c.h.b16 %v1265
    %v1536 = vunpack.c.l.b16 %v1266
    %v1537 = vunpack.c.h.b16 %v1266
    %v1538 = vunpack.c.l.b16 %v1267
    %v1539 = vunpack.c.h.b16 %v1267
    %v1540 = vunpack.c.l.b16 %v1268
    %v1541 = vunpack.c.h.b16 %v1268
    %v1542 = vunpack.c.l.b16 %v1269
    %v1543 = vunpack.c.h.b16 %v1269
    %v1544 = vunpack.c.l.b16 %v1270
    %v1545 = vunpack.c.h.b16 %v1270
    %v1546 = vunpack.c.l.b16 %v1271
    %v1547 = vunpack.c.h.b16 %v1271
    %v1548 = vunpack.c.l.b16 %v1272
    %v1549 = vunpack.c.h.b16 %v1272
    %v1550 = vunpack.c.l.b16 %v1273
    %v1551 = vunpack.c.h.b16 %v1273
    %v1552 = vunpack.c.l.b16 %v1274
    %v1553 = vunpack.c.h.b16 %v1274
    %v1554 = vunpack.c.l.b16 %v1275
    %v1555 = vunpack.c.h.b16 %v1275
    %v1556 = vunpack.c.l.b16 %v1276
    %v1557 = vunpack.c.h.b16 %v1276
    %v1558 = vunpack.c.l.b16 %v1277
    %v1559 = vunpack.c.h.b16 %v1277
    %v1560 = vunpack.c.l.b16 %v1278
    %v1561 = vunpack.c.h.b16 %v1278
    %v1562 = vunpack.c.l.b16 %v1279
    %v1563 = vunpack.c.h.b16 %v1279
    %v1564 = vunpack.c.l.b16 %v1280
    %v1565 = vunpack.c.h.b16 %v1280
    %v1566 = vunpack.c.l.b16 %v1281
    %v1567 = vunpack.c.h.b16 %v1281
    %v1568 = vunpack.c.l.b16 %v1282
    %v1569 = vunpack.c.h.b16 %v1282
    %v1570 = vunpack.c.l.b16 %v1283
    %v1571 = vunpack.c.h.b16 %v1283
    %v1572 = vunpack.c.l.b16 %v1284
    %v1573 = vunpack.c.h.b16 %v1284
    %v1574 = vunpack.c.l.b16 %v1285
    %v1575 = vunpack.c.h.b16 %v1285
    %v1576 = vunpack.c.l.b16 %v1286
    %v1577 = vunpack.c.h.b16 %v1286
    %v1578 = vunpack.c.l.b16 %v1287
    %v1579 = vunpack.c.h.b16 %v1287
    %v1580 = vunpack.c.l.b16 %v1288
    %v1581 = vunpack.c.h.b16 %v1288
    %v1582 = vunpack.c.l.b16 %v1289
    %v1583 = vunpack.c.h.b16 %v1289
    %v1584 = vunpack.c.l.b16 %v1290
    %v1585 = vunpack.c.h.b16 %v1290
    %v1586 = vunpack.c.l.b16 %v1291
    %v1587 = vunpack.c.h.b16 %v1291
    %v1588 = vunpack.c.l.b16 %v1292
    %v1589 = vunpack.c.h.b16 %v1292
    %v1590 = vunpack.c.l.b16 %v1293
    %v1591 = vunpack.c.h.b16 %v1293
    %v1592 = vunpack.c.l.b16 %v1294
    %v1593 = vunpack.c.h.b16 %v1294
    %v1594 = vunpack.c.l.b16 %v1295
    %v1595 = vunpack.c.h.b16 %v1295
    %v1596 = vunpack.c.l.b16 %v1296
    %v1597 = vunpack.c.h.b16 %v1296
    %v1598 = vunpack.c.l.b16 %v1297
    %v1599 = vunpack.c.h.b16 %v1297
    %v1600 = vunpack.c.l.b16 %v1298
    %v1601 = vunpack.c.h.b16 %v1298
    %v1602 = vunpack.c.l.b16 %v1299
    %v1603 = vunpack.c.h.b16 %v1299
    %v1604 = vunpack.c.l.b16 %v1300
    %v1605 = vunpack.c.h.b16 %v1300
    %v1606 = vunpack.c.l.b16 %v1301
    %v1607 = vunpack.c.h.b16 %v1301
    %v1608 = vunpack.c.l.b16 %v1302
    %v1609 = vunpack.c.h.b16 %v1302
    %v1610 = vunpack.c.l.b16 %v1303
    %v1611 = vunpack.c.h.b16 %v1303
    %v1612 = vunpack.c.l.b16 %v1304
    %v1613 = vunpack.c.h.b16 %v1304
    %v1614 = vunpack.c.l.b16 %v1305
    %v1615 = vunpack.c.h.b16 %v1305
    %v1616 = vunpack.c.l.b16 %v1306
    %v1617 = vunpack.c.h.b16 %v1306
    %v1618 = vunpack.c.l.b16 %v1307
    %v1619 = vunpack.c.h.b16 %v1307
    %v1620 = vunpack.c.l.b16 %v1308
    %v1621 = vunpack.c.h.b16 %v1308
    %v1622 = vunpack.c.l.b16 %v1309
    %v1623 = vunpack.c.h.b16 %v1309
    %v1624 = vunpack.c.l.b16 %v1310
    %v1625 = vunpack.c.h.b16 %v1310
    %v1626 = vunpack.c.l.b16 %v1311
    %v1627 = vunpack.c.h.b16 %v1311
    %v1628 = vunpack.c.l.b16 %v1312
    %v1629 = vunpack.c.h.b16 %v1312
    %v1630 = vunpack.c.l.b16 %v1313
    %v1631 = vunpack.c.h.b16 %v1313
    %v1632 = vunpack.c.l.b16 %v1314
    %v1633 = vunpack.c.h.b16 %v1314
    %v1634 = vunpack.c.l.b16 %v1315
    %v1635 = vunpack.c.h.b16 %v1315
    %v1636 = vunpack.c.l.b16 %v1316
    %v1637 = vunpack.c.h.b16 %v1316
    %v1638 = vunpack.c.l.b16 %v1317
    %v1639 = vunpack.c.h.b16 %v1317
    %v1640 = vunpack.c.l.b16 %v1318
    %v1641 = vunpack.c.h.b16 %v1318
    %v1642 = vunpack.c.l.b16 %v1319
    %v1643 = vunpack.c.h.b16 %v1319
    %v1644 = vunpack.c.l.b16 %v1320
    %v1645 = vunpack.c.h.b16 %v1320
    %v1646 = vunpack.c.l.b16 %v1321
    %v1647 = vunpack.c.h.b16 %v1321
    %v1648 = vunpack.c.l.b16 %v1322
    %v1649 = vunpack.c.h.b16 %v1322
    %v1650 = vunpack.c.l.b16 %v1323
    %v1651 = vunpack.c.h.b16 %v1323
    %v1652 = vunpack.c.l.b16 %v1324
    %v1653 = vunpack.c.h.b16 %v1324
    %v1654 = vunpack.c.l.b16 %v1325
    %v1655 = vunpack.c.h.b16 %v1325
    %v1656 = vunpack.c.l.b16 %v1326
    %v1657 = vunpack.c.h.b16 %v1326
    %v1658 = vunpack.c.l.b16 %v1327
    %v1659 = vunpack.c.h.b16 %v1327
    %v1660 = vunpack.c.l.b16 %v1328
    %v1661 = vunpack.c.h.b16 %v1328
    %v1662 = vunpack.c.l.b16 %v1329
    %v1663 = vunpack.c.h.b16 %v1329
    %v1664 = vunpack.c.l.b16 %v1330
    %v1665 = vunpack.c.h.b16 %v1330
    %v1666 = vunpack.c.l.b16 %v1331
    %v1667 = vunpack.c.h.b16 %v1331
    %v1668 = vunpack.c.l.b16 %v1332
    %v1669 = vunpack.c.h.b16 %v1332
    %v1670 = vunpack.c.l.b16 %v1333
    %v1671 = vunpack.c.h.b16 %v1333
    %v1672 = vunpack.c.l.b16 %v1334
    %v1673 = vunpack.c.h.b16 %v1334
    %v1674 = vunpack.c.l.b16 %v1335
    %v1675 = vunpack.c.h.b16 %v1335
    %v1676 = vunpack.c.l.b16 %v1336
    %v1677 = vunpack.c.h.b16 %v1336
    %v1678 = vunpack.c.l.b16 %v1337
    %v1679 = vunpack.c.h.b16 %v1337
    %v1680 = vunpack.c.l.b16 %v1338
    %v1681 = vunpack.c.h.b16 %v1338
    %v1682 = vunpack.c.l.b16 %v1339
    %v1683 = vunpack.c.h.b16 %v1339
    %v1684 = vunpack.c.l.b16 %v1340
    %v1685 = vunpack.c.h.b16 %v1340
    %v1686 = vunpack.c.l.b16 %v1341
    %v1687 = vunpack.c.h.b16 %v1341
    %v1688 = vunpack.c.l.b16 %v1342
    %v1689 = vunpack.c.h.b16 %v1342
    %v1690 = vunpack.c.l.b16 %v1343
    %v1691 = vunpack.c.h.b16 %v1343
    %v1692 = vunpack.c.l.b16 %v1344
    %v1693 = vunpack.c.h.b16 %v1344
    %v1694 = vunpack.c.l.b16 %v1345
    %v1695 = vunpack.c.h.b16 %v1345
    %v1696 = vunpack.c.l.b16 %v1346
    %v1697 = vunpack.c.h.b16 %v1346
    %v1698 = vunpack.c.l.b16 %v1347
    %v1699 = vunpack.c.h.b16 %v1347
    %v1700 = vunpack.c.l.b16 %v1348
    %v1701 = vunpack.c.h.b16 %v1348
    %v1702 = vunpack.c.l.b16 %v1349
    %v1703 = vunpack.c.h.b16 %v1349
    %v1704 = vunpack.c.l.b16 %v1350
    %v1705 = vunpack.c.h.b16 %v1350
    %v1706 = vunpack.c.l.b16 %v1351
    %v1707 = vunpack.c.h.b16 %v1351
    %v1708 = vunpack.c.l.b16 %v1352
    %v1709 = vunpack.c.h.b16 %v1352
    %v1710 = vunpack.c.l.b16 %v1353
    %v1711 = vunpack.c.h.b16 %v1353
    %v1712 = vunpack.c.l.b16 %v1354
    %v1713 = vunpack.c.h.b16 %v1354
    %v1714 = vunpack.c.l.b16 %v1355
    %v1715 = vunpack.c.h.b16 %v1355
    %v1716 = vunpack.c.l.b16 %v1356
    %v1717 = vunpack.c.h.b16 %v1356
    %v1718 = vunpack.c.l.b16 %v1357
    %v1719 = vunpack.c.h.b16 %v1357
    %v1720 = vunpack.c.l.b16 %v1358
    %v1721 = vunpack.c.h.b16 %v1358
    %v1722 = vunpack.c.l.b16 %v1359
    %v1723 = vunpack.c.h.b16 %v1359
    %v1724 = vunpack.c.l.b16 %v1360
    %v1725 = vunpack.c.h.b16 %v1360
    %v1726 = vunpack.c.l.b16 %v1361
    %v1727 = vunpack.c.h.b16 %v1361
    %v1728 = vunpack.c.l.b16 %v1362
    %v1729 = vunpack.c.h.b16 %v1362
    %v1730 = vunpack.c.l.b16 %v1363
    %v1731 = vunpack.c.h.b16 %v1363
    %v1732 = vunpack.c.l.b16 %v1364
    %v1733 = vunpack.c.h.b16 %v1364
    %v1734 = vpack.c.b16 %v1510, %v1508
    %v1735 = vpack.c.b16 %v1511, %v1509
    %v1736 = vpack.c.b16 %v1514, %v1512
    %v1737 = vpack.c.b16 %v1515, %v1513
    %v1738 = vpack.c.b16 %v1518, %v1516
    %v1739 = vpack.c.b16 %v1519, %v1517
    %v1740 = vpack.c.b16 %v1522, %v1520
    %v1741 = vpack.c.b16 %v1523, %v1521
    %v1742 = vpack.c.b16 %v1526, %v1524
    %v1743 = vpack.c.b16 %v1527, %v1525
    %v1744 = vpack.c.b16 %v1530, %v1528
    %v1745 = vpack.c.b16 %v1531, %v1529
    %v1746 = vpack.c.b16 %v1534, %v1532
    %v1747 = vpack.c.b16 %v1535, %v1533
    %v1748 = vpack.c.b16 %v1538, %v1536
    %v1749 = vpack.c.b16 %v1539, %v1537
    %v1750 = vpack.c.b16 %v1542, %v1540
    %v1751 = vpack.c.b16 %v1543, %v1541
    %v1752 = vpack.c.b16 %v1546, %v1544
    %v1753 = vpack.c.b16 %v1547, %v1545
    %v1754 = vpack.c.b16 %v1550, %v1548
    %v1755 = vpack.c.b16 %v1551, %v1549
    %v1756 = vpack.c.b16 %v1554, %v1552
    %v1757 = vpack.c.b16 %v1555, %v1553
    %v1758 = vpack.c.b16 %v1558, %v1556
    %v1759 = vpack.c.b16 %v1559, %v1557
    %v1760 = vpack.c.b16 %v1562, %v1560
    %v1761 = vpack.c.b16 %v1563, %v1561
    %v1762 = vpack.c.b16 %v1566, %v1564
    %v1763 = vpack.c.b16 %v1567, %v1565
    %v1764 = vpack.c.b16 %v1570, %v1568
    %v1765 = vpack.c.b16 %v1571, %v1569
    %v1766 = vpack.c.b16 %v1574, %v1572
    %v1767 = vpack.c.b16 %v1575, %v1573
    %v1768 = vpack.c.b16 %v1578, %v1576
    %v1769 = vpack.c.b16 %v1579, %v1577
    %v1770 = vpack.c.b16 %v1582, %v1580
    %v1771 = vpack.c.b16 %v1583, %v1581
    %v1772 = vpack.c.b16 %v1586, %v1584
    %v1773 = vpack.c.b16 %v1587, %v1585
    %v1774 = vpack.c.b16 %v1590, %v1588
    %v1775 = vpack.c.b16 %v1591, %v1589
    %v1776 = vpack.c.b16 %v1594, %v1592
    %v1777 = vpack.c.b16 %v1595, %v1593
    %v1778 = vpack.c.b16 %v1598, %v1596
    %v1779 = vpack.c.b16 %v1599, %v1597
    %v1780 = vpack.c.b16 %v1602, %v1600
    %v1781 = vpack.c.b16 %v1603, %v1601
    %v1782 = vpack.c.b16 %v1606, %v1604
    %v1783 = vpack.c.b16 %v1607, %v1605
    %v1784 = vpack.c.b16 %v1610, %v1608
    %v1785 = vpack.c.b16 %v1611, %v1609
    %v1786 = vpack.c.b16 %v1614, %v1612
    %v1787 = vpack.c.b16 %v1615, %v1613
    %v1788 = vpack.c.b16 %v1618, %v1616
    %v1789 = vpack.c.b16 %v1619, %v1617
    %v1790 = vpack.c.b16 %v1622, %v1620
    %v1791 = vpack.c.b16 %v1623, %v1621
    %v1792 = vpack.c.b16 %v1626, %v1624
    %v1793 = vpack.c.b16 %v1627, %v1625
    %v1794 = vpack.c.b16 %v1630, %v1628
    %v1795 = vpack.c.b16 %v1631, %v1629
    %v1796 = vpack.c.b16 %v1634, %v1632
    %v1797 = vpack.c.b16 %v1635, %v1633
    %v1798 = vpack.c.b16 %v1638, %v1636
    %v1799 = vpack.c.b16 %v1639, %v1637
    %v1800 = vpack.c.b16 %v1642, %v1640
    %v1801 = vpack.c.b16 %v1643, %v1641
    %v1802 = vpack.c.b16 %v1646, %v1644
    %v1803 = vpack.c.b16 %v1647, %v1645
    %v1804 = vpack.c.b16 %v1650, %v1648
    %v1805 = vpack.c.b16 %v1651, %v1649
    %v1806 = vpack.c.b16 %v1654, %v1652
    %v1807 = vpack.c.b16 %v1655, %v1653
    %v1808 = vpack.c.b16 %v1658, %v1656
    %v1809 = vpack.c.b16 %v1659, %v1657
    %v1810 = vpack.c.b16 %v1662, %v1660
    %v1811 = vpack.c.b16 %v1663, %v1661
    %v1812 = vpack.c.b16 %v1666, %v1664
    %v1813 = vpack.c.b16 %v1667, %v1665
    %v1814 = vpack.c.b16 %v1670, %v1668
    %v1815 = vpack.c.b16 %v1671, %v1669
    %v1816 = vpack.c.b16 %v1674, %v1672
    %v1817 = vpack.c.b16 %v1675, %v1673
    %v1818 = vpack.c.b16 %v1678, %v1676
    %v1819 = vpack.c.b16 %v1679, %v1677
    %v1820 = vpack.c.b16 %v1682, %v1680
    %v1821 = vpack.c.b16 %v1683, %v1681
    %v1822 = vpack.c.b16 %v1686, %v1684
    %v1823 = vpack.c.b16 %v1687, %v1685
    %v1824 = vpack.c.b16 %v1690, %v1688
    %v1825 = vpack.c.b16 %v1691, %v1689
    %v1826 = vpack.c.b16 %v1694, %v1692
    %v1827 = vpack.c.b16 %v1695, %v1693
    %v1828 = vpack.c.b16 %v1698, %v1696
    %v1829 = vpack.c.b16 %v1699, %v1697
    %v1830 = vpack.c.b16 %v1702, %v1700
    %v1831 = vpack.c.b16 %v1703, %v1701
    %v1832 = vpack.c.b16 %v1706, %v1704
    %v1833 = vpack.c.b16 %v1707, %v1705
    %v1834 = vpack.c.b16 %v1710, %v1708
    %v1835 = vpack.c.b16 %v1711, %v1709
    %v1836 = vpack.c.b16 %v1714, %v1712
    %v1837 = vpack.c.b16 %v1715, %v1713
    %v1838 = vpack.c.b16 %v1718, %v1716
    %v1839 = vpack.c.b16 %v1719, %v1717
    %v1840 = vpack.c.b16 %v1722, %v1720
    %v1841 = vpack.c.b16 %v1723, %v1721
    %v1842 = vpack.c.b16 %v1726, %v1724
    %v1843 = vpack.c.b16 %v1727, %v1725
    %v1844 = vpack.c.b16 %v1730, %v1728
    %v1845 = vpack.c.b16 %v1731, %v1729
    %v1846 = vpack.c.b16 %v1732, %v1732
    %v1847 = vpack.c.b16 %v1733, %v1733
    %vm1960 = vcmask 31744
    %v1962 = vsel %vm1960, %v1372, 0
    %v1965 = vsel %vm1960, %v1380, 0
    %vm1967 = vcmask 1041408
    %v1969 = vsel %vm1967, %v1846, 0
    %v1972 = vsel %vm1967, %v1847, 0
    %1974 = vmatprep.subr.bf16.mxu0 %v1735
    %1975 = vmatpush1.bf16.msra.mxu0 %v1734
    %1976 = vmatprep.subr.bf16.mxu0 %v1737
    %1977 = vmatpush1.bf16.msra.mxu0 %v1736
    %1978 = vmatprep.subr.bf16.mxu0 %v1739
    %1979 = vmatpush1.bf16.msra.mxu0 %v1738
    %1980 = vmatprep.subr.bf16.mxu0 %v1741
    %1981 = vmatpush1.bf16.msra.mxu0 %v1740
    %1982 = vmatprep.subr.bf16.mxu0 %v1743
    %1983 = vmatpush1.bf16.msra.mxu0 %v1742
    %1984 = vmatprep.subr.bf16.mxu0 %v1745
    %1985 = vmatpush1.bf16.msra.mxu0 %v1744
    %1986 = vmatprep.subr.bf16.mxu0 %v1747
    %1987 = vmatpush1.bf16.msra.mxu0 %v1746
    %1988 = vmatprep.subr.bf16.mxu0 %v1749
    %1989 = vmatpush1.bf16.msra.mxu0 %v1748
    %1990 = vmatprep.subr.bf16.mxu0 %v1751
    %1991 = vmatpush1.bf16.msra.mxu0 %v1750
    %1992 = vmatprep.subr.bf16.mxu0 %v1753
    %1993 = vmatpush1.bf16.msra.mxu0 %v1752
    %1994 = vmatprep.subr.bf16.mxu0 %v1755
    %1995 = vmatpush1.bf16.msra.mxu0 %v1754
    %1996 = vmatprep.subr.bf16.mxu0 %v1757
    %1997 = vmatpush1.bf16.msra.mxu0 %v1756
    %1998 = vmatprep.subr.bf16.mxu0 %v1759
    %1999 = vmatpush1.bf16.msra.mxu0 %v1758
    %2000 = vmatprep.subr.bf16.mxu0 %v1761
    %2001 = vmatpush1.bf16.msra.mxu0 %v1760
    %2002 = vmatprep.subr.bf16.mxu0 %v1763
    %2003 = vmatpush1.bf16.msra.mxu0 %v1762
    %2004 = vmatprep.subr.bf16.mxu0 %v1765
    %2005 = vmatpush1.bf16.msra.mxu0 %v1764
    %2006 = vmatprep.mubr.bf16.mxu0 %v1366
    %2007 = vmatmul.mubr.bf16.gmra.mrb[0].mxu0 %v1365
    %v2008 = vpop.f32.mrb[0].mxu0
    %v2009 = vadd.f32 0.0, %v2008
    %v2010 = vpop.f32.mrb[0].mxu0
    %v2011 = vadd.f32 0.0, %v2010
    %v2012 = vpop.f32.mrb[0].mxu0
    %v2013 = vadd.f32 0.0, %v2012
    %v2014 = vpop.f32.mrb[0].mxu0
    %v2015 = vadd.f32 0.0, %v2014
    %2016 = vmatprep.mubr.bf16.mxu0 %v1374
    %2017 = vmatmul.mubr.bf16.gmra.mrb[0].mxu0 %v1373
    %v2018 = vpop.f32.mrb[0].mxu0
    %v2019 = vpop.f32.mrb[0].mxu0
    %v2020 = vpop.f32.mrb[0].mxu0
    %v2021 = vpop.f32.mrb[0].mxu0
    %2022 = vdwg.mxu0
    %2023 = vmatprep.subr.bf16.mxu0 %v1767
    %2024 = vmatpush1.bf16.msra.mxu0 %v1766
    %2025 = vmatprep.subr.bf16.mxu0 %v1769
    %2026 = vmatpush1.bf16.msra.mxu0 %v1768
    %2027 = vmatprep.subr.bf16.mxu0 %v1771
    %2028 = vmatpush1.bf16.msra.mxu0 %v1770
    %2029 = vmatprep.subr.bf16.mxu0 %v1773
    %2030 = vmatpush1.bf16.msra.mxu0 %v1772
    %2031 = vmatprep.subr.bf16.mxu0 %v1775
    %2032 = vmatpush1.bf16.msra.mxu0 %v1774
    %2033 = vmatprep.subr.bf16.mxu0 %v1777
    %2034 = vmatpush1.bf16.msra.mxu0 %v1776
    %2035 = vmatprep.subr.bf16.mxu0 %v1779
    %2036 = vmatpush1.bf16.msra.mxu0 %v1778
    %2037 = vmatprep.subr.bf16.mxu0 %v1781
    %2038 = vmatpush1.bf16.msra.mxu0 %v1780
    %2039 = vmatprep.subr.bf16.mxu0 %v1783
    %2040 = vmatpush1.bf16.msra.mxu0 %v1782
    %2041 = vmatprep.subr.bf16.mxu0 %v1785
    %2042 = vmatpush1.bf16.msra.mxu0 %v1784
    %2043 = vmatprep.subr.bf16.mxu0 %v1787
    %2044 = vmatpush1.bf16.msra.mxu0 %v1786
    %2045 = vmatprep.subr.bf16.mxu0 %v1789
    %2046 = vmatpush1.bf16.msra.mxu0 %v1788
    %2047 = vmatprep.subr.bf16.mxu0 %v1791
    %2048 = vmatpush1.bf16.msra.mxu0 %v1790
    %2049 = vmatprep.subr.bf16.mxu0 %v1793
    %2050 = vmatpush1.bf16.msra.mxu0 %v1792
    %2051 = vmatprep.subr.bf16.mxu0 %v1795
    %2052 = vmatpush1.bf16.msra.mxu0 %v1794
    %2053 = vmatprep.subr.bf16.mxu0 %v1797
    %2054 = vmatpush1.bf16.msra.mxu0 %v1796
    %2055 = vmatprep.mubr.bf16.mxu0 %v1368
    %2056 = vmatmul.mubr.bf16.gmra.mrb[0].mxu0 %v1367
    %v2057 = vpop.f32.mrb[0].mxu0
    %v2058 = vadd.f32 %v2009, %v2057
    %v2059 = vpop.f32.mrb[0].mxu0
    %v2060 = vadd.f32 %v2011, %v2059
    %v2061 = vpop.f32.mrb[0].mxu0
    %v2062 = vadd.f32 %v2013, %v2061
    %v2063 = vpop.f32.mrb[0].mxu0
    %v2064 = vadd.f32 %v2015, %v2063
    %2065 = vmatprep.mubr.bf16.mxu0 %v1376
    %2066 = vmatmul.mubr.bf16.gmra.mrb[0].mxu0 %v1375
    %v2067 = vpop.f32.mrb[0].mxu0
    %v2068 = vpop.f32.mrb[0].mxu0
    %v2069 = vpop.f32.mrb[0].mxu0
    %v2070 = vpop.f32.mrb[0].mxu0
    %2071 = vdwg.mxu0
    %2072 = vmatprep.subr.bf16.mxu0 %v1799
    %2073 = vmatpush1.bf16.msra.mxu0 %v1798
    %2074 = vmatprep.subr.bf16.mxu0 %v1801
    %2075 = vmatpush1.bf16.msra.mxu0 %v1800
    %2076 = vmatprep.subr.bf16.mxu0 %v1803
    %2077 = vmatpush1.bf16.msra.mxu0 %v1802
    %2078 = vmatprep.subr.bf16.mxu0 %v1805
    %2079 = vmatpush1.bf16.msra.mxu0 %v1804
    %2080 = vmatprep.subr.bf16.mxu0 %v1807
    %2081 = vmatpush1.bf16.msra.mxu0 %v1806
    %2082 = vmatprep.subr.bf16.mxu0 %v1809
    %2083 = vmatpush1.bf16.msra.mxu0 %v1808
    %2084 = vmatprep.subr.bf16.mxu0 %v1811
    %2085 = vmatpush1.bf16.msra.mxu0 %v1810
    %2086 = vmatprep.subr.bf16.mxu0 %v1813
    %2087 = vmatpush1.bf16.msra.mxu0 %v1812
    %2088 = vmatprep.subr.bf16.mxu0 %v1815
    %2089 = vmatpush1.bf16.msra.mxu0 %v1814
    %2090 = vmatprep.subr.bf16.mxu0 %v1817
    %2091 = vmatpush1.bf16.msra.mxu0 %v1816
    %2092 = vmatprep.subr.bf16.mxu0 %v1819
    %2093 = vmatpush1.bf16.msra.mxu0 %v1818
    %2094 = vmatprep.subr.bf16.mxu0 %v1821
    %2095 = vmatpush1.bf16.msra.mxu0 %v1820
    %2096 = vmatprep.subr.bf16.mxu0 %v1823
    %2097 = vmatpush1.bf16.msra.mxu0 %v1822
    %2098 = vmatprep.subr.bf16.mxu0 %v1825
    %2099 = vmatpush1.bf16.msra.mxu0 %v1824
    %2100 = vmatprep.subr.bf16.mxu0 %v1827
    %2101 = vmatpush1.bf16.msra.mxu0 %v1826
    %2102 = vmatprep.subr.bf16.mxu0 %v1829
    %2103 = vmatpush1.bf16.msra.mxu0 %v1828
    %2104 = vmatprep.mubr.bf16.mxu0 %v1370
    %2105 = vmatmul.mubr.bf16.gmra.mrb[0].mxu0 %v1369
    %v2106 = vpop.f32.mrb[0].mxu0
    %v2107 = vadd.f32 %v2058, %v2106
    %v2108 = vpop.f32.mrb[0].mxu0
    %v2109 = vadd.f32 %v2060, %v2108
    %v2110 = vpop.f32.mrb[0].mxu0
    %v2111 = vadd.f32 %v2062, %v2110
    %v2112 = vpop.f32.mrb[0].mxu0
    %v2113 = vadd.f32 %v2064, %v2112
    %2114 = vmatprep.mubr.bf16.mxu0 %v1378
    %2115 = vmatmul.mubr.bf16.gmra.mrb[0].mxu0 %v1377
    %v2116 = vpop.f32.mrb[0].mxu0
    %v2117 = vpop.f32.mrb[0].mxu0
    %v2118 = vpop.f32.mrb[0].mxu0
    %v2119 = vpop.f32.mrb[0].mxu0
    %2120 = vdwg.mxu0
    %2121 = vmatprep.subr.bf16.mxu0 %v1831
    %2122 = vmatpush1.bf16.msra.mxu0 %v1830
    %2123 = vmatprep.subr.bf16.mxu0 %v1833
    %2124 = vmatpush1.bf16.msra.mxu0 %v1832
    %2125 = vmatprep.subr.bf16.mxu0 %v1835
    %2126 = vmatpush1.bf16.msra.mxu0 %v1834
    %2127 = vmatprep.subr.bf16.mxu0 %v1837
    %2128 = vmatpush1.bf16.msra.mxu0 %v1836
    %2129 = vmatprep.subr.bf16.mxu0 %v1839
    %2130 = vmatpush1.bf16.msra.mxu0 %v1838
    %2131 = vmatprep.subr.bf16.mxu0 %v1841
    %2132 = vmatpush1.bf16.msra.mxu0 %v1840
    %2133 = vmatprep.subr.bf16.mxu0 %v1843
    %2134 = vmatpush1.bf16.msra.mxu0 %v1842
    %2135 = vmatprep.subr.bf16.mxu0 %v1845
    %2136 = vmatpush1.bf16.msra.mxu0 %v1844
    %2137 = vmatprep.subr.bf16.mxu0 %v1972
    %2138 = vmatpush1.bf16.msra.mxu0 %v1969
    %2139 = vmatprep.subr.bf16.mxu0 0
    %2140 = vmatpush1.bf16.msra.mxu0 0
    %2141 = vmatprep.subr.bf16.mxu0 0
    %2142 = vmatpush1.bf16.msra.mxu0 0
    %2143 = vmatprep.subr.bf16.mxu0 0
    %2144 = vmatpush1.bf16.msra.mxu0 0
    %2145 = vmatprep.subr.bf16.mxu0 0
    %2146 = vmatpush1.bf16.msra.mxu0 0
    %2147 = vmatprep.subr.bf16.mxu0 0
    %2148 = vmatpush1.bf16.msra.mxu0 0
    %2149 = vmatprep.subr.bf16.mxu0 0
    %2150 = vmatpush1.bf16.msra.mxu0 0
    %2151 = vmatprep.subr.bf16.mxu0 0
    %2152 = vmatpush1.bf16.msra.mxu0 0
    %2153 = vmatprep.mubr.bf16.mxu0 %v1962
    %2154 = vmatmul.mubr.bf16.gmra.mrb[0].mxu0 %v1371
    %v2155 = vpop.f32.mrb[0].mxu0
    %v2156 = vadd.f32 %v2107, %v2155
    %v2157 = vpop.f32.mrb[0].mxu0
    %v2158 = vadd.f32 %v2109, %v2157
    %v2159 = vpop.f32.mrb[0].mxu0
    %v2160 = vadd.f32 %v2111, %v2159
    %v2161 = vpop.f32.mrb[0].mxu0
    %v2162 = vadd.f32 %v2113, %v2161
    %2163 = vmatprep.mubr.bf16.mxu0 %v1965
    %2164 = vmatmul.mubr.bf16.gmra.mrb[0].mxu0 %v1379
    %v2165 = vpop.f32.mrb[0].mxu0
    %v2166 = vpop.f32.mrb[0].mxu0
    %v2167 = vpop.f32.mrb[0].mxu0
    %v2168 = vpop.f32.mrb[0].mxu0
    %2169 = vdwg.mxu0
    %v2170 = vpack.c.b16 %v1106, %v1098
    %v2171 = vpack.c.b16 %v1107, %v1099
    %v2172 = vpack.c.b16 %v1108, %v1100
    %v2173 = vpack.c.b16 %v1109, %v1101
    %v2174 = vpack.c.b16 %v1110, %v1102
    %v2175 = vpack.c.b16 %v1111, %v1103
    %v2176 = vpack.c.b16 %v1112, %v1104
    %v2177 = vpack.c.b16 %v1113, %v1105
    %v2178 = vpack.c.b16 %v1114, %v1114
    %v2179 = vpack.c.b16 %v1115, %v1115
    %v2180 = vpack.c.b16 %v1116, %v1116
    %v2181 = vpack.c.b16 %v1117, %v1117
    %v2182 = vpack.c.b16 %v1118, %v1118
    %v2183 = vpack.c.b16 %v1119, %v1119
    %v2184 = vpack.c.b16 %v1120, %v1120
    %v2185 = vpack.c.b16 %v1121, %v1121
    %v2313 = vunpack.c.l.b16 %v1122
    %v2314 = vunpack.c.h.b16 %v1122
    %v2315 = vunpack.c.l.b16 %v1123
    %v2316 = vunpack.c.h.b16 %v1123
    %v2317 = vunpack.c.l.b16 %v1124
    %v2318 = vunpack.c.h.b16 %v1124
    %v2319 = vunpack.c.l.b16 %v1125
    %v2320 = vunpack.c.h.b16 %v1125
    %v2321 = vunpack.c.l.b16 %v1126
    %v2322 = vunpack.c.h.b16 %v1126
    %v2323 = vunpack.c.l.b16 %v1127
    %v2324 = vunpack.c.h.b16 %v1127
    %v2325 = vunpack.c.l.b16 %v1128
    %v2326 = vunpack.c.h.b16 %v1128
    %v2327 = vunpack.c.l.b16 %v1129
    %v2328 = vunpack.c.h.b16 %v1129
    %v2329 = vunpack.c.l.b16 %v1130
    %v2330 = vunpack.c.h.b16 %v1130
    %v2331 = vunpack.c.l.b16 %v1131
    %v2332 = vunpack.c.h.b16 %v1131
    %v2333 = vunpack.c.l.b16 %v1132
    %v2334 = vunpack.c.h.b16 %v1132
    %v2335 = vunpack.c.l.b16 %v1133
    %v2336 = vunpack.c.h.b16 %v1133
    %v2337 = vunpack.c.l.b16 %v1134
    %v2338 = vunpack.c.h.b16 %v1134
    %v2339 = vunpack.c.l.b16 %v1135
    %v2340 = vunpack.c.h.b16 %v1135
    %v2341 = vunpack.c.l.b16 %v1136
    %v2342 = vunpack.c.h.b16 %v1136
    %v2343 = vunpack.c.l.b16 %v1137
    %v2344 = vunpack.c.h.b16 %v1137
    %v2345 = vunpack.c.l.b16 %v1138
    %v2346 = vunpack.c.h.b16 %v1138
    %v2347 = vunpack.c.l.b16 %v1139
    %v2348 = vunpack.c.h.b16 %v1139
    %v2349 = vunpack.c.l.b16 %v1140
    %v2350 = vunpack.c.h.b16 %v1140
    %v2351 = vunpack.c.l.b16 %v1141
    %v2352 = vunpack.c.h.b16 %v1141
    %v2353 = vunpack.c.l.b16 %v1142
    %v2354 = vunpack.c.h.b16 %v1142
    %v2355 = vunpack.c.l.b16 %v1143
    %v2356 = vunpack.c.h.b16 %v1143
    %v2357 = vunpack.c.l.b16 %v1144
    %v2358 = vunpack.c.h.b16 %v1144
    %v2359 = vunpack.c.l.b16 %v1145
    %v2360 = vunpack.c.h.b16 %v1145
    %v2361 = vunpack.c.l.b16 %v1146
    %v2362 = vunpack.c.h.b16 %v1146
    %v2363 = vunpack.c.l.b16 %v1147
    %v2364 = vunpack.c.h.b16 %v1147
    %v2365 = vunpack.c.l.b16 %v1148
    %v2366 = vunpack.c.h.b16 %v1148
    %v2367 = vunpack.c.l.b16 %v1149
    %v2368 = vunpack.c.h.b16 %v1149
    %v2369 = vunpack.c.l.b16 %v1150
    %v2370 = vunpack.c.h.b16 %v1150
    %v2371 = vunpack.c.l.b16 %v1151
    %v2372 = vunpack.c.h.b16 %v1151
    %v2373 = vunpack.c.l.b16 %v1152
    %v2374 = vunpack.c.h.b16 %v1152
    %v2375 = vunpack.c.l.b16 %v1153
    %v2376 = vunpack.c.h.b16 %v1153
    %v2377 = vunpack.c.l.b16 %v1154
    %v2378 = vunpack.c.h.b16 %v1154
    %v2379 = vunpack.c.l.b16 %v1155
    %v2380 = vunpack.c.h.b16 %v1155
    %v2381 = vunpack.c.l.b16 %v1156
    %v2382 = vunpack.c.h.b16 %v1156
    %v2383 = vunpack.c.l.b16 %v1157
    %v2384 = vunpack.c.h.b16 %v1157
    %v2385 = vunpack.c.l.b16 %v1158
    %v2386 = vunpack.c.h.b16 %v1158
    %v2387 = vunpack.c.l.b16 %v1159
    %v2388 = vunpack.c.h.b16 %v1159
    %v2389 = vunpack.c.l.b16 %v1160
    %v2390 = vunpack.c.h.b16 %v1160
    %v2391 = vunpack.c.l.b16 %v1161
    %v2392 = vunpack.c.h.b16 %v1161
    %v2393 = vunpack.c.l.b16 %v1162
    %v2394 = vunpack.c.h.b16 %v1162
    %v2395 = vunpack.c.l.b16 %v1163
    %v2396 = vunpack.c.h.b16 %v1163
    %v2397 = vunpack.c.l.b16 %v1164
    %v2398 = vunpack.c.h.b16 %v1164
    %v2399 = vunpack.c.l.b16 %v1165
    %v2400 = vunpack.c.h.b16 %v1165
    %v2401 = vunpack.c.l.b16 %v1166
    %v2402 = vunpack.c.h.b16 %v1166
    %v2403 = vunpack.c.l.b16 %v1167
    %v2404 = vunpack.c.h.b16 %v1167
    %v2405 = vunpack.c.l.b16 %v1168
    %v2406 = vunpack.c.h.b16 %v1168
    %v2407 = vunpack.c.l.b16 %v1169
    %v2408 = vunpack.c.h.b16 %v1169
    %v2409 = vunpack.c.l.b16 %v1170
    %v2410 = vunpack.c.h.b16 %v1170
    %v2411 = vunpack.c.l.b16 %v1171
    %v2412 = vunpack.c.h.b16 %v1171
    %v2413 = vunpack.c.l.b16 %v1172
    %v2414 = vunpack.c.h.b16 %v1172
    %v2415 = vunpack.c.l.b16 %v1173
    %v2416 = vunpack.c.h.b16 %v1173
    %v2417 = vunpack.c.l.b16 %v1174
    %v2418 = vunpack.c.h.b16 %v1174
    %v2419 = vunpack.c.l.b16 %v1175
    %v2420 = vunpack.c.h.b16 %v1175
    %v2421 = vunpack.c.l.b16 %v1176
    %v2422 = vunpack.c.h.b16 %v1176
    %v2423 = vunpack.c.l.b16 %v1177
    %v2424 = vunpack.c.h.b16 %v1177
    %v2425 = vunpack.c.l.b16 %v1178
    %v2426 = vunpack.c.h.b16 %v1178
    %v2427 = vunpack.c.l.b16 %v1179
    %v2428 = vunpack.c.h.b16 %v1179
    %v2429 = vunpack.c.l.b16 %v1180
    %v2430 = vunpack.c.h.b16 %v1180
    %v2431 = vunpack.c.l.b16 %v1181
    %v2432 = vunpack.c.h.b16 %v1181
    %v2433 = vunpack.c.l.b16 %v1182
    %v2434 = vunpack.c.h.b16 %v1182
    %v2435 = vunpack.c.l.b16 %v1183
    %v2436 = vunpack.c.h.b16 %v1183
    %v2437 = vunpack.c.l.b16 %v1184
    %v2438 = vunpack.c.h.b16 %v1184
    %v2439 = vunpack.c.l.b16 %v1185
    %v2440 = vunpack.c.h.b16 %v1185
    %v2441 = vunpack.c.l.b16 %v1186
    %v2442 = vunpack.c.h.b16 %v1186
    %v2443 = vunpack.c.l.b16 %v1187
    %v2444 = vunpack.c.h.b16 %v1187
    %v2445 = vunpack.c.l.b16 %v1188
    %v2446 = vunpack.c.h.b16 %v1188
    %v2447 = vunpack.c.l.b16 %v1189
    %v2448 = vunpack.c.h.b16 %v1189
    %v2449 = vunpack.c.l.b16 %v1190
    %v2450 = vunpack.c.h.b16 %v1190
    %v2451 = vunpack.c.l.b16 %v1191
    %v2452 = vunpack.c.h.b16 %v1191
    %v2453 = vunpack.c.l.b16 %v1192
    %v2454 = vunpack.c.h.b16 %v1192
    %v2455 = vunpack.c.l.b16 %v1193
    %v2456 = vunpack.c.h.b16 %v1193
    %v2457 = vunpack.c.l.b16 %v1194
    %v2458 = vunpack.c.h.b16 %v1194
    %v2459 = vunpack.c.l.b16 %v1195
    %v2460 = vunpack.c.h.b16 %v1195
    %v2461 = vunpack.c.l.b16 %v1196
    %v2462 = vunpack.c.h.b16 %v1196
    %v2463 = vunpack.c.l.b16 %v1197
    %v2464 = vunpack.c.h.b16 %v1197
    %v2465 = vunpack.c.l.b16 %v1198
    %v2466 = vunpack.c.h.b16 %v1198
    %v2467 = vunpack.c.l.b16 %v1199
    %v2468 = vunpack.c.h.b16 %v1199
    %v2469 = vunpack.c.l.b16 %v1200
    %v2470 = vunpack.c.h.b16 %v1200
    %v2471 = vunpack.c.l.b16 %v1201
    %v2472 = vunpack.c.h.b16 %v1201
    %v2473 = vunpack.c.l.b16 %v1202
    %v2474 = vunpack.c.h.b16 %v1202
    %v2475 = vunpack.c.l.b16 %v1203
    %v2476 = vunpack.c.h.b16 %v1203
    %v2477 = vunpack.c.l.b16 %v1204
    %v2478 = vunpack.c.h.b16 %v1204
    %v2479 = vunpack.c.l.b16 %v1205
    %v2480 = vunpack.c.h.b16 %v1205
    %v2481 = vunpack.c.l.b16 %v1206
    %v2482 = vunpack.c.h.b16 %v1206
    %v2483 = vunpack.c.l.b16 %v1207
    %v2484 = vunpack.c.h.b16 %v1207
    %v2485 = vunpack.c.l.b16 %v1208
    %v2486 = vunpack.c.h.b16 %v1208
    %v2487 = vunpack.c.l.b16 %v1209
    %v2488 = vunpack.c.h.b16 %v1209
    %v2489 = vunpack.c.l.b16 %v1210
    %v2490 = vunpack.c.h.b16 %v1210
    %v2491 = vunpack.c.l.b16 %v1211
    %v2492 = vunpack.c.h.b16 %v1211
    %v2493 = vunpack.c.l.b16 %v1212
    %v2494 = vunpack.c.h.b16 %v1212
    %v2495 = vunpack.c.l.b16 %v1213
    %v2496 = vunpack.c.h.b16 %v1213
    %v2497 = vunpack.c.l.b16 %v1214
    %v2498 = vunpack.c.h.b16 %v1214
    %v2499 = vunpack.c.l.b16 %v1215
    %v2500 = vunpack.c.h.b16 %v1215
    %v2501 = vunpack.c.l.b16 %v1216
    %v2502 = vunpack.c.h.b16 %v1216
    %v2503 = vunpack.c.l.b16 %v1217
    %v2504 = vunpack.c.h.b16 %v1217
    %v2505 = vunpack.c.l.b16 %v1218
    %v2506 = vunpack.c.h.b16 %v1218
    %v2507 = vunpack.c.l.b16 %v1219
    %v2508 = vunpack.c.h.b16 %v1219
    %v2509 = vunpack.c.l.b16 %v1220
    %v2510 = vunpack.c.h.b16 %v1220
    %v2511 = vunpack.c.l.b16 %v1221
    %v2512 = vunpack.c.h.b16 %v1221
    %v2513 = vunpack.c.l.b16 %v1222
    %v2514 = vunpack.c.h.b16 %v1222
    %v2515 = vunpack.c.l.b16 %v1223
    %v2516 = vunpack.c.h.b16 %v1223
    %v2517 = vunpack.c.l.b16 %v1224
    %v2518 = vunpack.c.h.b16 %v1224
    %v2519 = vunpack.c.l.b16 %v1225
    %v2520 = vunpack.c.h.b16 %v1225
    %v2521 = vunpack.c.l.b16 %v1226
    %v2522 = vunpack.c.h.b16 %v1226
    %v2523 = vunpack.c.l.b16 %v1227
    %v2524 = vunpack.c.h.b16 %v1227
    %v2525 = vunpack.c.l.b16 %v1228
    %v2526 = vunpack.c.h.b16 %v1228
    %v2527 = vunpack.c.l.b16 %v1229
    %v2528 = vunpack.c.h.b16 %v1229
    %v2529 = vunpack.c.l.b16 %v1230
    %v2530 = vunpack.c.h.b16 %v1230
    %v2531 = vunpack.c.l.b16 %v1231
    %v2532 = vunpack.c.h.b16 %v1231
    %v2533 = vunpack.c.l.b16 %v1232
    %v2534 = vunpack.c.h.b16 %v1232
    %v2535 = vunpack.c.l.b16 %v1233
    %v2536 = vunpack.c.h.b16 %v1233
    %v2537 = vunpack.c.l.b16 %v1234
    %v2538 = vunpack.c.h.b16 %v1234
    %v2539 = vpack.c.b16 %v2315, %v2313
    %v2540 = vpack.c.b16 %v2316, %v2314
    %v2541 = vpack.c.b16 %v2319, %v2317
    %v2542 = vpack.c.b16 %v2320, %v2318
    %v2543 = vpack.c.b16 %v2323, %v2321
    %v2544 = vpack.c.b16 %v2324, %v2322
    %v2545 = vpack.c.b16 %v2327, %v2325
    %v2546 = vpack.c.b16 %v2328, %v2326
    %v2547 = vpack.c.b16 %v2331, %v2329
    %v2548 = vpack.c.b16 %v2332, %v2330
    %v2549 = vpack.c.b16 %v2335, %v2333
    %v2550 = vpack.c.b16 %v2336, %v2334
    %v2551 = vpack.c.b16 %v2339, %v2337
    %v2552 = vpack.c.b16 %v2340, %v2338
    %v2553 = vpack.c.b16 %v2343, %v2341
    %v2554 = vpack.c.b16 %v2344, %v2342
    %v2555 = vpack.c.b16 %v2347, %v2345
    %v2556 = vpack.c.b16 %v2348, %v2346
    %v2557 = vpack.c.b16 %v2351, %v2349
    %v2558 = vpack.c.b16 %v2352, %v2350
    %v2559 = vpack.c.b16 %v2355, %v2353
    %v2560 = vpack.c.b16 %v2356, %v2354
    %v2561 = vpack.c.b16 %v2359, %v2357
    %v2562 = vpack.c.b16 %v2360, %v2358
    %v2563 = vpack.c.b16 %v2363, %v2361
    %v2564 = vpack.c.b16 %v2364, %v2362
    %v2565 = vpack.c.b16 %v2367, %v2365
    %v2566 = vpack.c.b16 %v2368, %v2366
    %v2567 = vpack.c.b16 %v2371, %v2369
    %v2568 = vpack.c.b16 %v2372, %v2370
    %v2569 = vpack.c.b16 %v2375, %v2373
    %v2570 = vpack.c.b16 %v2376, %v2374
    %v2571 = vpack.c.b16 %v2379, %v2377
    %v2572 = vpack.c.b16 %v2380, %v2378
    %v2573 = vpack.c.b16 %v2383, %v2381
    %v2574 = vpack.c.b16 %v2384, %v2382
    %v2575 = vpack.c.b16 %v2387, %v2385
    %v2576 = vpack.c.b16 %v2388, %v2386
    %v2577 = vpack.c.b16 %v2391, %v2389
    %v2578 = vpack.c.b16 %v2392, %v2390
    %v2579 = vpack.c.b16 %v2395, %v2393
    %v2580 = vpack.c.b16 %v2396, %v2394
    %v2581 = vpack.c.b16 %v2399, %v2397
    %v2582 = vpack.c.b16 %v2400, %v2398
    %v2583 = vpack.c.b16 %v2403, %v2401
    %v2584 = vpack.c.b16 %v2404, %v2402
    %v2585 = vpack.c.b16 %v2407, %v2405
    %v2586 = vpack.c.b16 %v2408, %v2406
    %v2587 = vpack.c.b16 %v2411, %v2409
    %v2588 = vpack.c.b16 %v2412, %v2410
    %v2589 = vpack.c.b16 %v2415, %v2413
    %v2590 = vpack.c.b16 %v2416, %v2414
    %v2591 = vpack.c.b16 %v2419, %v2417
    %v2592 = vpack.c.b16 %v2420, %v2418
    %v2593 = vpack.c.b16 %v2423, %v2421
    %v2594 = vpack.c.b16 %v2424, %v2422
    %v2595 = vpack.c.b16 %v2427, %v2425
    %v2596 = vpack.c.b16 %v2428, %v2426
    %v2597 = vpack.c.b16 %v2431, %v2429
    %v2598 = vpack.c.b16 %v2432, %v2430
    %v2599 = vpack.c.b16 %v2435, %v2433
    %v2600 = vpack.c.b16 %v2436, %v2434
    %v2601 = vpack.c.b16 %v2439, %v2437
    %v2602 = vpack.c.b16 %v2440, %v2438
    %v2603 = vpack.c.b16 %v2443, %v2441
    %v2604 = vpack.c.b16 %v2444, %v2442
    %v2605 = vpack.c.b16 %v2447, %v2445
    %v2606 = vpack.c.b16 %v2448, %v2446
    %v2607 = vpack.c.b16 %v2451, %v2449
    %v2608 = vpack.c.b16 %v2452, %v2450
    %v2609 = vpack.c.b16 %v2455, %v2453
    %v2610 = vpack.c.b16 %v2456, %v2454
    %v2611 = vpack.c.b16 %v2459, %v2457
    %v2612 = vpack.c.b16 %v2460, %v2458
    %v2613 = vpack.c.b16 %v2463, %v2461
    %v2614 = vpack.c.b16 %v2464, %v2462
    %v2615 = vpack.c.b16 %v2467, %v2465
    %v2616 = vpack.c.b16 %v2468, %v2466
    %v2617 = vpack.c.b16 %v2471, %v2469
    %v2618 = vpack.c.b16 %v2472, %v2470
    %v2619 = vpack.c.b16 %v2475, %v2473
    %v2620 = vpack.c.b16 %v2476, %v2474
    %v2621 = vpack.c.b16 %v2479, %v2477
    %v2622 = vpack.c.b16 %v2480, %v2478
    %v2623 = vpack.c.b16 %v2483, %v2481
    %v2624 = vpack.c.b16 %v2484, %v2482
    %v2625 = vpack.c.b16 %v2487, %v2485
    %v2626 = vpack.c.b16 %v2488, %v2486
    %v2627 = vpack.c.b16 %v2491, %v2489
    %v2628 = vpack.c.b16 %v2492, %v2490
    %v2629 = vpack.c.b16 %v2495, %v2493
    %v2630 = vpack.c.b16 %v2496, %v2494
    %v2631 = vpack.c.b16 %v2499, %v2497
    %v2632 = vpack.c.b16 %v2500, %v2498
    %v2633 = vpack.c.b16 %v2503, %v2501
    %v2634 = vpack.c.b16 %v2504, %v2502
    %v2635 = vpack.c.b16 %v2507, %v2505
    %v2636 = vpack.c.b16 %v2508, %v2506
    %v2637 = vpack.c.b16 %v2511, %v2509
    %v2638 = vpack.c.b16 %v2512, %v2510
    %v2639 = vpack.c.b16 %v2515, %v2513
    %v2640 = vpack.c.b16 %v2516, %v2514
    %v2641 = vpack.c.b16 %v2519, %v2517
    %v2642 = vpack.c.b16 %v2520, %v2518
    %v2643 = vpack.c.b16 %v2523, %v2521
    %v2644 = vpack.c.b16 %v2524, %v2522
    %v2645 = vpack.c.b16 %v2527, %v2525
    %v2646 = vpack.c.b16 %v2528, %v2526
    %v2647 = vpack.c.b16 %v2531, %v2529
    %v2648 = vpack.c.b16 %v2532, %v2530
    %v2649 = vpack.c.b16 %v2535, %v2533
    %v2650 = vpack.c.b16 %v2536, %v2534
    %v2651 = vpack.c.b16 %v2537, %v2537
    %v2652 = vpack.c.b16 %v2538, %v2538
    %v2766 = vsel %vm1960, %v2177, 0
    %v2769 = vsel %vm1960, %v2185, 0
    %v2772 = vsel %vm1967, %v2651, 0
    %v2775 = vsel %vm1967, %v2652, 0
    %2777 = vmatprep.subr.bf16.mxu0 %v2540
    %2778 = vmatpush1.bf16.msra.mxu0 %v2539
    %2779 = vmatprep.subr.bf16.mxu0 %v2542
    %2780 = vmatpush1.bf16.msra.mxu0 %v2541
    %2781 = vmatprep.subr.bf16.mxu0 %v2544
    %2782 = vmatpush1.bf16.msra.mxu0 %v2543
    %2783 = vmatprep.subr.bf16.mxu0 %v2546
    %2784 = vmatpush1.bf16.msra.mxu0 %v2545
    %2785 = vmatprep.subr.bf16.mxu0 %v2548
    %2786 = vmatpush1.bf16.msra.mxu0 %v2547
    %2787 = vmatprep.subr.bf16.mxu0 %v2550
    %2788 = vmatpush1.bf16.msra.mxu0 %v2549
    %2789 = vmatprep.subr.bf16.mxu0 %v2552
    %2790 = vmatpush1.bf16.msra.mxu0 %v2551
    %2791 = vmatprep.subr.bf16.mxu0 %v2554
    %2792 = vmatpush1.bf16.msra.mxu0 %v2553
    %2793 = vmatprep.subr.bf16.mxu0 %v2556
    %2794 = vmatpush1.bf16.msra.mxu0 %v2555
    %2795 = vmatprep.subr.bf16.mxu0 %v2558
    %2796 = vmatpush1.bf16.msra.mxu0 %v2557
    %2797 = vmatprep.subr.bf16.mxu0 %v2560
    %2798 = vmatpush1.bf16.msra.mxu0 %v2559
    %2799 = vmatprep.subr.bf16.mxu0 %v2562
    %2800 = vmatpush1.bf16.msra.mxu0 %v2561
    %2801 = vmatprep.subr.bf16.mxu0 %v2564
    %2802 = vmatpush1.bf16.msra.mxu0 %v2563
    %2803 = vmatprep.subr.bf16.mxu0 %v2566
    %2804 = vmatpush1.bf16.msra.mxu0 %v2565
    %2805 = vmatprep.subr.bf16.mxu0 %v2568
    %2806 = vmatpush1.bf16.msra.mxu0 %v2567
    %2807 = vmatprep.subr.bf16.mxu0 %v2570
    %2808 = vmatpush1.bf16.msra.mxu0 %v2569
    %2809 = vmatprep.mubr.bf16.mxu0 %v2171
    %2810 = vmatmul.mubr.bf16.gmra.mrb[0].mxu0 %v2170
    %v2811 = vpop.f32.mrb[0].mxu0
    %v2812 = vadd.f32 %v2156, %v2811
    %v2813 = vpop.f32.mrb[0].mxu0
    %v2814 = vadd.f32 %v2158, %v2813
    %v2815 = vpop.f32.mrb[0].mxu0
    %v2816 = vadd.f32 %v2160, %v2815
    %v2817 = vpop.f32.mrb[0].mxu0
    %v2818 = vadd.f32 %v2162, %v2817
    %2819 = vmatprep.mubr.bf16.mxu0 %v2179
    %2820 = vmatmul.mubr.bf16.gmra.mrb[0].mxu0 %v2178
    %v2821 = vpop.f32.mrb[0].mxu0
    %v2822 = vpop.f32.mrb[0].mxu0
    %v2823 = vpop.f32.mrb[0].mxu0
    %v2824 = vpop.f32.mrb[0].mxu0
    %2825 = vdwg.mxu0
    %2826 = vmatprep.subr.bf16.mxu0 %v2572
    %2827 = vmatpush1.bf16.msra.mxu0 %v2571
    %2828 = vmatprep.subr.bf16.mxu0 %v2574
    %2829 = vmatpush1.bf16.msra.mxu0 %v2573
    %2830 = vmatprep.subr.bf16.mxu0 %v2576
    %2831 = vmatpush1.bf16.msra.mxu0 %v2575
    %2832 = vmatprep.subr.bf16.mxu0 %v2578
    %2833 = vmatpush1.bf16.msra.mxu0 %v2577
    %2834 = vmatprep.subr.bf16.mxu0 %v2580
    %2835 = vmatpush1.bf16.msra.mxu0 %v2579
    %2836 = vmatprep.subr.bf16.mxu0 %v2582
    %2837 = vmatpush1.bf16.msra.mxu0 %v2581
    %2838 = vmatprep.subr.bf16.mxu0 %v2584
    %2839 = vmatpush1.bf16.msra.mxu0 %v2583
    %2840 = vmatprep.subr.bf16.mxu0 %v2586
    %2841 = vmatpush1.bf16.msra.mxu0 %v2585
    %2842 = vmatprep.subr.bf16.mxu0 %v2588
    %2843 = vmatpush1.bf16.msra.mxu0 %v2587
    %2844 = vmatprep.subr.bf16.mxu0 %v2590
    %2845 = vmatpush1.bf16.msra.mxu0 %v2589
    %2846 = vmatprep.subr.bf16.mxu0 %v2592
    %2847 = vmatpush1.bf16.msra.mxu0 %v2591
    %2848 = vmatprep.subr.bf16.mxu0 %v2594
    %2849 = vmatpush1.bf16.msra.mxu0 %v2593
    %2850 = vmatprep.subr.bf16.mxu0 %v2596
    %2851 = vmatpush1.bf16.msra.mxu0 %v2595
    %2852 = vmatprep.subr.bf16.mxu0 %v2598
    %2853 = vmatpush1.bf16.msra.mxu0 %v2597
    %2854 = vmatprep.subr.bf16.mxu0 %v2600
    %2855 = vmatpush1.bf16.msra.mxu0 %v2599
    %2856 = vmatprep.subr.bf16.mxu0 %v2602
    %2857 = vmatpush1.bf16.msra.mxu0 %v2601
    %2858 = vmatprep.mubr.bf16.mxu0 %v2173
    %2859 = vmatmul.mubr.bf16.gmra.mrb[0].mxu0 %v2172
    %v2860 = vpop.f32.mrb[0].mxu0
    %v2861 = vadd.f32 %v2812, %v2860
    %v2862 = vpop.f32.mrb[0].mxu0
    %v2863 = vadd.f32 %v2814, %v2862
    %v2864 = vpop.f32.mrb[0].mxu0
    %v2865 = vadd.f32 %v2816, %v2864
    %v2866 = vpop.f32.mrb[0].mxu0
    %v2867 = vadd.f32 %v2818, %v2866
    %2868 = vmatprep.mubr.bf16.mxu0 %v2181
    %2869 = vmatmul.mubr.bf16.gmra.mrb[0].mxu0 %v2180
    %v2870 = vpop.f32.mrb[0].mxu0
    %v2871 = vpop.f32.mrb[0].mxu0
    %v2872 = vpop.f32.mrb[0].mxu0
    %v2873 = vpop.f32.mrb[0].mxu0
    %2874 = vdwg.mxu0
    %2875 = vmatprep.subr.bf16.mxu0 %v2604
    %2876 = vmatpush1.bf16.msra.mxu0 %v2603
    %2877 = vmatprep.subr.bf16.mxu0 %v2606
    %2878 = vmatpush1.bf16.msra.mxu0 %v2605
    %2879 = vmatprep.subr.bf16.mxu0 %v2608
    %2880 = vmatpush1.bf16.msra.mxu0 %v2607
    %2881 = vmatprep.subr.bf16.mxu0 %v2610
    %2882 = vmatpush1.bf16.msra.mxu0 %v2609
    %2883 = vmatprep.subr.bf16.mxu0 %v2612
    %2884 = vmatpush1.bf16.msra.mxu0 %v2611
    %2885 = vmatprep.subr.bf16.mxu0 %v2614
    %2886 = vmatpush1.bf16.msra.mxu0 %v2613
    %2887 = vmatprep.subr.bf16.mxu0 %v2616
    %2888 = vmatpush1.bf16.msra.mxu0 %v2615
    %2889 = vmatprep.subr.bf16.mxu0 %v2618
    %2890 = vmatpush1.bf16.msra.mxu0 %v2617
    %2891 = vmatprep.subr.bf16.mxu0 %v2620
    %2892 = vmatpush1.bf16.msra.mxu0 %v2619
    %2893 = vmatprep.subr.bf16.mxu0 %v2622
    %2894 = vmatpush1.bf16.msra.mxu0 %v2621
    %2895 = vmatprep.subr.bf16.mxu0 %v2624
    %2896 = vmatpush1.bf16.msra.mxu0 %v2623
    %2897 = vmatprep.subr.bf16.mxu0 %v2626
    %2898 = vmatpush1.bf16.msra.mxu0 %v2625
    %2899 = vmatprep.subr.bf16.mxu0 %v2628
    %2900 = vmatpush1.bf16.msra.mxu0 %v2627
    %2901 = vmatprep.subr.bf16.mxu0 %v2630
    %2902 = vmatpush1.bf16.msra.mxu0 %v2629
    %2903 = vmatprep.subr.bf16.mxu0 %v2632
    %2904 = vmatpush1.bf16.msra.mxu0 %v2631
    %2905 = vmatprep.subr.bf16.mxu0 %v2634
    %2906 = vmatpush1.bf16.msra.mxu0 %v2633
    %2907 = vmatprep.mubr.bf16.mxu0 %v2175
    %2908 = vmatmul.mubr.bf16.gmra.mrb[0].mxu0 %v2174
    %v2909 = vpop.f32.mrb[0].mxu0
    %v2910 = vadd.f32 %v2861, %v2909
    %v2911 = vpop.f32.mrb[0].mxu0
    %v2912 = vadd.f32 %v2863, %v2911
    %v2913 = vpop.f32.mrb[0].mxu0
    %v2914 = vadd.f32 %v2865, %v2913
    %v2915 = vpop.f32.mrb[0].mxu0
    %v2916 = vadd.f32 %v2867, %v2915
    %2917 = vmatprep.mubr.bf16.mxu0 %v2183
    %2918 = vmatmul.mubr.bf16.gmra.mrb[0].mxu0 %v2182
    %v2919 = vpop.f32.mrb[0].mxu0
    %v2920 = vpop.f32.mrb[0].mxu0
    %v2921 = vpop.f32.mrb[0].mxu0
    %v2922 = vpop.f32.mrb[0].mxu0
    %2923 = vdwg.mxu0
    %2924 = vmatprep.subr.bf16.mxu0 %v2636
    %2925 = vmatpush1.bf16.msra.mxu0 %v2635
    %2926 = vmatprep.subr.bf16.mxu0 %v2638
    %2927 = vmatpush1.bf16.msra.mxu0 %v2637
    %2928 = vmatprep.subr.bf16.mxu0 %v2640
    %2929 = vmatpush1.bf16.msra.mxu0 %v2639
    %2930 = vmatprep.subr.bf16.mxu0 %v2642
    %2931 = vmatpush1.bf16.msra.mxu0 %v2641
    %2932 = vmatprep.subr.bf16.mxu0 %v2644
    %2933 = vmatpush1.bf16.msra.mxu0 %v2643
    %2934 = vmatprep.subr.bf16.mxu0 %v2646
    %2935 = vmatpush1.bf16.msra.mxu0 %v2645
    %2936 = vmatprep.subr.bf16.mxu0 %v2648
    %2937 = vmatpush1.bf16.msra.mxu0 %v2647
    %2938 = vmatprep.subr.bf16.mxu0 %v2650
    %2939 = vmatpush1.bf16.msra.mxu0 %v2649
    %2940 = vmatprep.subr.bf16.mxu0 %v2775
    %2941 = vmatpush1.bf16.msra.mxu0 %v2772
    %2942 = vmatprep.subr.bf16.mxu0 0
    %2943 = vmatpush1.bf16.msra.mxu0 0
    %2944 = vmatprep.subr.bf16.mxu0 0
    %2945 = vmatpush1.bf16.msra.mxu0 0
    %2946 = vmatprep.subr.bf16.mxu0 0
    %2947 = vmatpush1.bf16.msra.mxu0 0
    %2948 = vmatprep.subr.bf16.mxu0 0
    %2949 = vmatpush1.bf16.msra.mxu0 0
    %2950 = vmatprep.subr.bf16.mxu0 0
    %2951 = vmatpush1.bf16.msra.mxu0 0
    %2952 = vmatprep.subr.bf16.mxu0 0
    %2953 = vmatpush1.bf16.msra.mxu0 0
    %2954 = vmatprep.subr.bf16.mxu0 0
    %2955 = vmatpush1.bf16.msra.mxu0 0
    %2956 = vmatprep.mubr.bf16.mxu0 %v2766
    %2957 = vmatmul.mubr.bf16.gmra.mrb[0].mxu0 %v2176
    %v2958 = vpop.f32.mrb[0].mxu0
    %v2959 = vadd.f32 %v2910, %v2958
    %v2960 = vpop.f32.mrb[0].mxu0
    %v2961 = vadd.f32 %v2912, %v2960
    %v2962 = vpop.f32.mrb[0].mxu0
    %v2963 = vadd.f32 %v2914, %v2962
    %v2964 = vpop.f32.mrb[0].mxu0
    %v2965 = vadd.f32 %v2916, %v2964
    %2966 = vmatprep.mubr.bf16.mxu0 %v2769
    %2967 = vmatmul.mubr.bf16.gmra.mrb[0].mxu0 %v2184
    %v2968 = vpop.f32.mrb[0].mxu0
    %v2969 = vpop.f32.mrb[0].mxu0
    %v2970 = vpop.f32.mrb[0].mxu0
    %v2971 = vpop.f32.mrb[0].mxu0
    %2972 = vdwg.mxu0
    %v2981 = vunpack.c.l.b16 %v1050
    %v2982 = vunpack.c.l.b16 %v1051
    %v2983 = vunpack.c.l.b16 %v1052
    %v2984 = vunpack.c.l.b16 %v1053
    %v2985 = vunpack.c.l.b16 %v1054
    %v2986 = vunpack.c.l.b16 %v1055
    %v2987 = vunpack.c.l.b16 %v1056
    %v2988 = vunpack.c.l.b16 %v1057
    %s2989 = scalar_lea.vmem [#allocation7], 1808
    %v2990 = vld [vmem:[%s2989] sm:$0xff]
    %v2991 = vld [vmem:[%s2989 + $0x8] sm:$0xff]
    %v2992 = vld [vmem:[%s2989 + $0x10] sm:$0xff]
    %v2993 = vld [vmem:[%s2989 + $0x18] sm:$0xff]
    %v2994 = vld [vmem:[%s2989 + $0x20] sm:$0xff]
    %v2995 = vld [vmem:[%s2989 + $0x28] sm:$0xff]
    %v2996 = vld [vmem:[%s2989 + $0x30] sm:$0xff]
    %v2997 = vld [vmem:[%s2989 + $0x38] sm:$0xff]
    %v2998 = vld [vmem:[%s2989 + $0x40] sm:$0xff]
    %v2999 = vld [vmem:[%s2989 + $0x48] sm:$0xff]
    %v3000 = vld [vmem:[%s2989 + $0x50] sm:$0xff]
    %v3001 = vld [vmem:[%s2989 + $0x58] sm:$0xff]
    %v3002 = vld [vmem:[%s2989 + $0x60] sm:$0xff]
    %v3003 = vld [vmem:[%s2989 + $0x68] sm:$0xff]
    %v3004 = vld [vmem:[%s2989 + $0x70] sm:$0xff]
    %v3005 = vld [vmem:[%s2989 + $0x78] sm:$0xff]
    %v3006 = vld [vmem:[%s2989 + $0x80] sm:$0xff]
    %v3007 = vld [vmem:[%s2989 + $0x88] sm:$0xff]
    %v3008 = vld [vmem:[%s2989 + $0x90] sm:$0xff]
    %v3009 = vld [vmem:[%s2989 + $0x98] sm:$0xff]
    %v3010 = vld [vmem:[%s2989 + $0xa0] sm:$0xff]
    %v3011 = vld [vmem:[%s2989 + $0xa8] sm:$0xff]
    %v3012 = vld [vmem:[%s2989 + $0xb0] sm:$0xff]
    %v3013 = vld [vmem:[%s2989 + $0xb8] sm:$0xff]
    %v3014 = vld [vmem:[%s2989 + $0xc0] sm:$0xff]
    %v3015 = vld [vmem:[%s2989 + $0xc8] sm:$0xff]
    %v3016 = vld [vmem:[%s2989 + $0xd0] sm:$0xff]
    %v3017 = vld [vmem:[%s2989 + $0xd8] sm:$0xff]
    %v3018 = vld [vmem:[%s2989 + $0xe0] sm:$0xff]
    %v3019 = vld [vmem:[%s2989 + $0xe8] sm:$0xff]
    %v3020 = vld [vmem:[%s2989 + $0xf0] sm:$0xff]
    %v3021 = vld [vmem:[%s2989 + $0xf8] sm:$0xff]
    %v3022 = vld [vmem:[%s2989 + $0x100] sm:$0xff]
    %v3023 = vld [vmem:[%s2989 + $0x108] sm:$0xff]
    %v3024 = vld [vmem:[%s2989 + $0x110] sm:$0xff]
    %v3025 = vld [vmem:[%s2989 + $0x118] sm:$0xff]
    %v3026 = vld [vmem:[%s2989 + $0x120] sm:$0xff]
    %v3027 = vld [vmem:[%s2989 + $0x128] sm:$0xff]
    %v3028 = vld [vmem:[%s2989 + $0x130] sm:$0xff]
    %v3029 = vld [vmem:[%s2989 + $0x138] sm:$0xff]
    %v3030 = vld [vmem:[%s2989 + $0x140] sm:$0xff]
    %v3031 = vld [vmem:[%s2989 + $0x148] sm:$0xff]
    %v3032 = vld [vmem:[%s2989 + $0x150] sm:$0xff]
    %v3033 = vld [vmem:[%s2989 + $0x158] sm:$0xff]
    %v3034 = vld [vmem:[%s2989 + $0x160] sm:$0xff]
    %v3035 = vld [vmem:[%s2989 + $0x168] sm:$0xff]
    %v3036 = vld [vmem:[%s2989 + $0x170] sm:$0xff]
    %v3037 = vld [vmem:[%s2989 + $0x178] sm:$0xff]
    %v3038 = vld [vmem:[%s2989 + $0x180] sm:$0xff]
    %v3039 = vld [vmem:[%s2989 + $0x188] sm:$0xff]
    %v3040 = vld [vmem:[%s2989 + $0x190] sm:$0xff]
    %v3041 = vld [vmem:[%s2989 + $0x198] sm:$0xff]
    %v3042 = vld [vmem:[%s2989 + $0x1a0] sm:$0xff]
    %v3043 = vld [vmem:[%s2989 + $0x1a8] sm:$0xff]
    %v3044 = vld [vmem:[%s2989 + $0x1b0] sm:$0xff]
    %v3045 = vld [vmem:[%s2989 + $0x1b8] sm:$0xff]
    %v3046 = vld [vmem:[%s2989 + $0x1c0] sm:$0xff]
    %v3047 = vld [vmem:[%s2989 + $0x1c8] sm:$0xff]
    %v3048 = vld [vmem:[%s2989 + $0x1d0] sm:$0xff]
    %v3049 = vld [vmem:[%s2989 + $0x1d8] sm:$0xff]
    %v3050 = vld [vmem:[%s2989 + $0x1e0] sm:$0xff]
    %v3051 = vld [vmem:[%s2989 + $0x1e8] sm:$0xff]
    %v3052 = vld [vmem:[%s2989 + $0x1f0] sm:$0xff]
    %v3053 = vld [vmem:[%s2989 + $0x1f8] sm:$0xff]
    %v3054 = vld [vmem:[%s2989 + $0x200] sm:$0xff]
    %v3055 = vld [vmem:[%s2989 + $0x208] sm:$0xff]
    %v3056 = vld [vmem:[%s2989 + $0x210] sm:$0xff]
    %v3057 = vld [vmem:[%s2989 + $0x218] sm:$0xff]
    %v3058 = vld [vmem:[%s2989 + $0x220] sm:$0xff]
    %v3059 = vld [vmem:[%s2989 + $0x228] sm:$0xff]
    %v3060 = vld [vmem:[%s2989 + $0x230] sm:$0xff]
    %v3061 = vld [vmem:[%s2989 + $0x238] sm:$0xff]
    %v3062 = vld [vmem:[%s2989 + $0x240] sm:$0xff]
    %v3063 = vld [vmem:[%s2989 + $0x248] sm:$0xff]
    %v3064 = vld [vmem:[%s2989 + $0x250] sm:$0xff]
    %v3065 = vld [vmem:[%s2989 + $0x258] sm:$0xff]
    %v3066 = vld [vmem:[%s2989 + $0x260] sm:$0xff]
    %v3067 = vld [vmem:[%s2989 + $0x268] sm:$0xff]
    %v3068 = vld [vmem:[%s2989 + $0x270] sm:$0xff]
    %v3069 = vld [vmem:[%s2989 + $0x278] sm:$0xff]
    %v3070 = vld [vmem:[%s2989 + $0x280] sm:$0xff]
    %v3071 = vld [vmem:[%s2989 + $0x288] sm:$0xff]
    %v3072 = vld [vmem:[%s2989 + $0x290] sm:$0xff]
    %v3073 = vld [vmem:[%s2989 + $0x298] sm:$0xff]
    %v3074 = vld [vmem:[%s2989 + $0x2a0] sm:$0xff]
    %v3075 = vld [vmem:[%s2989 + $0x2a8] sm:$0xff]
    %v3076 = vld [vmem:[%s2989 + $0x2b0] sm:$0xff]
    %v3077 = vld [vmem:[%s2989 + $0x2b8] sm:$0xff]
    %v3078 = vld [vmem:[%s2989 + $0x2c0] sm:$0xff]
    %v3079 = vld [vmem:[%s2989 + $0x2c8] sm:$0xff]
    %v3080 = vld [vmem:[%s2989 + $0x2d0] sm:$0xff]
    %v3081 = vld [vmem:[%s2989 + $0x2d8] sm:$0xff]
    %v3082 = vld [vmem:[%s2989 + $0x2e0] sm:$0xff]
    %v3083 = vld [vmem:[%s2989 + $0x2e8] sm:$0xff]
    %v3084 = vld [vmem:[%s2989 + $0x2f0] sm:$0xff]
    %v3085 = vld [vmem:[%s2989 + $0x2f8] sm:$0xff]
    %v3086 = vld [vmem:[%s2989 + $0x300] sm:$0xff]
    %v3087 = vld [vmem:[%s2989 + $0x308] sm:$0xff]
    %v3088 = vld [vmem:[%s2989 + $0x310] sm:$0xff]
    %v3089 = vld [vmem:[%s2989 + $0x318] sm:$0xff]
    %v3090 = vld [vmem:[%s2989 + $0x320] sm:$0xff]
    %v3091 = vld [vmem:[%s2989 + $0x328] sm:$0xff]
    %v3092 = vld [vmem:[%s2989 + $0x330] sm:$0xff]
    %v3093 = vld [vmem:[%s2989 + $0x338] sm:$0xff]
    %v3094 = vld [vmem:[%s2989 + $0x340] sm:$0xff]
    %v3095 = vld [vmem:[%s2989 + $0x348] sm:$0xff]
    %v3096 = vld [vmem:[%s2989 + $0x350] sm:$0xff]
    %v3097 = vld [vmem:[%s2989 + $0x358] sm:$0xff]
    %v3098 = vld [vmem:[%s2989 + $0x360] sm:$0xff]
    %v3099 = vld [vmem:[%s2989 + $0x368] sm:$0xff]
    %v3100 = vld [vmem:[%s2989 + $0x370] sm:$0xff]
    %v3101 = vld [vmem:[%s2989 + $0x378] sm:$0xff]
    %v3102 = vld [vmem:[%s2989 + $0x380] sm:$0x33]
    %v3103 = vpack.c.b16 %v1243, %v1114
    %v3104 = vpack.c.b16 %v1244, %v1115
    %v3105 = vpack.c.b16 %v1245, %v1116
    %v3106 = vpack.c.b16 %v1246, %v1117
    %v3107 = vpack.c.b16 %v1247, %v1118
    %v3108 = vpack.c.b16 %v1248, %v1119
    %v3109 = vpack.c.b16 %v1249, %v1120
    %v3110 = vpack.c.b16 %v1250, %v1121
    %v3111 = vpack.c.b16 %v2981, %v2981
    %v3112 = vpack.c.b16 %v2982, %v2982
    %v3113 = vpack.c.b16 %v2983, %v2983
    %v3114 = vpack.c.b16 %v2984, %v2984
    %v3115 = vpack.c.b16 %v2985, %v2985
    %v3116 = vpack.c.b16 %v2986, %v2986
    %v3117 = vpack.c.b16 %v2987, %v2987
    %v3118 = vpack.c.b16 %v2988, %v2988
    %v3246 = vunpack.c.l.b16 %v2990
    %v3247 = vunpack.c.h.b16 %v2990
    %v3248 = vunpack.c.l.b16 %v2991
    %v3249 = vunpack.c.h.b16 %v2991
    %v3250 = vunpack.c.l.b16 %v2992
    %v3251 = vunpack.c.h.b16 %v2992
    %v3252 = vunpack.c.l.b16 %v2993
    %v3253 = vunpack.c.h.b16 %v2993
    %v3254 = vunpack.c.l.b16 %v2994
    %v3255 = vunpack.c.h.b16 %v2994
    %v3256 = vunpack.c.l.b16 %v2995
    %v3257 = vunpack.c.h.b16 %v2995
    %v3258 = vunpack.c.l.b16 %v2996
    %v3259 = vunpack.c.h.b16 %v2996
    %v3260 = vunpack.c.l.b16 %v2997
    %v3261 = vunpack.c.h.b16 %v2997
    %v3262 = vunpack.c.l.b16 %v2998
    %v3263 = vunpack.c.h.b16 %v2998
    %v3264 = vunpack.c.l.b16 %v2999
    %v3265 = vunpack.c.h.b16 %v2999
    %v3266 = vunpack.c.l.b16 %v3000
    %v3267 = vunpack.c.h.b16 %v3000
    %v3268 = vunpack.c.l.b16 %v3001
    %v3269 = vunpack.c.h.b16 %v3001
    %v3270 = vunpack.c.l.b16 %v3002
    %v3271 = vunpack.c.h.b16 %v3002
    %v3272 = vunpack.c.l.b16 %v3003
    %v3273 = vunpack.c.h.b16 %v3003
    %v3274 = vunpack.c.l.b16 %v3004
    %v3275 = vunpack.c.h.b16 %v3004
    %v3276 = vunpack.c.l.b16 %v3005
    %v3277 = vunpack.c.h.b16 %v3005
    %v3278 = vunpack.c.l.b16 %v3006
    %v3279 = vunpack.c.h.b16 %v3006
    %v3280 = vunpack.c.l.b16 %v3007
    %v3281 = vunpack.c.h.b16 %v3007
    %v3282 = vunpack.c.l.b16 %v3008
    %v3283 = vunpack.c.h.b16 %v3008
    %v3284 = vunpack.c.l.b16 %v3009
    %v3285 = vunpack.c.h.b16 %v3009
    %v3286 = vunpack.c.l.b16 %v3010
    %v3287 = vunpack.c.h.b16 %v3010
    %v3288 = vunpack.c.l.b16 %v3011
    %v3289 = vunpack.c.h.b16 %v3011
    %v3290 = vunpack.c.l.b16 %v3012
    %v3291 = vunpack.c.h.b16 %v3012
    %v3292 = vunpack.c.l.b16 %v3013
    %v3293 = vunpack.c.h.b16 %v3013
    %v3294 = vunpack.c.l.b16 %v3014
    %v3295 = vunpack.c.h.b16 %v3014
    %v3296 = vunpack.c.l.b16 %v3015
    %v3297 = vunpack.c.h.b16 %v3015
    %v3298 = vunpack.c.l.b16 %v3016
    %v3299 = vunpack.c.h.b16 %v3016
    %v3300 = vunpack.c.l.b16 %v3017
    %v3301 = vunpack.c.h.b16 %v3017
    %v3302 = vunpack.c.l.b16 %v3018
    %v3303 = vunpack.c.h.b16 %v3018
    %v3304 = vunpack.c.l.b16 %v3019
    %v3305 = vunpack.c.h.b16 %v3019
    %v3306 = vunpack.c.l.b16 %v3020
    %v3307 = vunpack.c.h.b16 %v3020
    %v3308 = vunpack.c.l.b16 %v3021
    %v3309 = vunpack.c.h.b16 %v3021
    %v3310 = vunpack.c.l.b16 %v3022
    %v3311 = vunpack.c.h.b16 %v3022
    %v3312 = vunpack.c.l.b16 %v3023
    %v3313 = vunpack.c.h.b16 %v3023
    %v3314 = vunpack.c.l.b16 %v3024
    %v3315 = vunpack.c.h.b16 %v3024
    %v3316 = vunpack.c.l.b16 %v3025
    %v3317 = vunpack.c.h.b16 %v3025
    %v3318 = vunpack.c.l.b16 %v3026
    %v3319 = vunpack.c.h.b16 %v3026
    %v3320 = vunpack.c.l.b16 %v3027
    %v3321 = vunpack.c.h.b16 %v3027
    %v3322 = vunpack.c.l.b16 %v3028
    %v3323 = vunpack.c.h.b16 %v3028
    %v3324 = vunpack.c.l.b16 %v3029
    %v3325 = vunpack.c.h.b16 %v3029
    %v3326 = vunpack.c.l.b16 %v3030
    %v3327 = vunpack.c.h.b16 %v3030
    %v3328 = vunpack.c.l.b16 %v3031
    %v3329 = vunpack.c.h.b16 %v3031
    %v3330 = vunpack.c.l.b16 %v3032
    %v3331 = vunpack.c.h.b16 %v3032
    %v3332 = vunpack.c.l.b16 %v3033
    %v3333 = vunpack.c.h.b16 %v3033
    %v3334 = vunpack.c.l.b16 %v3034
    %v3335 = vunpack.c.h.b16 %v3034
    %v3336 = vunpack.c.l.b16 %v3035
    %v3337 = vunpack.c.h.b16 %v3035
    %v3338 = vunpack.c.l.b16 %v3036
    %v3339 = vunpack.c.h.b16 %v3036
    %v3340 = vunpack.c.l.b16 %v3037
    %v3341 = vunpack.c.h.b16 %v3037
    %v3342 = vunpack.c.l.b16 %v3038
    %v3343 = vunpack.c.h.b16 %v3038
    %v3344 = vunpack.c.l.b16 %v3039
    %v3345 = vunpack.c.h.b16 %v3039
    %v3346 = vunpack.c.l.b16 %v3040
    %v3347 = vunpack.c.h.b16 %v3040
    %v3348 = vunpack.c.l.b16 %v3041
    %v3349 = vunpack.c.h.b16 %v3041
    %v3350 = vunpack.c.l.b16 %v3042
    %v3351 = vunpack.c.h.b16 %v3042
    %v3352 = vunpack.c.l.b16 %v3043
    %v3353 = vunpack.c.h.b16 %v3043
    %v3354 = vunpack.c.l.b16 %v3044
    %v3355 = vunpack.c.h.b16 %v3044
    %v3356 = vunpack.c.l.b16 %v3045
    %v3357 = vunpack.c.h.b16 %v3045
    %v3358 = vunpack.c.l.b16 %v3046
    %v3359 = vunpack.c.h.b16 %v3046
    %v3360 = vunpack.c.l.b16 %v3047
    %v3361 = vunpack.c.h.b16 %v3047
    %v3362 = vunpack.c.l.b16 %v3048
    %v3363 = vunpack.c.h.b16 %v3048
    %v3364 = vunpack.c.l.b16 %v3049
    %v3365 = vunpack.c.h.b16 %v3049
    %v3366 = vunpack.c.l.b16 %v3050
    %v3367 = vunpack.c.h.b16 %v3050
    %v3368 = vunpack.c.l.b16 %v3051
    %v3369 = vunpack.c.h.b16 %v3051
    %v3370 = vunpack.c.l.b16 %v3052
    %v3371 = vunpack.c.h.b16 %v3052
    %v3372 = vunpack.c.l.b16 %v3053
    %v3373 = vunpack.c.h.b16 %v3053
    %v3374 = vunpack.c.l.b16 %v3054
    %v3375 = vunpack.c.h.b16 %v3054
    %v3376 = vunpack.c.l.b16 %v3055
    %v3377 = vunpack.c.h.b16 %v3055
    %v3378 = vunpack.c.l.b16 %v3056
    %v3379 = vunpack.c.h.b16 %v3056
    %v3380 = vunpack.c.l.b16 %v3057
    %v3381 = vunpack.c.h.b16 %v3057
    %v3382 = vunpack.c.l.b16 %v3058
    %v3383 = vunpack.c.h.b16 %v3058
    %v3384 = vunpack.c.l.b16 %v3059
    %v3385 = vunpack.c.h.b16 %v3059
    %v3386 = vunpack.c.l.b16 %v3060
    %v3387 = vunpack.c.h.b16 %v3060
    %v3388 = vunpack.c.l.b16 %v3061
    %v3389 = vunpack.c.h.b16 %v3061
    %v3390 = vunpack.c.l.b16 %v3062
    %v3391 = vunpack.c.h.b16 %v3062
    %v3392 = vunpack.c.l.b16 %v3063
    %v3393 = vunpack.c.h.b16 %v3063
    %v3394 = vunpack.c.l.b16 %v3064
    %v3395 = vunpack.c.h.b16 %v3064
    %v3396 = vunpack.c.l.b16 %v3065
    %v3397 = vunpack.c.h.b16 %v3065
    %v3398 = vunpack.c.l.b16 %v3066
    %v3399 = vunpack.c.h.b16 %v3066
    %v3400 = vunpack.c.l.b16 %v3067
    %v3401 = vunpack.c.h.b16 %v3067
    %v3402 = vunpack.c.l.b16 %v3068
    %v3403 = vunpack.c.h.b16 %v3068
    %v3404 = vunpack.c.l.b16 %v3069
    %v3405 = vunpack.c.h.b16 %v3069
    %v3406 = vunpack.c.l.b16 %v3070
    %v3407 = vunpack.c.h.b16 %v3070
    %v3408 = vunpack.c.l.b16 %v3071
    %v3409 = vunpack.c.h.b16 %v3071
    %v3410 = vunpack.c.l.b16 %v3072
    %v3411 = vunpack.c.h.b16 %v3072
    %v3412 = vunpack.c.l.b16 %v3073
    %v3413 = vunpack.c.h.b16 %v3073
    %v3414 = vunpack.c.l.b16 %v3074
    %v3415 = vunpack.c.h.b16 %v3074
    %v3416 = vunpack.c.l.b16 %v3075
    %v3417 = vunpack.c.h.b16 %v3075
    %v3418 = vunpack.c.l.b16 %v3076
    %v3419 = vunpack.c.h.b16 %v3076
    %v3420 = vunpack.c.l.b16 %v3077
    %v3421 = vunpack.c.h.b16 %v3077
    %v3422 = vunpack.c.l.b16 %v3078
    %v3423 = vunpack.c.h.b16 %v3078
    %v3424 = vunpack.c.l.b16 %v3079
    %v3425 = vunpack.c.h.b16 %v3079
    %v3426 = vunpack.c.l.b16 %v3080
    %v3427 = vunpack.c.h.b16 %v3080
    %v3428 = vunpack.c.l.b16 %v3081
    %v3429 = vunpack.c.h.b16 %v3081
    %v3430 = vunpack.c.l.b16 %v3082
    %v3431 = vunpack.c.h.b16 %v3082
    %v3432 = vunpack.c.l.b16 %v3083
    %v3433 = vunpack.c.h.b16 %v3083
    %v3434 = vunpack.c.l.b16 %v3084
    %v3435 = vunpack.c.h.b16 %v3084
    %v3436 = vunpack.c.l.b16 %v3085
    %v3437 = vunpack.c.h.b16 %v3085
    %v3438 = vunpack.c.l.b16 %v3086
    %v3439 = vunpack.c.h.b16 %v3086
    %v3440 = vunpack.c.l.b16 %v3087
    %v3441 = vunpack.c.h.b16 %v3087
    %v3442 = vunpack.c.l.b16 %v3088
    %v3443 = vunpack.c.h.b16 %v3088
    %v3444 = vunpack.c.l.b16 %v3089
    %v3445 = vunpack.c.h.b16 %v3089
    %v3446 = vunpack.c.l.b16 %v3090
    %v3447 = vunpack.c.h.b16 %v3090
    %v3448 = vunpack.c.l.b16 %v3091
    %v3449 = vunpack.c.h.b16 %v3091
    %v3450 = vunpack.c.l.b16 %v3092
    %v3451 = vunpack.c.h.b16 %v3092
    %v3452 = vunpack.c.l.b16 %v3093
    %v3453 = vunpack.c.h.b16 %v3093
    %v3454 = vunpack.c.l.b16 %v3094
    %v3455 = vunpack.c.h.b16 %v3094
    %v3456 = vunpack.c.l.b16 %v3095
    %v3457 = vunpack.c.h.b16 %v3095
    %v3458 = vunpack.c.l.b16 %v3096
    %v3459 = vunpack.c.h.b16 %v3096
    %v3460 = vunpack.c.l.b16 %v3097
    %v3461 = vunpack.c.h.b16 %v3097
    %v3462 = vunpack.c.l.b16 %v3098
    %v3463 = vunpack.c.h.b16 %v3098
    %v3464 = vunpack.c.l.b16 %v3099
    %v3465 = vunpack.c.h.b16 %v3099
    %v3466 = vunpack.c.l.b16 %v3100
    %v3467 = vunpack.c.h.b16 %v3100
    %v3468 = vunpack.c.l.b16 %v3101
    %v3469 = vunpack.c.h.b16 %v3101
    %v3470 = vunpack.c.l.b16 %v3102
    %v3471 = vunpack.c.h.b16 %v3102
    %v3472 = vpack.c.b16 %v3248, %v3246
    %v3473 = vpack.c.b16 %v3249, %v3247
    %v3474 = vpack.c.b16 %v3252, %v3250
    %v3475 = vpack.c.b16 %v3253, %v3251
    %v3476 = vpack.c.b16 %v3256, %v3254
    %v3477 = vpack.c.b16 %v3257, %v3255
    %v3478 = vpack.c.b16 %v3260, %v3258
    %v3479 = vpack.c.b16 %v3261, %v3259
    %v3480 = vpack.c.b16 %v3264, %v3262
    %v3481 = vpack.c.b16 %v3265, %v3263
    %v3482 = vpack.c.b16 %v3268, %v3266
    %v3483 = vpack.c.b16 %v3269, %v3267
    %v3484 = vpack.c.b16 %v3272, %v3270
    %v3485 = vpack.c.b16 %v3273, %v3271
    %v3486 = vpack.c.b16 %v3276, %v3274
    %v3487 = vpack.c.b16 %v3277, %v3275
    %v3488 = vpack.c.b16 %v3280, %v3278
    %v3489 = vpack.c.b16 %v3281, %v3279
    %v3490 = vpack.c.b16 %v3284, %v3282
    %v3491 = vpack.c.b16 %v3285, %v3283
    %v3492 = vpack.c.b16 %v3288, %v3286
    %v3493 = vpack.c.b16 %v3289, %v3287
    %v3494 = vpack.c.b16 %v3292, %v3290
    %v3495 = vpack.c.b16 %v3293, %v3291
    %v3496 = vpack.c.b16 %v3296, %v3294
    %v3497 = vpack.c.b16 %v3297, %v3295
    %v3498 = vpack.c.b16 %v3300, %v3298
    %v3499 = vpack.c.b16 %v3301, %v3299
    %v3500 = vpack.c.b16 %v3304, %v3302
    %v3501 = vpack.c.b16 %v3305, %v3303
    %v3502 = vpack.c.b16 %v3308, %v3306
    %v3503 = vpack.c.b16 %v3309, %v3307
    %v3504 = vpack.c.b16 %v3312, %v3310
    %v3505 = vpack.c.b16 %v3313, %v3311
    %v3506 = vpack.c.b16 %v3316, %v3314
    %v3507 = vpack.c.b16 %v3317, %v3315
    %v3508 = vpack.c.b16 %v3320, %v3318
    %v3509 = vpack.c.b16 %v3321, %v3319
    %v3510 = vpack.c.b16 %v3324, %v3322
    %v3511 = vpack.c.b16 %v3325, %v3323
    %v3512 = vpack.c.b16 %v3328, %v3326
    %v3513 = vpack.c.b16 %v3329, %v3327
    %v3514 = vpack.c.b16 %v3332, %v3330
    %v3515 = vpack.c.b16 %v3333, %v3331
    %v3516 = vpack.c.b16 %v3336, %v3334
    %v3517 = vpack.c.b16 %v3337, %v3335
    %v3518 = vpack.c.b16 %v3340, %v3338
    %v3519 = vpack.c.b16 %v3341, %v3339
    %v3520 = vpack.c.b16 %v3344, %v3342
    %v3521 = vpack.c.b16 %v3345, %v3343
    %v3522 = vpack.c.b16 %v3348, %v3346
    %v3523 = vpack.c.b16 %v3349, %v3347
    %v3524 = vpack.c.b16 %v3352, %v3350
    %v3525 = vpack.c.b16 %v3353, %v3351
    %v3526 = vpack.c.b16 %v3356, %v3354
    %v3527 = vpack.c.b16 %v3357, %v3355
    %v3528 = vpack.c.b16 %v3360, %v3358
    %v3529 = vpack.c.b16 %v3361, %v3359
    %v3530 = vpack.c.b16 %v3364, %v3362
    %v3531 = vpack.c.b16 %v3365, %v3363
    %v3532 = vpack.c.b16 %v3368, %v3366
    %v3533 = vpack.c.b16 %v3369, %v3367
    %v3534 = vpack.c.b16 %v3372, %v3370
    %v3535 = vpack.c.b16 %v3373, %v3371
    %v3536 = vpack.c.b16 %v3376, %v3374
    %v3537 = vpack.c.b16 %v3377, %v3375
    %v3538 = vpack.c.b16 %v3380, %v3378
    %v3539 = vpack.c.b16 %v3381, %v3379
    %v3540 = vpack.c.b16 %v3384, %v3382
    %v3541 = vpack.c.b16 %v3385, %v3383
    %v3542 = vpack.c.b16 %v3388, %v3386
    %v3543 = vpack.c.b16 %v3389, %v3387
    %v3544 = vpack.c.b16 %v3392, %v3390
    %v3545 = vpack.c.b16 %v3393, %v3391
    %v3546 = vpack.c.b16 %v3396, %v3394
    %v3547 = vpack.c.b16 %v3397, %v3395
    %v3548 = vpack.c.b16 %v3400, %v3398
    %v3549 = vpack.c.b16 %v3401, %v3399
    %v3550 = vpack.c.b16 %v3404, %v3402
    %v3551 = vpack.c.b16 %v3405, %v3403
    %v3552 = vpack.c.b16 %v3408, %v3406
    %v3553 = vpack.c.b16 %v3409, %v3407
    %v3554 = vpack.c.b16 %v3412, %v3410
    %v3555 = vpack.c.b16 %v3413, %v3411
    %v3556 = vpack.c.b16 %v3416, %v3414
    %v3557 = vpack.c.b16 %v3417, %v3415
    %v3558 = vpack.c.b16 %v3420, %v3418
    %v3559 = vpack.c.b16 %v3421, %v3419
    %v3560 = vpack.c.b16 %v3424, %v3422
    %v3561 = vpack.c.b16 %v3425, %v3423
    %v3562 = vpack.c.b16 %v3428, %v3426
    %v3563 = vpack.c.b16 %v3429, %v3427
    %v3564 = vpack.c.b16 %v3432, %v3430
    %v3565 = vpack.c.b16 %v3433, %v3431
    %v3566 = vpack.c.b16 %v3436, %v3434
    %v3567 = vpack.c.b16 %v3437, %v3435
    %v3568 = vpack.c.b16 %v3440, %v3438
    %v3569 = vpack.c.b16 %v3441, %v3439
    %v3570 = vpack.c.b16 %v3444, %v3442
    %v3571 = vpack.c.b16 %v3445, %v3443
    %v3572 = vpack.c.b16 %v3448, %v3446
    %v3573 = vpack.c.b16 %v3449, %v3447
    %v3574 = vpack.c.b16 %v3452, %v3450
    %v3575 = vpack.c.b16 %v3453, %v3451
    %v3576 = vpack.c.b16 %v3456, %v3454
    %v3577 = vpack.c.b16 %v3457, %v3455
    %v3578 = vpack.c.b16 %v3460, %v3458
    %v3579 = vpack.c.b16 %v3461, %v3459
    %v3580 = vpack.c.b16 %v3464, %v3462
    %v3581 = vpack.c.b16 %v3465, %v3463
    %v3582 = vpack.c.b16 %v3468, %v3466
    %v3583 = vpack.c.b16 %v3469, %v3467
    %v3584 = vpack.c.b16 %v3470, %v3470
    %v3585 = vpack.c.b16 %v3471, %v3471
    %v3699 = vsel %vm1960, %v3110, 0
    %v3702 = vsel %vm1960, %v3118, 0
    %v3705 = vsel %vm1967, %v3584, 0
    %v3708 = vsel %vm1967, %v3585, 0
    %3710 = vmatprep.subr.bf16.mxu0 %v3473
    %3711 = vmatpush1.bf16.msra.mxu0 %v3472
    %3712 = vmatprep.subr.bf16.mxu0 %v3475
    %3713 = vmatpush1.bf16.msra.mxu0 %v3474
    %3714 = vmatprep.subr.bf16.mxu0 %v3477
    %3715 = vmatpush1.bf16.msra.mxu0 %v3476
    %3716 = vmatprep.subr.bf16.mxu0 %v3479
    %3717 = vmatpush1.bf16.msra.mxu0 %v3478
    %3718 = vmatprep.subr.bf16.mxu0 %v3481
    %3719 = vmatpush1.bf16.msra.mxu0 %v3480
    %3720 = vmatprep.subr.bf16.mxu0 %v3483
    %3721 = vmatpush1.bf16.msra.mxu0 %v3482
    %3722 = vmatprep.subr.bf16.mxu0 %v3485
    %3723 = vmatpush1.bf16.msra.mxu0 %v3484
    %3724 = vmatprep.subr.bf16.mxu0 %v3487
    %3725 = vmatpush1.bf16.msra.mxu0 %v3486
    %3726 = vmatprep.subr.bf16.mxu0 %v3489
    %3727 = vmatpush1.bf16.msra.mxu0 %v3488
    %3728 = vmatprep.subr.bf16.mxu0 %v3491
    %3729 = vmatpush1.bf16.msra.mxu0 %v3490
    %3730 = vmatprep.subr.bf16.mxu0 %v3493
    %3731 = vmatpush1.bf16.msra.mxu0 %v3492
    %3732 = vmatprep.subr.bf16.mxu0 %v3495
    %3733 = vmatpush1.bf16.msra.mxu0 %v3494
    %3734 = vmatprep.subr.bf16.mxu0 %v3497
    %3735 = vmatpush1.bf16.msra.mxu0 %v3496
    %3736 = vmatprep.subr.bf16.mxu0 %v3499
    %3737 = vmatpush1.bf16.msra.mxu0 %v3498
    %3738 = vmatprep.subr.bf16.mxu0 %v3501
    %3739 = vmatpush1.bf16.msra.mxu0 %v3500
    %3740 = vmatprep.subr.bf16.mxu0 %v3503
    %3741 = vmatpush1.bf16.msra.mxu0 %v3502
    %3742 = vmatprep.mubr.bf16.mxu0 %v3104
    %3743 = vmatmul.mubr.bf16.gmra.mrb[0].mxu0 %v3103
    %v3744 = vpop.f32.mrb[0].mxu0
    %v3745 = vadd.f32 0.0, %v3744
    %v3746 = vpop.f32.mrb[0].mxu0
    %v3747 = vadd.f32 0.0, %v3746
    %v3748 = vpop.f32.mrb[0].mxu0
    %v3749 = vadd.f32 0.0, %v3748
    %v3750 = vpop.f32.mrb[0].mxu0
    %v3751 = vadd.f32 0.0, %v3750
    %3752 = vmatprep.mubr.bf16.mxu0 %v3112
    %3753 = vmatmul.mubr.bf16.gmra.mrb[0].mxu0 %v3111
    %v3754 = vpop.f32.mrb[0].mxu0
    %v3755 = vpop.f32.mrb[0].mxu0
    %v3756 = vpop.f32.mrb[0].mxu0
    %v3757 = vpop.f32.mrb[0].mxu0
    %3758 = vdwg.mxu0
    %3759 = vmatprep.subr.bf16.mxu0 %v3505
    %3760 = vmatpush1.bf16.msra.mxu0 %v3504
    %3761 = vmatprep.subr.bf16.mxu0 %v3507
    %3762 = vmatpush1.bf16.msra.mxu0 %v3506
    %3763 = vmatprep.subr.bf16.mxu0 %v3509
    %3764 = vmatpush1.bf16.msra.mxu0 %v3508
    %3765 = vmatprep.subr.bf16.mxu0 %v3511
    %3766 = vmatpush1.bf16.msra.mxu0 %v3510
    %3767 = vmatprep.subr.bf16.mxu0 %v3513
    %3768 = vmatpush1.bf16.msra.mxu0 %v3512
    %3769 = vmatprep.subr.bf16.mxu0 %v3515
    %3770 = vmatpush1.bf16.msra.mxu0 %v3514
    %3771 = vmatprep.subr.bf16.mxu0 %v3517
    %3772 = vmatpush1.bf16.msra.mxu0 %v3516
    %3773 = vmatprep.subr.bf16.mxu0 %v3519
    %3774 = vmatpush1.bf16.msra.mxu0 %v3518
    %3775 = vmatprep.subr.bf16.mxu0 %v3521
    %3776 = vmatpush1.bf16.msra.mxu0 %v3520
    %3777 = vmatprep.subr.bf16.mxu0 %v3523
    %3778 = vmatpush1.bf16.msra.mxu0 %v3522
    %3779 = vmatprep.subr.bf16.mxu0 %v3525
    %3780 = vmatpush1.bf16.msra.mxu0 %v3524
    %3781 = vmatprep.subr.bf16.mxu0 %v3527
    %3782 = vmatpush1.bf16.msra.mxu0 %v3526
    %3783 = vmatprep.subr.bf16.mxu0 %v3529
    %3784 = vmatpush1.bf16.msra.mxu0 %v3528
    %3785 = vmatprep.subr.bf16.mxu0 %v3531
    %3786 = vmatpush1.bf16.msra.mxu0 %v3530
    %3787 = vmatprep.subr.bf16.mxu0 %v3533
    %3788 = vmatpush1.bf16.msra.mxu0 %v3532
    %3789 = vmatprep.subr.bf16.mxu0 %v3535
    %3790 = vmatpush1.bf16.msra.mxu0 %v3534
    %3791 = vmatprep.mubr.bf16.mxu0 %v3106
    %3792 = vmatmul.mubr.bf16.gmra.mrb[0].mxu0 %v3105
    %v3793 = vpop.f32.mrb[0].mxu0
    %v3794 = vadd.f32 %v3745, %v3793
    %v3795 = vpop.f32.mrb[0].mxu0
    %v3796 = vadd.f32 %v3747, %v3795
    %v3797 = vpop.f32.mrb[0].mxu0
    %v3798 = vadd.f32 %v3749, %v3797
    %v3799 = vpop.f32.mrb[0].mxu0
    %v3800 = vadd.f32 %v3751, %v3799
    %3801 = vmatprep.mubr.bf16.mxu0 %v3114
    %3802 = vmatmul.mubr.bf16.gmra.mrb[0].mxu0 %v3113
    %v3803 = vpop.f32.mrb[0].mxu0
    %v3804 = vpop.f32.mrb[0].mxu0
    %v3805 = vpop.f32.mrb[0].mxu0
    %v3806 = vpop.f32.mrb[0].mxu0
    %3807 = vdwg.mxu0
    %3808 = vmatprep.subr.bf16.mxu0 %v3537
    %3809 = vmatpush1.bf16.msra.mxu0 %v3536
    %3810 = vmatprep.subr.bf16.mxu0 %v3539
    %3811 = vmatpush1.bf16.msra.mxu0 %v3538
    %3812 = vmatprep.subr.bf16.mxu0 %v3541
    %3813 = vmatpush1.bf16.msra.mxu0 %v3540
    %3814 = vmatprep.subr.bf16.mxu0 %v3543
    %3815 = vmatpush1.bf16.msra.mxu0 %v3542
    %3816 = vmatprep.subr.bf16.mxu0 %v3545
    %3817 = vmatpush1.bf16.msra.mxu0 %v3544
    %3818 = vmatprep.subr.bf16.mxu0 %v3547
    %3819 = vmatpush1.bf16.msra.mxu0 %v3546
    %3820 = vmatprep.subr.bf16.mxu0 %v3549
    %3821 = vmatpush1.bf16.msra.mxu0 %v3548
    %3822 = vmatprep.subr.bf16.mxu0 %v3551
    %3823 = vmatpush1.bf16.msra.mxu0 %v3550
    %3824 = vmatprep.subr.bf16.mxu0 %v3553
    %3825 = vmatpush1.bf16.msra.mxu0 %v3552
    %3826 = vmatprep.subr.bf16.mxu0 %v3555
    %3827 = vmatpush1.bf16.msra.mxu0 %v3554
    %3828 = vmatprep.subr.bf16.mxu0 %v3557
    %3829 = vmatpush1.bf16.msra.mxu0 %v3556
    %3830 = vmatprep.subr.bf16.mxu0 %v3559
    %3831 = vmatpush1.bf16.msra.mxu0 %v3558
    %3832 = vmatprep.subr.bf16.mxu0 %v3561
    %3833 = vmatpush1.bf16.msra.mxu0 %v3560
    %3834 = vmatprep.subr.bf16.mxu0 %v3563
    %3835 = vmatpush1.bf16.msra.mxu0 %v3562
    %3836 = vmatprep.subr.bf16.mxu0 %v3565
    %3837 = vmatpush1.bf16.msra.mxu0 %v3564
    %3838 = vmatprep.subr.bf16.mxu0 %v3567
    %3839 = vmatpush1.bf16.msra.mxu0 %v3566
    %3840 = vmatprep.mubr.bf16.mxu0 %v3108
    %3841 = vmatmul.mubr.bf16.gmra.mrb[0].mxu0 %v3107
    %v3842 = vpop.f32.mrb[0].mxu0
    %v3843 = vadd.f32 %v3794, %v3842
    %v3844 = vpop.f32.mrb[0].mxu0
    %v3845 = vadd.f32 %v3796, %v3844
    %v3846 = vpop.f32.mrb[0].mxu0
    %v3847 = vadd.f32 %v3798, %v3846
    %v3848 = vpop.f32.mrb[0].mxu0
    %v3849 = vadd.f32 %v3800, %v3848
    %3850 = vmatprep.mubr.bf16.mxu0 %v3116
    %3851 = vmatmul.mubr.bf16.gmra.mrb[0].mxu0 %v3115
    %v3852 = vpop.f32.mrb[0].mxu0
    %v3853 = vpop.f32.mrb[0].mxu0
    %v3854 = vpop.f32.mrb[0].mxu0
    %v3855 = vpop.f32.mrb[0].mxu0
    %3856 = vdwg.mxu0
    %3857 = vmatprep.subr.bf16.mxu0 %v3569
    %3858 = vmatpush1.bf16.msra.mxu0 %v3568
    %3859 = vmatprep.subr.bf16.mxu0 %v3571
    %3860 = vmatpush1.bf16.msra.mxu0 %v3570
    %3861 = vmatprep.subr.bf16.mxu0 %v3573
    %3862 = vmatpush1.bf16.msra.mxu0 %v3572
    %3863 = vmatprep.subr.bf16.mxu0 %v3575
    %3864 = vmatpush1.bf16.msra.mxu0 %v3574
    %3865 = vmatprep.subr.bf16.mxu0 %v3577
    %3866 = vmatpush1.bf16.msra.mxu0 %v3576
    %3867 = vmatprep.subr.bf16.mxu0 %v3579
    %3868 = vmatpush1.bf16.msra.mxu0 %v3578
    %3869 = vmatprep.subr.bf16.mxu0 %v3581
    %3870 = vmatpush1.bf16.msra.mxu0 %v3580
    %3871 = vmatprep.subr.bf16.mxu0 %v3583
    %3872 = vmatpush1.bf16.msra.mxu0 %v3582
    %3873 = vmatprep.subr.bf16.mxu0 %v3708
    %3874 = vmatpush1.bf16.msra.mxu0 %v3705
    %3875 = vmatprep.subr.bf16.mxu0 0
    %3876 = vmatpush1.bf16.msra.mxu0 0
    %3877 = vmatprep.subr.bf16.mxu0 0
    %3878 = vmatpush1.bf16.msra.mxu0 0
    %3879 = vmatprep.subr.bf16.mxu0 0
    %3880 = vmatpush1.bf16.msra.mxu0 0
    %3881 = vmatprep.subr.bf16.mxu0 0
    %3882 = vmatpush1.bf16.msra.mxu0 0
    %3883 = vmatprep.subr.bf16.mxu0 0
    %3884 = vmatpush1.bf16.msra.mxu0 0
    %3885 = vmatprep.subr.bf16.mxu0 0
    %3886 = vmatpush1.bf16.msra.mxu0 0
    %3887 = vmatprep.subr.bf16.mxu0 0
    %3888 = vmatpush1.bf16.msra.mxu0 0
    %3889 = vmatprep.mubr.bf16.mxu0 %v3699
    %3890 = vmatmul.mubr.bf16.gmra.mrb[0].mxu0 %v3109
    %v3891 = vpop.f32.mrb[0].mxu0
    %v3892 = vadd.f32 %v3843, %v3891
    %v3893 = vpop.f32.mrb[0].mxu0
    %v3894 = vadd.f32 %v3845, %v3893
    %v3895 = vpop.f32.mrb[0].mxu0
    %v3896 = vadd.f32 %v3847, %v3895
    %v3897 = vpop.f32.mrb[0].mxu0
    %v3898 = vadd.f32 %v3849, %v3897
    %3899 = vmatprep.mubr.bf16.mxu0 %v3702
    %3900 = vmatmul.mubr.bf16.gmra.mrb[0].mxu0 %v3117
    %v3901 = vpop.f32.mrb[0].mxu0
    %v3902 = vpop.f32.mrb[0].mxu0
    %v3903 = vpop.f32.mrb[0].mxu0
    %v3904 = vpop.f32.mrb[0].mxu0
    %3905 = vdwg.mxu0
    %v3906 = vadd.f32 %v2959, %v3892
    %v3907 = vadd.f32 %v2961, %v3894
    %v3908 = vadd.f32 %v2963, %v3896
    %v3909 = vadd.f32 %v2965, %v3898
    %v3918 = vunpack.c.l.b16 %v1058
    %v3919 = vunpack.c.l.b16 %v1059
    %v3920 = vunpack.c.l.b16 %v1060
    %v3921 = vunpack.c.l.b16 %v1061
    %v3922 = vunpack.c.l.b16 %v1062
    %v3923 = vunpack.c.l.b16 %v1063
    %v3924 = vunpack.c.l.b16 %v1064
    %v3925 = vunpack.c.l.b16 %v1065
    %s3926 = scalar_lea.vmem [#allocation7], 2712
    %v3927 = vld [vmem:[%s3926] sm:$0xff]
    %v3928 = vld [vmem:[%s3926 + $0x8] sm:$0xff]
    %v3929 = vld [vmem:[%s3926 + $0x10] sm:$0xff]
    %v3930 = vld [vmem:[%s3926 + $0x18] sm:$0xff]
    %v3931 = vld [vmem:[%s3926 + $0x20] sm:$0xff]
    %v3932 = vld [vmem:[%s3926 + $0x28] sm:$0xff]
    %v3933 = vld [vmem:[%s3926 + $0x30] sm:$0xff]
    %v3934 = vld [vmem:[%s3926 + $0x38] sm:$0xff]
    %v3935 = vld [vmem:[%s3926 + $0x40] sm:$0xff]
    %v3936 = vld [vmem:[%s3926 + $0x48] sm:$0xff]
    %v3937 = vld [vmem:[%s3926 + $0x50] sm:$0xff]
    %v3938 = vld [vmem:[%s3926 + $0x58] sm:$0xff]
    %v3939 = vld [vmem:[%s3926 + $0x60] sm:$0xff]
    %v3940 = vld [vmem:[%s3926 + $0x68] sm:$0xff]
    %v3941 = vld [vmem:[%s3926 + $0x70] sm:$0xff]
    %v3942 = vld [vmem:[%s3926 + $0x78] sm:$0xff]
    %v3943 = vld [vmem:[%s3926 + $0x80] sm:$0xff]
    %v3944 = vld [vmem:[%s3926 + $0x88] sm:$0xff]
    %v3945 = vld [vmem:[%s3926 + $0x90] sm:$0xff]
    %v3946 = vld [vmem:[%s3926 + $0x98] sm:$0xff]
    %v3947 = vld [vmem:[%s3926 + $0xa0] sm:$0xff]
    %v3948 = vld [vmem:[%s3926 + $0xa8] sm:$0xff]
    %v3949 = vld [vmem:[%s3926 + $0xb0] sm:$0xff]
    %v3950 = vld [vmem:[%s3926 + $0xb8] sm:$0xff]
    %v3951 = vld [vmem:[%s3926 + $0xc0] sm:$0xff]
    %v3952 = vld [vmem:[%s3926 + $0xc8] sm:$0xff]
    %v3953 = vld [vmem:[%s3926 + $0xd0] sm:$0xff]
    %v3954 = vld [vmem:[%s3926 + $0xd8] sm:$0xff]
    %v3955 = vld [vmem:[%s3926 + $0xe0] sm:$0xff]
    %v3956 = vld [vmem:[%s3926 + $0xe8] sm:$0xff]
    %v3957 = vld [vmem:[%s3926 + $0xf0] sm:$0xff]
    %v3958 = vld [vmem:[%s3926 + $0xf8] sm:$0xff]
    %v3959 = vld [vmem:[%s3926 + $0x100] sm:$0xff]
    %v3960 = vld [vmem:[%s3926 + $0x108] sm:$0xff]
    %v3961 = vld [vmem:[%s3926 + $0x110] sm:$0xff]
    %v3962 = vld [vmem:[%s3926 + $0x118] sm:$0xff]
    %v3963 = vld [vmem:[%s3926 + $0x120] sm:$0xff]
    %v3964 = vld [vmem:[%s3926 + $0x128] sm:$0xff]
    %v3965 = vld [vmem:[%s3926 + $0x130] sm:$0xff]
    %v3966 = vld [vmem:[%s3926 + $0x138] sm:$0xff]
    %v3967 = vld [vmem:[%s3926 + $0x140] sm:$0xff]
    %v3968 = vld [vmem:[%s3926 + $0x148] sm:$0xff]
    %v3969 = vld [vmem:[%s3926 + $0x150] sm:$0xff]
    %v3970 = vld [vmem:[%s3926 + $0x158] sm:$0xff]
    %v3971 = vld [vmem:[%s3926 + $0x160] sm:$0xff]
    %v3972 = vld [vmem:[%s3926 + $0x168] sm:$0xff]
    %v3973 = vld [vmem:[%s3926 + $0x170] sm:$0xff]
    %v3974 = vld [vmem:[%s3926 + $0x178] sm:$0xff]
    %v3975 = vld [vmem:[%s3926 + $0x180] sm:$0xff]
    %v3976 = vld [vmem:[%s3926 + $0x188] sm:$0xff]
    %v3977 = vld [vmem:[%s3926 + $0x190] sm:$0xff]
    %v3978 = vld [vmem:[%s3926 + $0x198] sm:$0xff]
    %v3979 = vld [vmem:[%s3926 + $0x1a0] sm:$0xff]
    %v3980 = vld [vmem:[%s3926 + $0x1a8] sm:$0xff]
    %v3981 = vld [vmem:[%s3926 + $0x1b0] sm:$0xff]
    %v3982 = vld [vmem:[%s3926 + $0x1b8] sm:$0xff]
    %v3983 = vld [vmem:[%s3926 + $0x1c0] sm:$0xff]
    %v3984 = vld [vmem:[%s3926 + $0x1c8] sm:$0xff]
    %v3985 = vld [vmem:[%s3926 + $0x1d0] sm:$0xff]
    %v3986 = vld [vmem:[%s3926 + $0x1d8] sm:$0xff]
    %v3987 = vld [vmem:[%s3926 + $0x1e0] sm:$0xff]
    %v3988 = vld [vmem:[%s3926 + $0x1e8] sm:$0xff]
    %v3989 = vld [vmem:[%s3926 + $0x1f0] sm:$0xff]
    %v3990 = vld [vmem:[%s3926 + $0x1f8] sm:$0xff]
    %v3991 = vld [vmem:[%s3926 + $0x200] sm:$0xff]
    %v3992 = vld [vmem:[%s3926 + $0x208] sm:$0xff]
    %v3993 = vld [vmem:[%s3926 + $0x210] sm:$0xff]
    %v3994 = vld [vmem:[%s3926 + $0x218] sm:$0xff]
    %v3995 = vld [vmem:[%s3926 + $0x220] sm:$0xff]
    %v3996 = vld [vmem:[%s3926 + $0x228] sm:$0xff]
    %v3997 = vld [vmem:[%s3926 + $0x230] sm:$0xff]
    %v3998 = vld [vmem:[%s3926 + $0x238] sm:$0xff]
    %v3999 = vld [vmem:[%s3926 + $0x240] sm:$0xff]
    %v4000 = vld [vmem:[%s3926 + $0x248] sm:$0xff]
    %v4001 = vld [vmem:[%s3926 + $0x250] sm:$0xff]
    %v4002 = vld [vmem:[%s3926 + $0x258] sm:$0xff]
    %v4003 = vld [vmem:[%s3926 + $0x260] sm:$0xff]
    %v4004 = vld [vmem:[%s3926 + $0x268] sm:$0xff]
    %v4005 = vld [vmem:[%s3926 + $0x270] sm:$0xff]
    %v4006 = vld [vmem:[%s3926 + $0x278] sm:$0xff]
    %v4007 = vld [vmem:[%s3926 + $0x280] sm:$0xff]
    %v4008 = vld [vmem:[%s3926 + $0x288] sm:$0xff]
    %v4009 = vld [vmem:[%s3926 + $0x290] sm:$0xff]
    %v4010 = vld [vmem:[%s3926 + $0x298] sm:$0xff]
    %v4011 = vld [vmem:[%s3926 + $0x2a0] sm:$0xff]
    %v4012 = vld [vmem:[%s3926 + $0x2a8] sm:$0xff]
    %v4013 = vld [vmem:[%s3926 + $0x2b0] sm:$0xff]
    %v4014 = vld [vmem:[%s3926 + $0x2b8] sm:$0xff]
    %v4015 = vld [vmem:[%s3926 + $0x2c0] sm:$0xff]
    %v4016 = vld [vmem:[%s3926 + $0x2c8] sm:$0xff]
    %v4017 = vld [vmem:[%s3926 + $0x2d0] sm:$0xff]
    %v4018 = vld [vmem:[%s3926 + $0x2d8] sm:$0xff]
    %v4019 = vld [vmem:[%s3926 + $0x2e0] sm:$0xff]
    %v4020 = vld [vmem:[%s3926 + $0x2e8] sm:$0xff]
    %v4021 = vld [vmem:[%s3926 + $0x2f0] sm:$0xff]
    %v4022 = vld [vmem:[%s3926 + $0x2f8] sm:$0xff]
    %v4023 = vld [vmem:[%s3926 + $0x300] sm:$0xff]
    %v4024 = vld [vmem:[%s3926 + $0x308] sm:$0xff]
    %v4025 = vld [vmem:[%s3926 + $0x310] sm:$0xff]
    %v4026 = vld [vmem:[%s3926 + $0x318] sm:$0xff]
    %v4027 = vld [vmem:[%s3926 + $0x320] sm:$0xff]
    %v4028 = vld [vmem:[%s3926 + $0x328] sm:$0xff]
    %v4029 = vld [vmem:[%s3926 + $0x330] sm:$0xff]
    %v4030 = vld [vmem:[%s3926 + $0x338] sm:$0xff]
    %v4031 = vld [vmem:[%s3926 + $0x340] sm:$0xff]
    %v4032 = vld [vmem:[%s3926 + $0x348] sm:$0xff]
    %v4033 = vld [vmem:[%s3926 + $0x350] sm:$0xff]
    %v4034 = vld [vmem:[%s3926 + $0x358] sm:$0xff]
    %v4035 = vld [vmem:[%s3926 + $0x360] sm:$0xff]
    %v4036 = vld [vmem:[%s3926 + $0x368] sm:$0xff]
    %v4037 = vld [vmem:[%s3926 + $0x370] sm:$0xff]
    %v4038 = vld [vmem:[%s3926 + $0x378] sm:$0xff]
    %v4039 = vld [vmem:[%s3926 + $0x380] sm:$0x33]
    %v4040 = vpack.c.b16 %v2981, %v1243
    %v4041 = vpack.c.b16 %v2982, %v1244
    %v4042 = vpack.c.b16 %v2983, %v1245
    %v4043 = vpack.c.b16 %v2984, %v1246
    %v4044 = vpack.c.b16 %v2985, %v1247
    %v4045 = vpack.c.b16 %v2986, %v1248
    %v4046 = vpack.c.b16 %v2987, %v1249
    %v4047 = vpack.c.b16 %v2988, %v1250
    %v4048 = vpack.c.b16 %v3918, %v3918
    %v4049 = vpack.c.b16 %v3919, %v3919
    %v4050 = vpack.c.b16 %v3920, %v3920
    %v4051 = vpack.c.b16 %v3921, %v3921
    %v4052 = vpack.c.b16 %v3922, %v3922
    %v4053 = vpack.c.b16 %v3923, %v3923
    %v4054 = vpack.c.b16 %v3924, %v3924
    %v4055 = vpack.c.b16 %v3925, %v3925
    %v4183 = vunpack.c.l.b16 %v3927
    %v4184 = vunpack.c.h.b16 %v3927
    %v4185 = vunpack.c.l.b16 %v3928
    %v4186 = vunpack.c.h.b16 %v3928
    %v4187 = vunpack.c.l.b16 %v3929
    %v4188 = vunpack.c.h.b16 %v3929
    %v4189 = vunpack.c.l.b16 %v3930
    %v4190 = vunpack.c.h.b16 %v3930
    %v4191 = vunpack.c.l.b16 %v3931
    %v4192 = vunpack.c.h.b16 %v3931
    %v4193 = vunpack.c.l.b16 %v3932
    %v4194 = vunpack.c.h.b16 %v3932
    %v4195 = vunpack.c.l.b16 %v3933
    %v4196 = vunpack.c.h.b16 %v3933
    %v4197 = vunpack.c.l.b16 %v3934
    %v4198 = vunpack.c.h.b16 %v3934
    %v4199 = vunpack.c.l.b16 %v3935
    %v4200 = vunpack.c.h.b16 %v3935
    %v4201 = vunpack.c.l.b16 %v3936
    %v4202 = vunpack.c.h.b16 %v3936
    %v4203 = vunpack.c.l.b16 %v3937
    %v4204 = vunpack.c.h.b16 %v3937
    %v4205 = vunpack.c.l.b16 %v3938
    %v4206 = vunpack.c.h.b16 %v3938
    %v4207 = vunpack.c.l.b16 %v3939
    %v4208 = vunpack.c.h.b16 %v3939
    %v4209 = vunpack.c.l.b16 %v3940
    %v4210 = vunpack.c.h.b16 %v3940
    %v4211 = vunpack.c.l.b16 %v3941
    %v4212 = vunpack.c.h.b16 %v3941
    %v4213 = vunpack.c.l.b16 %v3942
    %v4214 = vunpack.c.h.b16 %v3942
    %v4215 = vunpack.c.l.b16 %v3943
    %v4216 = vunpack.c.h.b16 %v3943
    %v4217 = vunpack.c.l.b16 %v3944
    %v4218 = vunpack.c.h.b16 %v3944
    %v4219 = vunpack.c.l.b16 %v3945
    %v4220 = vunpack.c.h.b16 %v3945
    %v4221 = vunpack.c.l.b16 %v3946
    %v4222 = vunpack.c.h.b16 %v3946
    %v4223 = vunpack.c.l.b16 %v3947
    %v4224 = vunpack.c.h.b16 %v3947
    %v4225 = vunpack.c.l.b16 %v3948
    %v4226 = vunpack.c.h.b16 %v3948
    %v4227 = vunpack.c.l.b16 %v3949
    %v4228 = vunpack.c.h.b16 %v3949
    %v4229 = vunpack.c.l.b16 %v3950
    %v4230 = vunpack.c.h.b16 %v3950
    %v4231 = vunpack.c.l.b16 %v3951
    %v4232 = vunpack.c.h.b16 %v3951
    %v4233 = vunpack.c.l.b16 %v3952
    %v4234 = vunpack.c.h.b16 %v3952
    %v4235 = vunpack.c.l.b16 %v3953
    %v4236 = vunpack.c.h.b16 %v3953
    %v4237 = vunpack.c.l.b16 %v3954
    %v4238 = vunpack.c.h.b16 %v3954
    %v4239 = vunpack.c.l.b16 %v3955
    %v4240 = vunpack.c.h.b16 %v3955
    %v4241 = vunpack.c.l.b16 %v3956
    %v4242 = vunpack.c.h.b16 %v3956
    %v4243 = vunpack.c.l.b16 %v3957
    %v4244 = vunpack.c.h.b16 %v3957
    %v4245 = vunpack.c.l.b16 %v3958
    %v4246 = vunpack.c.h.b16 %v3958
    %v4247 = vunpack.c.l.b16 %v3959
    %v4248 = vunpack.c.h.b16 %v3959
    %v4249 = vunpack.c.l.b16 %v3960
    %v4250 = vunpack.c.h.b16 %v3960
    %v4251 = vunpack.c.l.b16 %v3961
    %v4252 = vunpack.c.h.b16 %v3961
    %v4253 = vunpack.c.l.b16 %v3962
    %v4254 = vunpack.c.h.b16 %v3962
    %v4255 = vunpack.c.l.b16 %v3963
    %v4256 = vunpack.c.h.b16 %v3963
    %v4257 = vunpack.c.l.b16 %v3964
    %v4258 = vunpack.c.h.b16 %v3964
    %v4259 = vunpack.c.l.b16 %v3965
    %v4260 = vunpack.c.h.b16 %v3965
    %v4261 = vunpack.c.l.b16 %v3966
    %v4262 = vunpack.c.h.b16 %v3966
    %v4263 = vunpack.c.l.b16 %v3967
    %v4264 = vunpack.c.h.b16 %v3967
    %v4265 = vunpack.c.l.b16 %v3968
    %v4266 = vunpack.c.h.b16 %v3968
    %v4267 = vunpack.c.l.b16 %v3969
    %v4268 = vunpack.c.h.b16 %v3969
    %v4269 = vunpack.c.l.b16 %v3970
    %v4270 = vunpack.c.h.b16 %v3970
    %v4271 = vunpack.c.l.b16 %v3971
    %v4272 = vunpack.c.h.b16 %v3971
    %v4273 = vunpack.c.l.b16 %v3972
    %v4274 = vunpack.c.h.b16 %v3972
    %v4275 = vunpack.c.l.b16 %v3973
    %v4276 = vunpack.c.h.b16 %v3973
    %v4277 = vunpack.c.l.b16 %v3974
    %v4278 = vunpack.c.h.b16 %v3974
    %v4279 = vunpack.c.l.b16 %v3975
    %v4280 = vunpack.c.h.b16 %v3975
    %v4281 = vunpack.c.l.b16 %v3976
    %v4282 = vunpack.c.h.b16 %v3976
    %v4283 = vunpack.c.l.b16 %v3977
    %v4284 = vunpack.c.h.b16 %v3977
    %v4285 = vunpack.c.l.b16 %v3978
    %v4286 = vunpack.c.h.b16 %v3978
    %v4287 = vunpack.c.l.b16 %v3979
    %v4288 = vunpack.c.h.b16 %v3979
    %v4289 = vunpack.c.l.b16 %v3980
    %v4290 = vunpack.c.h.b16 %v3980
    %v4291 = vunpack.c.l.b16 %v3981
    %v4292 = vunpack.c.h.b16 %v3981
    %v4293 = vunpack.c.l.b16 %v3982
    %v4294 = vunpack.c.h.b16 %v3982
    %v4295 = vunpack.c.l.b16 %v3983
    %v4296 = vunpack.c.h.b16 %v3983
    %v4297 = vunpack.c.l.b16 %v3984
    %v4298 = vunpack.c.h.b16 %v3984
    %v4299 = vunpack.c.l.b16 %v3985
    %v4300 = vunpack.c.h.b16 %v3985
    %v4301 = vunpack.c.l.b16 %v3986
    %v4302 = vunpack.c.h.b16 %v3986
    %v4303 = vunpack.c.l.b16 %v3987
    %v4304 = vunpack.c.h.b16 %v3987
    %v4305 = vunpack.c.l.b16 %v3988
    %v4306 = vunpack.c.h.b16 %v3988
    %v4307 = vunpack.c.l.b16 %v3989
    %v4308 = vunpack.c.h.b16 %v3989
    %v4309 = vunpack.c.l.b16 %v3990
    %v4310 = vunpack.c.h.b16 %v3990
    %v4311 = vunpack.c.l.b16 %v3991
    %v4312 = vunpack.c.h.b16 %v3991
    %v4313 = vunpack.c.l.b16 %v3992
    %v4314 = vunpack.c.h.b16 %v3992
    %v4315 = vunpack.c.l.b16 %v3993
    %v4316 = vunpack.c.h.b16 %v3993
    %v4317 = vunpack.c.l.b16 %v3994
    %v4318 = vunpack.c.h.b16 %v3994
    %v4319 = vunpack.c.l.b16 %v3995
    %v4320 = vunpack.c.h.b16 %v3995
    %v4321 = vunpack.c.l.b16 %v3996
    %v4322 = vunpack.c.h.b16 %v3996
    %v4323 = vunpack.c.l.b16 %v3997
    %v4324 = vunpack.c.h.b16 %v3997
    %v4325 = vunpack.c.l.b16 %v3998
    %v4326 = vunpack.c.h.b16 %v3998
    %v4327 = vunpack.c.l.b16 %v3999
    %v4328 = vunpack.c.h.b16 %v3999
    %v4329 = vunpack.c.l.b16 %v4000
    %v4330 = vunpack.c.h.b16 %v4000
    %v4331 = vunpack.c.l.b16 %v4001
    %v4332 = vunpack.c.h.b16 %v4001
    %v4333 = vunpack.c.l.b16 %v4002
    %v4334 = vunpack.c.h.b16 %v4002
    %v4335 = vunpack.c.l.b16 %v4003
    %v4336 = vunpack.c.h.b16 %v4003
    %v4337 = vunpack.c.l.b16 %v4004
    %v4338 = vunpack.c.h.b16 %v4004
    %v4339 = vunpack.c.l.b16 %v4005
    %v4340 = vunpack.c.h.b16 %v4005
    %v4341 = vunpack.c.l.b16 %v4006
    %v4342 = vunpack.c.h.b16 %v4006
    %v4343 = vunpack.c.l.b16 %v4007
    %v4344 = vunpack.c.h.b16 %v4007
    %v4345 = vunpack.c.l.b16 %v4008
    %v4346 = vunpack.c.h.b16 %v4008
    %v4347 = vunpack.c.l.b16 %v4009
    %v4348 = vunpack.c.h.b16 %v4009
    %v4349 = vunpack.c.l.b16 %v4010
    %v4350 = vunpack.c.h.b16 %v4010
    %v4351 = vunpack.c.l.b16 %v4011
    %v4352 = vunpack.c.h.b16 %v4011
    %v4353 = vunpack.c.l.b16 %v4012
    %v4354 = vunpack.c.h.b16 %v4012
    %v4355 = vunpack.c.l.b16 %v4013
    %v4356 = vunpack.c.h.b16 %v4013
    %v4357 = vunpack.c.l.b16 %v4014
    %v4358 = vunpack.c.h.b16 %v4014
    %v4359 = vunpack.c.l.b16 %v4015
    %v4360 = vunpack.c.h.b16 %v4015
    %v4361 = vunpack.c.l.b16 %v4016
    %v4362 = vunpack.c.h.b16 %v4016
    %v4363 = vunpack.c.l.b16 %v4017
    %v4364 = vunpack.c.h.b16 %v4017
    %v4365 = vunpack.c.l.b16 %v4018
    %v4366 = vunpack.c.h.b16 %v4018
    %v4367 = vunpack.c.l.b16 %v4019
    %v4368 = vunpack.c.h.b16 %v4019
    %v4369 = vunpack.c.l.b16 %v4020
    %v4370 = vunpack.c.h.b16 %v4020
    %v4371 = vunpack.c.l.b16 %v4021
    %v4372 = vunpack.c.h.b16 %v4021
    %v4373 = vunpack.c.l.b16 %v4022
    %v4374 = vunpack.c.h.b16 %v4022
    %v4375 = vunpack.c.l.b16 %v4023
    %v4376 = vunpack.c.h.b16 %v4023
    %v4377 = vunpack.c.l.b16 %v4024
    %v4378 = vunpack.c.h.b16 %v4024
    %v4379 = vunpack.c.l.b16 %v4025
    %v4380 = vunpack.c.h.b16 %v4025
    %v4381 = vunpack.c.l.b16 %v4026
    %v4382 = vunpack.c.h.b16 %v4026
    %v4383 = vunpack.c.l.b16 %v4027
    %v4384 = vunpack.c.h.b16 %v4027
    %v4385 = vunpack.c.l.b16 %v4028
    %v4386 = vunpack.c.h.b16 %v4028
    %v4387 = vunpack.c.l.b16 %v4029
    %v4388 = vunpack.c.h.b16 %v4029
    %v4389 = vunpack.c.l.b16 %v4030
    %v4390 = vunpack.c.h.b16 %v4030
    %v4391 = vunpack.c.l.b16 %v4031
    %v4392 = vunpack.c.h.b16 %v4031
    %v4393 = vunpack.c.l.b16 %v4032
    %v4394 = vunpack.c.h.b16 %v4032
    %v4395 = vunpack.c.l.b16 %v4033
    %v4396 = vunpack.c.h.b16 %v4033
    %v4397 = vunpack.c.l.b16 %v4034
    %v4398 = vunpack.c.h.b16 %v4034
    %v4399 = vunpack.c.l.b16 %v4035
    %v4400 = vunpack.c.h.b16 %v4035
    %v4401 = vunpack.c.l.b16 %v4036
    %v4402 = vunpack.c.h.b16 %v4036
    %v4403 = vunpack.c.l.b16 %v4037
    %v4404 = vunpack.c.h.b16 %v4037
    %v4405 = vunpack.c.l.b16 %v4038
    %v4406 = vunpack.c.h.b16 %v4038
    %v4407 = vunpack.c.l.b16 %v4039
    %v4408 = vunpack.c.h.b16 %v4039
    %v4409 = vpack.c.b16 %v4185, %v4183
    %v4410 = vpack.c.b16 %v4186, %v4184
    %v4411 = vpack.c.b16 %v4189, %v4187
    %v4412 = vpack.c.b16 %v4190, %v4188
    %v4413 = vpack.c.b16 %v4193, %v4191
    %v4414 = vpack.c.b16 %v4194, %v4192
    %v4415 = vpack.c.b16 %v4197, %v4195
    %v4416 = vpack.c.b16 %v4198, %v4196
    %v4417 = vpack.c.b16 %v4201, %v4199
    %v4418 = vpack.c.b16 %v4202, %v4200
    %v4419 = vpack.c.b16 %v4205, %v4203
    %v4420 = vpack.c.b16 %v4206, %v4204
    %v4421 = vpack.c.b16 %v4209, %v4207
    %v4422 = vpack.c.b16 %v4210, %v4208
    %v4423 = vpack.c.b16 %v4213, %v4211
    %v4424 = vpack.c.b16 %v4214, %v4212
    %v4425 = vpack.c.b16 %v4217, %v4215
    %v4426 = vpack.c.b16 %v4218, %v4216
    %v4427 = vpack.c.b16 %v4221, %v4219
    %v4428 = vpack.c.b16 %v4222, %v4220
    %v4429 = vpack.c.b16 %v4225, %v4223
    %v4430 = vpack.c.b16 %v4226, %v4224
    %v4431 = vpack.c.b16 %v4229, %v4227
    %v4432 = vpack.c.b16 %v4230, %v4228
    %v4433 = vpack.c.b16 %v4233, %v4231
    %v4434 = vpack.c.b16 %v4234, %v4232
    %v4435 = vpack.c.b16 %v4237, %v4235
    %v4436 = vpack.c.b16 %v4238, %v4236
    %v4437 = vpack.c.b16 %v4241, %v4239
    %v4438 = vpack.c.b16 %v4242, %v4240
    %v4439 = vpack.c.b16 %v4245, %v4243
    %v4440 = vpack.c.b16 %v4246, %v4244
    %v4441 = vpack.c.b16 %v4249, %v4247
    %v4442 = vpack.c.b16 %v4250, %v4248
    %v4443 = vpack.c.b16 %v4253, %v4251
    %v4444 = vpack.c.b16 %v4254, %v4252
    %v4445 = vpack.c.b16 %v4257, %v4255
    %v4446 = vpack.c.b16 %v4258, %v4256
    %v4447 = vpack.c.b16 %v4261, %v4259
    %v4448 = vpack.c.b16 %v4262, %v4260
    %v4449 = vpack.c.b16 %v4265, %v4263
    %v4450 = vpack.c.b16 %v4266, %v4264
    %v4451 = vpack.c.b16 %v4269, %v4267
    %v4452 = vpack.c.b16 %v4270, %v4268
    %v4453 = vpack.c.b16 %v4273, %v4271
    %v4454 = vpack.c.b16 %v4274, %v4272
    %v4455 = vpack.c.b16 %v4277, %v4275
    %v4456 = vpack.c.b16 %v4278, %v4276
    %v4457 = vpack.c.b16 %v4281, %v4279
    %v4458 = vpack.c.b16 %v4282, %v4280
    %v4459 = vpack.c.b16 %v4285, %v4283
    %v4460 = vpack.c.b16 %v4286, %v4284
    %v4461 = vpack.c.b16 %v4289, %v4287
    %v4462 = vpack.c.b16 %v4290, %v4288
    %v4463 = vpack.c.b16 %v4293, %v4291
    %v4464 = vpack.c.b16 %v4294, %v4292
    %v4465 = vpack.c.b16 %v4297, %v4295
    %v4466 = vpack.c.b16 %v4298, %v4296
    %v4467 = vpack.c.b16 %v4301, %v4299
    %v4468 = vpack.c.b16 %v4302, %v4300
    %v4469 = vpack.c.b16 %v4305, %v4303
    %v4470 = vpack.c.b16 %v4306, %v4304
    %v4471 = vpack.c.b16 %v4309, %v4307
    %v4472 = vpack.c.b16 %v4310, %v4308
    %v4473 = vpack.c.b16 %v4313, %v4311
    %v4474 = vpack.c.b16 %v4314, %v4312
    %v4475 = vpack.c.b16 %v4317, %v4315
    %v4476 = vpack.c.b16 %v4318, %v4316
    %v4477 = vpack.c.b16 %v4321, %v4319
    %v4478 = vpack.c.b16 %v4322, %v4320
    %v4479 = vpack.c.b16 %v4325, %v4323
    %v4480 = vpack.c.b16 %v4326, %v4324
    %v4481 = vpack.c.b16 %v4329, %v4327
    %v4482 = vpack.c.b16 %v4330, %v4328
    %v4483 = vpack.c.b16 %v4333, %v4331
    %v4484 = vpack.c.b16 %v4334, %v4332
    %v4485 = vpack.c.b16 %v4337, %v4335
    %v4486 = vpack.c.b16 %v4338, %v4336
    %v4487 = vpack.c.b16 %v4341, %v4339
    %v4488 = vpack.c.b16 %v4342, %v4340
    %v4489 = vpack.c.b16 %v4345, %v4343
    %v4490 = vpack.c.b16 %v4346, %v4344
    %v4491 = vpack.c.b16 %v4349, %v4347
    %v4492 = vpack.c.b16 %v4350, %v4348
    %v4493 = vpack.c.b16 %v4353, %v4351
    %v4494 = vpack.c.b16 %v4354, %v4352
    %v4495 = vpack.c.b16 %v4357, %v4355
    %v4496 = vpack.c.b16 %v4358, %v4356
    %v4497 = vpack.c.b16 %v4361, %v4359
    %v4498 = vpack.c.b16 %v4362, %v4360
    %v4499 = vpack.c.b16 %v4365, %v4363
    %v4500 = vpack.c.b16 %v4366, %v4364
    %v4501 = vpack.c.b16 %v4369, %v4367
    %v4502 = vpack.c.b16 %v4370, %v4368
    %v4503 = vpack.c.b16 %v4373, %v4371
    %v4504 = vpack.c.b16 %v4374, %v4372
    %v4505 = vpack.c.b16 %v4377, %v4375
    %v4506 = vpack.c.b16 %v4378, %v4376
    %v4507 = vpack.c.b16 %v4381, %v4379
    %v4508 = vpack.c.b16 %v4382, %v4380
    %v4509 = vpack.c.b16 %v4385, %v4383
    %v4510 = vpack.c.b16 %v4386, %v4384
    %v4511 = vpack.c.b16 %v4389, %v4387
    %v4512 = vpack.c.b16 %v4390, %v4388
    %v4513 = vpack.c.b16 %v4393, %v4391
    %v4514 = vpack.c.b16 %v4394, %v4392
    %v4515 = vpack.c.b16 %v4397, %v4395
    %v4516 = vpack.c.b16 %v4398, %v4396
    %v4517 = vpack.c.b16 %v4401, %v4399
    %v4518 = vpack.c.b16 %v4402, %v4400
    %v4519 = vpack.c.b16 %v4405, %v4403
    %v4520 = vpack.c.b16 %v4406, %v4404
    %v4521 = vpack.c.b16 %v4407, %v4407
    %v4522 = vpack.c.b16 %v4408, %v4408
    %v4636 = vsel %vm1960, %v4047, 0
    %v4639 = vsel %vm1960, %v4055, 0
    %v4642 = vsel %vm1967, %v4521, 0
    %v4645 = vsel %vm1967, %v4522, 0
    %4647 = vmatprep.subr.bf16.mxu0 %v4410
    %4648 = vmatpush1.bf16.msra.mxu0 %v4409
    %4649 = vmatprep.subr.bf16.mxu0 %v4412
    %4650 = vmatpush1.bf16.msra.mxu0 %v4411
    %4651 = vmatprep.subr.bf16.mxu0 %v4414
    %4652 = vmatpush1.bf16.msra.mxu0 %v4413
    %4653 = vmatprep.subr.bf16.mxu0 %v4416
    %4654 = vmatpush1.bf16.msra.mxu0 %v4415
    %4655 = vmatprep.subr.bf16.mxu0 %v4418
    %4656 = vmatpush1.bf16.msra.mxu0 %v4417
    %4657 = vmatprep.subr.bf16.mxu0 %v4420
    %4658 = vmatpush1.bf16.msra.mxu0 %v4419
    %4659 = vmatprep.subr.bf16.mxu0 %v4422
    %4660 = vmatpush1.bf16.msra.mxu0 %v4421
    %4661 = vmatprep.subr.bf16.mxu0 %v4424
    %4662 = vmatpush1.bf16.msra.mxu0 %v4423
    %4663 = vmatprep.subr.bf16.mxu0 %v4426
    %4664 = vmatpush1.bf16.msra.mxu0 %v4425
    %4665 = vmatprep.subr.bf16.mxu0 %v4428
    %4666 = vmatpush1.bf16.msra.mxu0 %v4427
    %4667 = vmatprep.subr.bf16.mxu0 %v4430
    %4668 = vmatpush1.bf16.msra.mxu0 %v4429
    %4669 = vmatprep.subr.bf16.mxu0 %v4432
    %4670 = vmatpush1.bf16.msra.mxu0 %v4431
    %4671 = vmatprep.subr.bf16.mxu0 %v4434
    %4672 = vmatpush1.bf16.msra.mxu0 %v4433
    %4673 = vmatprep.subr.bf16.mxu0 %v4436
    %4674 = vmatpush1.bf16.msra.mxu0 %v4435
    %4675 = vmatprep.subr.bf16.mxu0 %v4438
    %4676 = vmatpush1.bf16.msra.mxu0 %v4437
    %4677 = vmatprep.subr.bf16.mxu0 %v4440
    %4678 = vmatpush1.bf16.msra.mxu0 %v4439
    %4679 = vmatprep.mubr.bf16.mxu0 %v4041
    %4680 = vmatmul.mubr.bf16.gmra.mrb[0].mxu0 %v4040
    %v4681 = vpop.f32.mrb[0].mxu0
    %v4682 = vadd.f32 0.0, %v4681
    %v4683 = vpop.f32.mrb[0].mxu0
    %v4684 = vadd.f32 0.0, %v4683
    %v4685 = vpop.f32.mrb[0].mxu0
    %v4686 = vadd.f32 0.0, %v4685
    %v4687 = vpop.f32.mrb[0].mxu0
    %v4688 = vadd.f32 0.0, %v4687
    %4689 = vmatprep.mubr.bf16.mxu0 %v4049
    %4690 = vmatmul.mubr.bf16.gmra.mrb[0].mxu0 %v4048
    %v4691 = vpop.f32.mrb[0].mxu0
    %v4692 = vpop.f32.mrb[0].mxu0
    %v4693 = vpop.f32.mrb[0].mxu0
    %v4694 = vpop.f32.mrb[0].mxu0
    %4695 = vdwg.mxu0
    %4696 = vmatprep.subr.bf16.mxu0 %v4442
    %4697 = vmatpush1.bf16.msra.mxu0 %v4441
    %4698 = vmatprep.subr.bf16.mxu0 %v4444
    %4699 = vmatpush1.bf16.msra.mxu0 %v4443
    %4700 = vmatprep.subr.bf16.mxu0 %v4446
    %4701 = vmatpush1.bf16.msra.mxu0 %v4445
    %4702 = vmatprep.subr.bf16.mxu0 %v4448
    %4703 = vmatpush1.bf16.msra.mxu0 %v4447
    %4704 = vmatprep.subr.bf16.mxu0 %v4450
    %4705 = vmatpush1.bf16.msra.mxu0 %v4449
    %4706 = vmatprep.subr.bf16.mxu0 %v4452
    %4707 = vmatpush1.bf16.msra.mxu0 %v4451
    %4708 = vmatprep.subr.bf16.mxu0 %v4454
    %4709 = vmatpush1.bf16.msra.mxu0 %v4453
    %4710 = vmatprep.subr.bf16.mxu0 %v4456
    %4711 = vmatpush1.bf16.msra.mxu0 %v4455
    %4712 = vmatprep.subr.bf16.mxu0 %v4458
    %4713 = vmatpush1.bf16.msra.mxu0 %v4457
    %4714 = vmatprep.subr.bf16.mxu0 %v4460
    %4715 = vmatpush1.bf16.msra.mxu0 %v4459
    %4716 = vmatprep.subr.bf16.mxu0 %v4462
    %4717 = vmatpush1.bf16.msra.mxu0 %v4461
    %4718 = vmatprep.subr.bf16.mxu0 %v4464
    %4719 = vmatpush1.bf16.msra.mxu0 %v4463
    %4720 = vmatprep.subr.bf16.mxu0 %v4466
    %4721 = vmatpush1.bf16.msra.mxu0 %v4465
    %4722 = vmatprep.subr.bf16.mxu0 %v4468
    %4723 = vmatpush1.bf16.msra.mxu0 %v4467
    %4724 = vmatprep.subr.bf16.mxu0 %v4470
    %4725 = vmatpush1.bf16.msra.mxu0 %v4469
    %4726 = vmatprep.subr.bf16.mxu0 %v4472
    %4727 = vmatpush1.bf16.msra.mxu0 %v4471
    %4728 = vmatprep.mubr.bf16.mxu0 %v4043
    %4729 = vmatmul.mubr.bf16.gmra.mrb[0].mxu0 %v4042
    %v4730 = vpop.f32.mrb[0].mxu0
    %v4731 = vadd.f32 %v4682, %v4730
    %v4732 = vpop.f32.mrb[0].mxu0
    %v4733 = vadd.f32 %v4684, %v4732
    %v4734 = vpop.f32.mrb[0].mxu0
    %v4735 = vadd.f32 %v4686, %v4734
    %v4736 = vpop.f32.mrb[0].mxu0
    %v4737 = vadd.f32 %v4688, %v4736
    %4738 = vmatprep.mubr.bf16.mxu0 %v4051
    %4739 = vmatmul.mubr.bf16.gmra.mrb[0].mxu0 %v4050
    %v4740 = vpop.f32.mrb[0].mxu0
    %v4741 = vpop.f32.mrb[0].mxu0
    %v4742 = vpop.f32.mrb[0].mxu0
    %v4743 = vpop.f32.mrb[0].mxu0
    %4744 = vdwg.mxu0
    %4745 = vmatprep.subr.bf16.mxu0 %v4474
    %4746 = vmatpush1.bf16.msra.mxu0 %v4473
    %4747 = vmatprep.subr.bf16.mxu0 %v4476
    %4748 = vmatpush1.bf16.msra.mxu0 %v4475
    %4749 = vmatprep.subr.bf16.mxu0 %v4478
    %4750 = vmatpush1.bf16.msra.mxu0 %v4477
    %4751 = vmatprep.subr.bf16.mxu0 %v4480
    %4752 = vmatpush1.bf16.msra.mxu0 %v4479
    %4753 = vmatprep.subr.bf16.mxu0 %v4482
    %4754 = vmatpush1.bf16.msra.mxu0 %v4481
    %4755 = vmatprep.subr.bf16.mxu0 %v4484
    %4756 = vmatpush1.bf16.msra.mxu0 %v4483
    %4757 = vmatprep.subr.bf16.mxu0 %v4486
    %4758 = vmatpush1.bf16.msra.mxu0 %v4485
    %4759 = vmatprep.subr.bf16.mxu0 %v4488
    %4760 = vmatpush1.bf16.msra.mxu0 %v4487
    %4761 = vmatprep.subr.bf16.mxu0 %v4490
    %4762 = vmatpush1.bf16.msra.mxu0 %v4489
    %4763 = vmatprep.subr.bf16.mxu0 %v4492
    %4764 = vmatpush1.bf16.msra.mxu0 %v4491
    %4765 = vmatprep.subr.bf16.mxu0 %v4494
    %4766 = vmatpush1.bf16.msra.mxu0 %v4493
    %4767 = vmatprep.subr.bf16.mxu0 %v4496
    %4768 = vmatpush1.bf16.msra.mxu0 %v4495
    %4769 = vmatprep.subr.bf16.mxu0 %v4498
    %4770 = vmatpush1.bf16.msra.mxu0 %v4497
    %4771 = vmatprep.subr.bf16.mxu0 %v4500
    %4772 = vmatpush1.bf16.msra.mxu0 %v4499
    %4773 = vmatprep.subr.bf16.mxu0 %v4502
    %4774 = vmatpush1.bf16.msra.mxu0 %v4501
    %4775 = vmatprep.subr.bf16.mxu0 %v4504
    %4776 = vmatpush1.bf16.msra.mxu0 %v4503
    %4777 = vmatprep.mubr.bf16.mxu0 %v4045
    %4778 = vmatmul.mubr.bf16.gmra.mrb[0].mxu0 %v4044
    %v4779 = vpop.f32.mrb[0].mxu0
    %v4780 = vadd.f32 %v4731, %v4779
    %v4781 = vpop.f32.mrb[0].mxu0
    %v4782 = vadd.f32 %v4733, %v4781
    %v4783 = vpop.f32.mrb[0].mxu0
    %v4784 = vadd.f32 %v4735, %v4783
    %v4785 = vpop.f32.mrb[0].mxu0
    %v4786 = vadd.f32 %v4737, %v4785
    %4787 = vmatprep.mubr.bf16.mxu0 %v4053
    %4788 = vmatmul.mubr.bf16.gmra.mrb[0].mxu0 %v4052
    %v4789 = vpop.f32.mrb[0].mxu0
    %v4790 = vpop.f32.mrb[0].mxu0
    %v4791 = vpop.f32.mrb[0].mxu0
    %v4792 = vpop.f32.mrb[0].mxu0
    %4793 = vdwg.mxu0
    %4794 = vmatprep.subr.bf16.mxu0 %v4506
    %4795 = vmatpush1.bf16.msra.mxu0 %v4505
    %4796 = vmatprep.subr.bf16.mxu0 %v4508
    %4797 = vmatpush1.bf16.msra.mxu0 %v4507
    %4798 = vmatprep.subr.bf16.mxu0 %v4510
    %4799 = vmatpush1.bf16.msra.mxu0 %v4509
    %4800 = vmatprep.subr.bf16.mxu0 %v4512
    %4801 = vmatpush1.bf16.msra.mxu0 %v4511
    %4802 = vmatprep.subr.bf16.mxu0 %v4514
    %4803 = vmatpush1.bf16.msra.mxu0 %v4513
    %4804 = vmatprep.subr.bf16.mxu0 %v4516
    %4805 = vmatpush1.bf16.msra.mxu0 %v4515
    %4806 = vmatprep.subr.bf16.mxu0 %v4518
    %4807 = vmatpush1.bf16.msra.mxu0 %v4517
    %4808 = vmatprep.subr.bf16.mxu0 %v4520
    %4809 = vmatpush1.bf16.msra.mxu0 %v4519
    %4810 = vmatprep.subr.bf16.mxu0 %v4645
    %4811 = vmatpush1.bf16.msra.mxu0 %v4642
    %4812 = vmatprep.subr.bf16.mxu0 0
    %4813 = vmatpush1.bf16.msra.mxu0 0
    %4814 = vmatprep.subr.bf16.mxu0 0
    %4815 = vmatpush1.bf16.msra.mxu0 0
    %4816 = vmatprep.subr.bf16.mxu0 0
    %4817 = vmatpush1.bf16.msra.mxu0 0
    %4818 = vmatprep.subr.bf16.mxu0 0
    %4819 = vmatpush1.bf16.msra.mxu0 0
    %4820 = vmatprep.subr.bf16.mxu0 0
    %4821 = vmatpush1.bf16.msra.mxu0 0
    %4822 = vmatprep.subr.bf16.mxu0 0
    %4823 = vmatpush1.bf16.msra.mxu0 0
    %4824 = vmatprep.subr.bf16.mxu0 0
    %4825 = vmatpush1.bf16.msra.mxu0 0
    %4826 = vmatprep.mubr.bf16.mxu0 %v4636
    %4827 = vmatmul.mubr.bf16.gmra.mrb[0].mxu0 %v4046
    %v4828 = vpop.f32.mrb[0].mxu0
    %v4829 = vadd.f32 %v4780, %v4828
    %v4830 = vpop.f32.mrb[0].mxu0
    %v4831 = vadd.f32 %v4782, %v4830
    %v4832 = vpop.f32.mrb[0].mxu0
    %v4833 = vadd.f32 %v4784, %v4832
    %v4834 = vpop.f32.mrb[0].mxu0
    %v4835 = vadd.f32 %v4786, %v4834
    %4836 = vmatprep.mubr.bf16.mxu0 %v4639
    %4837 = vmatmul.mubr.bf16.gmra.mrb[0].mxu0 %v4054
    %v4838 = vpop.f32.mrb[0].mxu0
    %v4839 = vpop.f32.mrb[0].mxu0
    %v4840 = vpop.f32.mrb[0].mxu0
    %v4841 = vpop.f32.mrb[0].mxu0
    %4842 = vdwg.mxu0
    %v4843 = vadd.f32 %v3906, %v4829
    %v4844 = vadd.f32 %v3907, %v4831
    %v4845 = vadd.f32 %v3908, %v4833
    %v4846 = vadd.f32 %v3909, %v4835
    %v4855 = vunpack.c.l.b16 %v1066
    %v4856 = vunpack.c.l.b16 %v1067
    %v4857 = vunpack.c.l.b16 %v1068
    %v4858 = vunpack.c.l.b16 %v1069
    %v4859 = vunpack.c.l.b16 %v1070
    %v4860 = vunpack.c.l.b16 %v1071
    %v4861 = vunpack.c.l.b16 %v1072
    %v4862 = vunpack.c.l.b16 %v1073
    %s4863 = scalar_lea.vmem [#allocation7], 3616
    %v4864 = vld [vmem:[%s4863] sm:$0xff]
    %v4865 = vld [vmem:[%s4863 + $0x8] sm:$0xff]
    %v4866 = vld [vmem:[%s4863 + $0x10] sm:$0xff]
    %v4867 = vld [vmem:[%s4863 + $0x18] sm:$0xff]
    %v4868 = vld [vmem:[%s4863 + $0x20] sm:$0xff]
    %v4869 = vld [vmem:[%s4863 + $0x28] sm:$0xff]
    %v4870 = vld [vmem:[%s4863 + $0x30] sm:$0xff]
    %v4871 = vld [vmem:[%s4863 + $0x38] sm:$0xff]
    %v4872 = vld [vmem:[%s4863 + $0x40] sm:$0xff]
    %v4873 = vld [vmem:[%s4863 + $0x48] sm:$0xff]
    %v4874 = vld [vmem:[%s4863 + $0x50] sm:$0xff]
    %v4875 = vld [vmem:[%s4863 + $0x58] sm:$0xff]
    %v4876 = vld [vmem:[%s4863 + $0x60] sm:$0xff]
    %v4877 = vld [vmem:[%s4863 + $0x68] sm:$0xff]
    %v4878 = vld [vmem:[%s4863 + $0x70] sm:$0xff]
    %v4879 = vld [vmem:[%s4863 + $0x78] sm:$0xff]
    %v4880 = vld [vmem:[%s4863 + $0x80] sm:$0xff]
    %v4881 = vld [vmem:[%s4863 + $0x88] sm:$0xff]
    %v4882 = vld [vmem:[%s4863 + $0x90] sm:$0xff]
    %v4883 = vld [vmem:[%s4863 + $0x98] sm:$0xff]
    %v4884 = vld [vmem:[%s4863 + $0xa0] sm:$0xff]
    %v4885 = vld [vmem:[%s4863 + $0xa8] sm:$0xff]
    %v4886 = vld [vmem:[%s4863 + $0xb0] sm:$0xff]
    %v4887 = vld [vmem:[%s4863 + $0xb8] sm:$0xff]
    %v4888 = vld [vmem:[%s4863 + $0xc0] sm:$0xff]
    %v4889 = vld [vmem:[%s4863 + $0xc8] sm:$0xff]
    %v4890 = vld [vmem:[%s4863 + $0xd0] sm:$0xff]
    %v4891 = vld [vmem:[%s4863 + $0xd8] sm:$0xff]
    %v4892 = vld [vmem:[%s4863 + $0xe0] sm:$0xff]
    %v4893 = vld [vmem:[%s4863 + $0xe8] sm:$0xff]
    %v4894 = vld [vmem:[%s4863 + $0xf0] sm:$0xff]
    %v4895 = vld [vmem:[%s4863 + $0xf8] sm:$0xff]
    %v4896 = vld [vmem:[%s4863 + $0x100] sm:$0xff]
    %v4897 = vld [vmem:[%s4863 + $0x108] sm:$0xff]
    %v4898 = vld [vmem:[%s4863 + $0x110] sm:$0xff]
    %v4899 = vld [vmem:[%s4863 + $0x118] sm:$0xff]
    %v4900 = vld [vmem:[%s4863 + $0x120] sm:$0xff]
    %v4901 = vld [vmem:[%s4863 + $0x128] sm:$0xff]
    %v4902 = vld [vmem:[%s4863 + $0x130] sm:$0xff]
    %v4903 = vld [vmem:[%s4863 + $0x138] sm:$0xff]
    %v4904 = vld [vmem:[%s4863 + $0x140] sm:$0xff]
    %v4905 = vld [vmem:[%s4863 + $0x148] sm:$0xff]
    %v4906 = vld [vmem:[%s4863 + $0x150] sm:$0xff]
    %v4907 = vld [vmem:[%s4863 + $0x158] sm:$0xff]
    %v4908 = vld [vmem:[%s4863 + $0x160] sm:$0xff]
    %v4909 = vld [vmem:[%s4863 + $0x168] sm:$0xff]
    %v4910 = vld [vmem:[%s4863 + $0x170] sm:$0xff]
    %v4911 = vld [vmem:[%s4863 + $0x178] sm:$0xff]
    %v4912 = vld [vmem:[%s4863 + $0x180] sm:$0xff]
    %v4913 = vld [vmem:[%s4863 + $0x188] sm:$0xff]
    %v4914 = vld [vmem:[%s4863 + $0x190] sm:$0xff]
    %v4915 = vld [vmem:[%s4863 + $0x198] sm:$0xff]
    %v4916 = vld [vmem:[%s4863 + $0x1a0] sm:$0xff]
    %v4917 = vld [vmem:[%s4863 + $0x1a8] sm:$0xff]
    %v4918 = vld [vmem:[%s4863 + $0x1b0] sm:$0xff]
    %v4919 = vld [vmem:[%s4863 + $0x1b8] sm:$0xff]
    %v4920 = vld [vmem:[%s4863 + $0x1c0] sm:$0xff]
    %v4921 = vld [vmem:[%s4863 + $0x1c8] sm:$0xff]
    %v4922 = vld [vmem:[%s4863 + $0x1d0] sm:$0xff]
    %v4923 = vld [vmem:[%s4863 + $0x1d8] sm:$0xff]
    %v4924 = vld [vmem:[%s4863 + $0x1e0] sm:$0xff]
    %v4925 = vld [vmem:[%s4863 + $0x1e8] sm:$0xff]
    %v4926 = vld [vmem:[%s4863 + $0x1f0] sm:$0xff]
    %v4927 = vld [vmem:[%s4863 + $0x1f8] sm:$0xff]
    %v4928 = vld [vmem:[%s4863 + $0x200] sm:$0xff]
    %v4929 = vld [vmem:[%s4863 + $0x208] sm:$0xff]
    %v4930 = vld [vmem:[%s4863 + $0x210] sm:$0xff]
    %v4931 = vld [vmem:[%s4863 + $0x218] sm:$0xff]
    %v4932 = vld [vmem:[%s4863 + $0x220] sm:$0xff]
    %v4933 = vld [vmem:[%s4863 + $0x228] sm:$0xff]
    %v4934 = vld [vmem:[%s4863 + $0x230] sm:$0xff]
    %v4935 = vld [vmem:[%s4863 + $0x238] sm:$0xff]
    %v4936 = vld [vmem:[%s4863 + $0x240] sm:$0xff]
    %v4937 = vld [vmem:[%s4863 + $0x248] sm:$0xff]
    %v4938 = vld [vmem:[%s4863 + $0x250] sm:$0xff]
    %v4939 = vld [vmem:[%s4863 + $0x258] sm:$0xff]
    %v4940 = vld [vmem:[%s4863 + $0x260] sm:$0xff]
    %v4941 = vld [vmem:[%s4863 + $0x268] sm:$0xff]
    %v4942 = vld [vmem:[%s4863 + $0x270] sm:$0xff]
    %v4943 = vld [vmem:[%s4863 + $0x278] sm:$0xff]
    %v4944 = vld [vmem:[%s4863 + $0x280] sm:$0xff]
    %v4945 = vld [vmem:[%s4863 + $0x288] sm:$0xff]
    %v4946 = vld [vmem:[%s4863 + $0x290] sm:$0xff]
    %v4947 = vld [vmem:[%s4863 + $0x298] sm:$0xff]
    %v4948 = vld [vmem:[%s4863 + $0x2a0] sm:$0xff]
    %v4949 = vld [vmem:[%s4863 + $0x2a8] sm:$0xff]
    %v4950 = vld [vmem:[%s4863 + $0x2b0] sm:$0xff]
    %v4951 = vld [vmem:[%s4863 + $0x2b8] sm:$0xff]
    %v4952 = vld [vmem:[%s4863 + $0x2c0] sm:$0xff]
    %v4953 = vld [vmem:[%s4863 + $0x2c8] sm:$0xff]
    %v4954 = vld [vmem:[%s4863 + $0x2d0] sm:$0xff]
    %v4955 = vld [vmem:[%s4863 + $0x2d8] sm:$0xff]
    %v4956 = vld [vmem:[%s4863 + $0x2e0] sm:$0xff]
    %v4957 = vld [vmem:[%s4863 + $0x2e8] sm:$0xff]
    %v4958 = vld [vmem:[%s4863 + $0x2f0] sm:$0xff]
    %v4959 = vld [vmem:[%s4863 + $0x2f8] sm:$0xff]
    %v4960 = vld [vmem:[%s4863 + $0x300] sm:$0xff]
    %v4961 = vld [vmem:[%s4863 + $0x308] sm:$0xff]
    %v4962 = vld [vmem:[%s4863 + $0x310] sm:$0xff]
    %v4963 = vld [vmem:[%s4863 + $0x318] sm:$0xff]
    %v4964 = vld [vmem:[%s4863 + $0x320] sm:$0xff]
    %v4965 = vld [vmem:[%s4863 + $0x328] sm:$0xff]
    %v4966 = vld [vmem:[%s4863 + $0x330] sm:$0xff]
    %v4967 = vld [vmem:[%s4863 + $0x338] sm:$0xff]
    %v4968 = vld [vmem:[%s4863 + $0x340] sm:$0xff]
    %v4969 = vld [vmem:[%s4863 + $0x348] sm:$0xff]
    %v4970 = vld [vmem:[%s4863 + $0x350] sm:$0xff]
    %v4971 = vld [vmem:[%s4863 + $0x358] sm:$0xff]
    %v4972 = vld [vmem:[%s4863 + $0x360] sm:$0xff]
    %v4973 = vld [vmem:[%s4863 + $0x368] sm:$0xff]
    %v4974 = vld [vmem:[%s4863 + $0x370] sm:$0xff]
    %v4975 = vld [vmem:[%s4863 + $0x378] sm:$0xff]
    %v4976 = vld [vmem:[%s4863 + $0x380] sm:$0x33]
    %v4977 = vpack.c.b16 %v3918, %v2981
    %v4978 = vpack.c.b16 %v3919, %v2982
    %v4979 = vpack.c.b16 %v3920, %v2983
    %v4980 = vpack.c.b16 %v3921, %v2984
    %v4981 = vpack.c.b16 %v3922, %v2985
    %v4982 = vpack.c.b16 %v3923, %v2986
    %v4983 = vpack.c.b16 %v3924, %v2987
    %v4984 = vpack.c.b16 %v3925, %v2988
    %v4985 = vpack.c.b16 %v4855, %v4855
    %v4986 = vpack.c.b16 %v4856, %v4856
    %v4987 = vpack.c.b16 %v4857, %v4857
    %v4988 = vpack.c.b16 %v4858, %v4858
    %v4989 = vpack.c.b16 %v4859, %v4859
    %v4990 = vpack.c.b16 %v4860, %v4860
    %v4991 = vpack.c.b16 %v4861, %v4861
    %v4992 = vpack.c.b16 %v4862, %v4862
    %v5120 = vunpack.c.l.b16 %v4864
    %v5121 = vunpack.c.h.b16 %v4864
    %v5122 = vunpack.c.l.b16 %v4865
    %v5123 = vunpack.c.h.b16 %v4865
    %v5124 = vunpack.c.l.b16 %v4866
    %v5125 = vunpack.c.h.b16 %v4866
    %v5126 = vunpack.c.l.b16 %v4867
    %v5127 = vunpack.c.h.b16 %v4867
    %v5128 = vunpack.c.l.b16 %v4868
    %v5129 = vunpack.c.h.b16 %v4868
    %v5130 = vunpack.c.l.b16 %v4869
    %v5131 = vunpack.c.h.b16 %v4869
    %v5132 = vunpack.c.l.b16 %v4870
    %v5133 = vunpack.c.h.b16 %v4870
    %v5134 = vunpack.c.l.b16 %v4871
    %v5135 = vunpack.c.h.b16 %v4871
    %v5136 = vunpack.c.l.b16 %v4872
    %v5137 = vunpack.c.h.b16 %v4872
    %v5138 = vunpack.c.l.b16 %v4873
    %v5139 = vunpack.c.h.b16 %v4873
    %v5140 = vunpack.c.l.b16 %v4874
    %v5141 = vunpack.c.h.b16 %v4874
    %v5142 = vunpack.c.l.b16 %v4875
    %v5143 = vunpack.c.h.b16 %v4875
    %v5144 = vunpack.c.l.b16 %v4876
    %v5145 = vunpack.c.h.b16 %v4876
    %v5146 = vunpack.c.l.b16 %v4877
    %v5147 = vunpack.c.h.b16 %v4877
    %v5148 = vunpack.c.l.b16 %v4878
    %v5149 = vunpack.c.h.b16 %v4878
    %v5150 = vunpack.c.l.b16 %v4879
    %v5151 = vunpack.c.h.b16 %v4879
    %v5152 = vunpack.c.l.b16 %v4880
    %v5153 = vunpack.c.h.b16 %v4880
    %v5154 = vunpack.c.l.b16 %v4881
    %v5155 = vunpack.c.h.b16 %v4881
    %v5156 = vunpack.c.l.b16 %v4882
    %v5157 = vunpack.c.h.b16 %v4882
    %v5158 = vunpack.c.l.b16 %v4883
    %v5159 = vunpack.c.h.b16 %v4883
    %v5160 = vunpack.c.l.b16 %v4884
    %v5161 = vunpack.c.h.b16 %v4884
    %v5162 = vunpack.c.l.b16 %v4885
    %v5163 = vunpack.c.h.b16 %v4885
    %v5164 = vunpack.c.l.b16 %v4886
    %v5165 = vunpack.c.h.b16 %v4886
    %v5166 = vunpack.c.l.b16 %v4887
    %v5167 = vunpack.c.h.b16 %v4887
    %v5168 = vunpack.c.l.b16 %v4888
    %v5169 = vunpack.c.h.b16 %v4888
    %v5170 = vunpack.c.l.b16 %v4889
    %v5171 = vunpack.c.h.b16 %v4889
    %v5172 = vunpack.c.l.b16 %v4890
    %v5173 = vunpack.c.h.b16 %v4890
    %v5174 = vunpack.c.l.b16 %v4891
    %v5175 = vunpack.c.h.b16 %v4891
    %v5176 = vunpack.c.l.b16 %v4892
    %v5177 = vunpack.c.h.b16 %v4892
    %v5178 = vunpack.c.l.b16 %v4893
    %v5179 = vunpack.c.h.b16 %v4893
    %v5180 = vunpack.c.l.b16 %v4894
    %v5181 = vunpack.c.h.b16 %v4894
    %v5182 = vunpack.c.l.b16 %v4895
    %v5183 = vunpack.c.h.b16 %v4895
    %v5184 = vunpack.c.l.b16 %v4896
    %v5185 = vunpack.c.h.b16 %v4896
    %v5186 = vunpack.c.l.b16 %v4897
    %v5187 = vunpack.c.h.b16 %v4897
    %v5188 = vunpack.c.l.b16 %v4898
    %v5189 = vunpack.c.h.b16 %v4898
    %v5190 = vunpack.c.l.b16 %v4899
    %v5191 = vunpack.c.h.b16 %v4899
    %v5192 = vunpack.c.l.b16 %v4900
    %v5193 = vunpack.c.h.b16 %v4900
    %v5194 = vunpack.c.l.b16 %v4901
    %v5195 = vunpack.c.h.b16 %v4901
    %v5196 = vunpack.c.l.b16 %v4902
    %v5197 = vunpack.c.h.b16 %v4902
    %v5198 = vunpack.c.l.b16 %v4903
    %v5199 = vunpack.c.h.b16 %v4903
    %v5200 = vunpack.c.l.b16 %v4904
    %v5201 = vunpack.c.h.b16 %v4904
    %v5202 = vunpack.c.l.b16 %v4905
    %v5203 = vunpack.c.h.b16 %v4905
    %v5204 = vunpack.c.l.b16 %v4906
    %v5205 = vunpack.c.h.b16 %v4906
    %v5206 = vunpack.c.l.b16 %v4907
    %v5207 = vunpack.c.h.b16 %v4907
    %v5208 = vunpack.c.l.b16 %v4908
    %v5209 = vunpack.c.h.b16 %v4908
    %v5210 = vunpack.c.l.b16 %v4909
    %v5211 = vunpack.c.h.b16 %v4909
    %v5212 = vunpack.c.l.b16 %v4910
    %v5213 = vunpack.c.h.b16 %v4910
    %v5214 = vunpack.c.l.b16 %v4911
    %v5215 = vunpack.c.h.b16 %v4911
    %v5216 = vunpack.c.l.b16 %v4912
    %v5217 = vunpack.c.h.b16 %v4912
    %v5218 = vunpack.c.l.b16 %v4913
    %v5219 = vunpack.c.h.b16 %v4913
    %v5220 = vunpack.c.l.b16 %v4914
    %v5221 = vunpack.c.h.b16 %v4914
    %v5222 = vunpack.c.l.b16 %v4915
    %v5223 = vunpack.c.h.b16 %v4915
    %v5224 = vunpack.c.l.b16 %v4916
    %v5225 = vunpack.c.h.b16 %v4916
    %v5226 = vunpack.c.l.b16 %v4917
    %v5227 = vunpack.c.h.b16 %v4917
    %v5228 = vunpack.c.l.b16 %v4918
    %v5229 = vunpack.c.h.b16 %v4918
    %v5230 = vunpack.c.l.b16 %v4919
    %v5231 = vunpack.c.h.b16 %v4919
    %v5232 = vunpack.c.l.b16 %v4920
    %v5233 = vunpack.c.h.b16 %v4920
    %v5234 = vunpack.c.l.b16 %v4921
    %v5235 = vunpack.c.h.b16 %v4921
    %v5236 = vunpack.c.l.b16 %v4922
    %v5237 = vunpack.c.h.b16 %v4922
    %v5238 = vunpack.c.l.b16 %v4923
    %v5239 = vunpack.c.h.b16 %v4923
    %v5240 = vunpack.c.l.b16 %v4924
    %v5241 = vunpack.c.h.b16 %v4924
    %v5242 = vunpack.c.l.b16 %v4925
    %v5243 = vunpack.c.h.b16 %v4925
    %v5244 = vunpack.c.l.b16 %v4926
    %v5245 = vunpack.c.h.b16 %v4926
    %v5246 = vunpack.c.l.b16 %v4927
    %v5247 = vunpack.c.h.b16 %v4927
    %v5248 = vunpack.c.l.b16 %v4928
    %v5249 = vunpack.c.h.b16 %v4928
    %v5250 = vunpack.c.l.b16 %v4929
    %v5251 = vunpack.c.h.b16 %v4929
    %v5252 = vunpack.c.l.b16 %v4930
    %v5253 = vunpack.c.h.b16 %v4930
    %v5254 = vunpack.c.l.b16 %v4931
    %v5255 = vunpack.c.h.b16 %v4931
    %v5256 = vunpack.c.l.b16 %v4932
    %v5257 = vunpack.c.h.b16 %v4932
    %v5258 = vunpack.c.l.b16 %v4933
    %v5259 = vunpack.c.h.b16 %v4933
    %v5260 = vunpack.c.l.b16 %v4934
    %v5261 = vunpack.c.h.b16 %v4934
    %v5262 = vunpack.c.l.b16 %v4935
    %v5263 = vunpack.c.h.b16 %v4935
    %v5264 = vunpack.c.l.b16 %v4936
    %v5265 = vunpack.c.h.b16 %v4936
    %v5266 = vunpack.c.l.b16 %v4937
    %v5267 = vunpack.c.h.b16 %v4937
    %v5268 = vunpack.c.l.b16 %v4938
    %v5269 = vunpack.c.h.b16 %v4938
    %v5270 = vunpack.c.l.b16 %v4939
    %v5271 = vunpack.c.h.b16 %v4939
    %v5272 = vunpack.c.l.b16 %v4940
    %v5273 = vunpack.c.h.b16 %v4940
    %v5274 = vunpack.c.l.b16 %v4941
    %v5275 = vunpack.c.h.b16 %v4941
    %v5276 = vunpack.c.l.b16 %v4942
    %v5277 = vunpack.c.h.b16 %v4942
    %v5278 = vunpack.c.l.b16 %v4943
    %v5279 = vunpack.c.h.b16 %v4943
    %v5280 = vunpack.c.l.b16 %v4944
    %v5281 = vunpack.c.h.b16 %v4944
    %v5282 = vunpack.c.l.b16 %v4945
    %v5283 = vunpack.c.h.b16 %v4945
    %v5284 = vunpack.c.l.b16 %v4946
    %v5285 = vunpack.c.h.b16 %v4946
    %v5286 = vunpack.c.l.b16 %v4947
    %v5287 = vunpack.c.h.b16 %v4947
    %v5288 = vunpack.c.l.b16 %v4948
    %v5289 = vunpack.c.h.b16 %v4948
    %v5290 = vunpack.c.l.b16 %v4949
    %v5291 = vunpack.c.h.b16 %v4949
    %v5292 = vunpack.c.l.b16 %v4950
    %v5293 = vunpack.c.h.b16 %v4950
    %v5294 = vunpack.c.l.b16 %v4951
    %v5295 = vunpack.c.h.b16 %v4951
    %v5296 = vunpack.c.l.b16 %v4952
    %v5297 = vunpack.c.h.b16 %v4952
    %v5298 = vunpack.c.l.b16 %v4953
    %v5299 = vunpack.c.h.b16 %v4953
    %v5300 = vunpack.c.l.b16 %v4954
    %v5301 = vunpack.c.h.b16 %v4954
    %v5302 = vunpack.c.l.b16 %v4955
    %v5303 = vunpack.c.h.b16 %v4955
    %v5304 = vunpack.c.l.b16 %v4956
    %v5305 = vunpack.c.h.b16 %v4956
    %v5306 = vunpack.c.l.b16 %v4957
    %v5307 = vunpack.c.h.b16 %v4957
    %v5308 = vunpack.c.l.b16 %v4958
    %v5309 = vunpack.c.h.b16 %v4958
    %v5310 = vunpack.c.l.b16 %v4959
    %v5311 = vunpack.c.h.b16 %v4959
    %v5312 = vunpack.c.l.b16 %v4960
    %v5313 = vunpack.c.h.b16 %v4960
    %v5314 = vunpack.c.l.b16 %v4961
    %v5315 = vunpack.c.h.b16 %v4961
    %v5316 = vunpack.c.l.b16 %v4962
    %v5317 = vunpack.c.h.b16 %v4962
    %v5318 = vunpack.c.l.b16 %v4963
    %v5319 = vunpack.c.h.b16 %v4963
    %v5320 = vunpack.c.l.b16 %v4964
    %v5321 = vunpack.c.h.b16 %v4964
    %v5322 = vunpack.c.l.b16 %v4965
    %v5323 = vunpack.c.h.b16 %v4965
    %v5324 = vunpack.c.l.b16 %v4966
    %v5325 = vunpack.c.h.b16 %v4966
    %v5326 = vunpack.c.l.b16 %v4967
    %v5327 = vunpack.c.h.b16 %v4967
    %v5328 = vunpack.c.l.b16 %v4968
    %v5329 = vunpack.c.h.b16 %v4968
    %v5330 = vunpack.c.l.b16 %v4969
    %v5331 = vunpack.c.h.b16 %v4969
    %v5332 = vunpack.c.l.b16 %v4970
    %v5333 = vunpack.c.h.b16 %v4970
    %v5334 = vunpack.c.l.b16 %v4971
    %v5335 = vunpack.c.h.b16 %v4971
    %v5336 = vunpack.c.l.b16 %v4972
    %v5337 = vunpack.c.h.b16 %v4972
    %v5338 = vunpack.c.l.b16 %v4973
    %v5339 = vunpack.c.h.b16 %v4973
    %v5340 = vunpack.c.l.b16 %v4974
    %v5341 = vunpack.c.h.b16 %v4974
    %v5342 = vunpack.c.l.b16 %v4975
    %v5343 = vunpack.c.h.b16 %v4975
    %v5344 = vunpack.c.l.b16 %v4976
    %v5345 = vunpack.c.h.b16 %v4976
    %v5346 = vpack.c.b16 %v5122, %v5120
    %v5347 = vpack.c.b16 %v5123, %v5121
    %v5348 = vpack.c.b16 %v5126, %v5124
    %v5349 = vpack.c.b16 %v5127, %v5125
    %v5350 = vpack.c.b16 %v5130, %v5128
    %v5351 = vpack.c.b16 %v5131, %v5129
    %v5352 = vpack.c.b16 %v5134, %v5132
    %v5353 = vpack.c.b16 %v5135, %v5133
    %v5354 = vpack.c.b16 %v5138, %v5136
    %v5355 = vpack.c.b16 %v5139, %v5137
    %v5356 = vpack.c.b16 %v5142, %v5140
    %v5357 = vpack.c.b16 %v5143, %v5141
    %v5358 = vpack.c.b16 %v5146, %v5144
    %v5359 = vpack.c.b16 %v5147, %v5145
    %v5360 = vpack.c.b16 %v5150, %v5148
    %v5361 = vpack.c.b16 %v5151, %v5149
    %v5362 = vpack.c.b16 %v5154, %v5152
    %v5363 = vpack.c.b16 %v5155, %v5153
    %v5364 = vpack.c.b16 %v5158, %v5156
    %v5365 = vpack.c.b16 %v5159, %v5157
    %v5366 = vpack.c.b16 %v5162, %v5160
    %v5367 = vpack.c.b16 %v5163, %v5161
    %v5368 = vpack.c.b16 %v5166, %v5164
    %v5369 = vpack.c.b16 %v5167, %v5165
    %v5370 = vpack.c.b16 %v5170, %v5168
    %v5371 = vpack.c.b16 %v5171, %v5169
    %v5372 = vpack.c.b16 %v5174, %v5172
    %v5373 = vpack.c.b16 %v5175, %v5173
    %v5374 = vpack.c.b16 %v5178, %v5176
    %v5375 = vpack.c.b16 %v5179, %v5177
    %v5376 = vpack.c.b16 %v5182, %v5180
    %v5377 = vpack.c.b16 %v5183, %v5181
    %v5378 = vpack.c.b16 %v5186, %v5184
    %v5379 = vpack.c.b16 %v5187, %v5185
    %v5380 = vpack.c.b16 %v5190, %v5188
    %v5381 = vpack.c.b16 %v5191, %v5189
    %v5382 = vpack.c.b16 %v5194, %v5192
    %v5383 = vpack.c.b16 %v5195, %v5193
    %v5384 = vpack.c.b16 %v5198, %v5196
    %v5385 = vpack.c.b16 %v5199, %v5197
    %v5386 = vpack.c.b16 %v5202, %v5200
    %v5387 = vpack.c.b16 %v5203, %v5201
    %v5388 = vpack.c.b16 %v5206, %v5204
    %v5389 = vpack.c.b16 %v5207, %v5205
    %v5390 = vpack.c.b16 %v5210, %v5208
    %v5391 = vpack.c.b16 %v5211, %v5209
    %v5392 = vpack.c.b16 %v5214, %v5212
    %v5393 = vpack.c.b16 %v5215, %v5213
    %v5394 = vpack.c.b16 %v5218, %v5216
    %v5395 = vpack.c.b16 %v5219, %v5217
    %v5396 = vpack.c.b16 %v5222, %v5220
    %v5397 = vpack.c.b16 %v5223, %v5221
    %v5398 = vpack.c.b16 %v5226, %v5224
    %v5399 = vpack.c.b16 %v5227, %v5225
    %v5400 = vpack.c.b16 %v5230, %v5228
    %v5401 = vpack.c.b16 %v5231, %v5229
    %v5402 = vpack.c.b16 %v5234, %v5232
    %v5403 = vpack.c.b16 %v5235, %v5233
    %v5404 = vpack.c.b16 %v5238, %v5236
    %v5405 = vpack.c.b16 %v5239, %v5237
    %v5406 = vpack.c.b16 %v5242, %v5240
    %v5407 = vpack.c.b16 %v5243, %v5241
    %v5408 = vpack.c.b16 %v5246, %v5244
    %v5409 = vpack.c.b16 %v5247, %v5245
    %v5410 = vpack.c.b16 %v5250, %v5248
    %v5411 = vpack.c.b16 %v5251, %v5249
    %v5412 = vpack.c.b16 %v5254, %v5252
    %v5413 = vpack.c.b16 %v5255, %v5253
    %v5414 = vpack.c.b16 %v5258, %v5256
    %v5415 = vpack.c.b16 %v5259, %v5257
    %v5416 = vpack.c.b16 %v5262, %v5260
    %v5417 = vpack.c.b16 %v5263, %v5261
    %v5418 = vpack.c.b16 %v5266, %v5264
    %v5419 = vpack.c.b16 %v5267, %v5265
    %v5420 = vpack.c.b16 %v5270, %v5268
    %v5421 = vpack.c.b16 %v5271, %v5269
    %v5422 = vpack.c.b16 %v5274, %v5272
    %v5423 = vpack.c.b16 %v5275, %v5273
    %v5424 = vpack.c.b16 %v5278, %v5276
    %v5425 = vpack.c.b16 %v5279, %v5277
    %v5426 = vpack.c.b16 %v5282, %v5280
    %v5427 = vpack.c.b16 %v5283, %v5281
    %v5428 = vpack.c.b16 %v5286, %v5284
    %v5429 = vpack.c.b16 %v5287, %v5285
    %v5430 = vpack.c.b16 %v5290, %v5288
    %v5431 = vpack.c.b16 %v5291, %v5289
    %v5432 = vpack.c.b16 %v5294, %v5292
    %v5433 = vpack.c.b16 %v5295, %v5293
    %v5434 = vpack.c.b16 %v5298, %v5296
    %v5435 = vpack.c.b16 %v5299, %v5297
    %v5436 = vpack.c.b16 %v5302, %v5300
    %v5437 = vpack.c.b16 %v5303, %v5301
    %v5438 = vpack.c.b16 %v5306, %v5304
    %v5439 = vpack.c.b16 %v5307, %v5305
    %v5440 = vpack.c.b16 %v5310, %v5308
    %v5441 = vpack.c.b16 %v5311, %v5309
    %v5442 = vpack.c.b16 %v5314, %v5312
    %v5443 = vpack.c.b16 %v5315, %v5313
    %v5444 = vpack.c.b16 %v5318, %v5316
    %v5445 = vpack.c.b16 %v5319, %v5317
    %v5446 = vpack.c.b16 %v5322, %v5320
    %v5447 = vpack.c.b16 %v5323, %v5321
    %v5448 = vpack.c.b16 %v5326, %v5324
    %v5449 = vpack.c.b16 %v5327, %v5325
    %v5450 = vpack.c.b16 %v5330, %v5328
    %v5451 = vpack.c.b16 %v5331, %v5329
    %v5452 = vpack.c.b16 %v5334, %v5332
    %v5453 = vpack.c.b16 %v5335, %v5333
    %v5454 = vpack.c.b16 %v5338, %v5336
    %v5455 = vpack.c.b16 %v5339, %v5337
    %v5456 = vpack.c.b16 %v5342, %v5340
    %v5457 = vpack.c.b16 %v5343, %v5341
    %v5458 = vpack.c.b16 %v5344, %v5344
    %v5459 = vpack.c.b16 %v5345, %v5345
    %v5573 = vsel %vm1960, %v4984, 0
    %v5576 = vsel %vm1960, %v4992, 0
    %v5579 = vsel %vm1967, %v5458, 0
    %v5582 = vsel %vm1967, %v5459, 0
    %5584 = vmatprep.subr.bf16.mxu0 %v5347
    %5585 = vmatpush1.bf16.msra.mxu0 %v5346
    %5586 = vmatprep.subr.bf16.mxu0 %v5349
    %5587 = vmatpush1.bf16.msra.mxu0 %v5348
    %5588 = vmatprep.subr.bf16.mxu0 %v5351
    %5589 = vmatpush1.bf16.msra.mxu0 %v5350
    %5590 = vmatprep.subr.bf16.mxu0 %v5353
    %5591 = vmatpush1.bf16.msra.mxu0 %v5352
    %5592 = vmatprep.subr.bf16.mxu0 %v5355
    %5593 = vmatpush1.bf16.msra.mxu0 %v5354
    %5594 = vmatprep.subr.bf16.mxu0 %v5357
    %5595 = vmatpush1.bf16.msra.mxu0 %v5356
    %5596 = vmatprep.subr.bf16.mxu0 %v5359
    %5597 = vmatpush1.bf16.msra.mxu0 %v5358
    %5598 = vmatprep.subr.bf16.mxu0 %v5361
    %5599 = vmatpush1.bf16.msra.mxu0 %v5360
    %5600 = vmatprep.subr.bf16.mxu0 %v5363
    %5601 = vmatpush1.bf16.msra.mxu0 %v5362
    %5602 = vmatprep.subr.bf16.mxu0 %v5365
    %5603 = vmatpush1.bf16.msra.mxu0 %v5364
    %5604 = vmatprep.subr.bf16.mxu0 %v5367
    %5605 = vmatpush1.bf16.msra.mxu0 %v5366
    %5606 = vmatprep.subr.bf16.mxu0 %v5369
    %5607 = vmatpush1.bf16.msra.mxu0 %v5368
    %5608 = vmatprep.subr.bf16.mxu0 %v5371
    %5609 = vmatpush1.bf16.msra.mxu0 %v5370
    %5610 = vmatprep.subr.bf16.mxu0 %v5373
    %5611 = vmatpush1.bf16.msra.mxu0 %v5372
    %5612 = vmatprep.subr.bf16.mxu0 %v5375
    %5613 = vmatpush1.bf16.msra.mxu0 %v5374
    %5614 = vmatprep.subr.bf16.mxu0 %v5377
    %5615 = vmatpush1.bf16.msra.mxu0 %v5376
    %5616 = vmatprep.mubr.bf16.mxu0 %v4978
    %5617 = vmatmul.mubr.bf16.gmra.mrb[0].mxu0 %v4977
    %v5618 = vpop.f32.mrb[0].mxu0
    %v5619 = vadd.f32 0.0, %v5618
    %v5620 = vpop.f32.mrb[0].mxu0
    %v5621 = vadd.f32 0.0, %v5620
    %v5622 = vpop.f32.mrb[0].mxu0
    %v5623 = vadd.f32 0.0, %v5622
    %v5624 = vpop.f32.mrb[0].mxu0
    %v5625 = vadd.f32 0.0, %v5624
    %5626 = vmatprep.mubr.bf16.mxu0 %v4986
    %5627 = vmatmul.mubr.bf16.gmra.mrb[0].mxu0 %v4985
    %v5628 = vpop.f32.mrb[0].mxu0
    %v5629 = vpop.f32.mrb[0].mxu0
    %v5630 = vpop.f32.mrb[0].mxu0
    %v5631 = vpop.f32.mrb[0].mxu0
    %5632 = vdwg.mxu0
    %5633 = vmatprep.subr.bf16.mxu0 %v5379
    %5634 = vmatpush1.bf16.msra.mxu0 %v5378
    %5635 = vmatprep.subr.bf16.mxu0 %v5381
    %5636 = vmatpush1.bf16.msra.mxu0 %v5380
    %5637 = vmatprep.subr.bf16.mxu0 %v5383
    %5638 = vmatpush1.bf16.msra.mxu0 %v5382
    %5639 = vmatprep.subr.bf16.mxu0 %v5385
    %5640 = vmatpush1.bf16.msra.mxu0 %v5384
    %5641 = vmatprep.subr.bf16.mxu0 %v5387
    %5642 = vmatpush1.bf16.msra.mxu0 %v5386
    %5643 = vmatprep.subr.bf16.mxu0 %v5389
    %5644 = vmatpush1.bf16.msra.mxu0 %v5388
    %5645 = vmatprep.subr.bf16.mxu0 %v5391
    %5646 = vmatpush1.bf16.msra.mxu0 %v5390
    %5647 = vmatprep.subr.bf16.mxu0 %v5393
    %5648 = vmatpush1.bf16.msra.mxu0 %v5392
    %5649 = vmatprep.subr.bf16.mxu0 %v5395
    %5650 = vmatpush1.bf16.msra.mxu0 %v5394
    %5651 = vmatprep.subr.bf16.mxu0 %v5397
    %5652 = vmatpush1.bf16.msra.mxu0 %v5396
    %5653 = vmatprep.subr.bf16.mxu0 %v5399
    %5654 = vmatpush1.bf16.msra.mxu0 %v5398
    %5655 = vmatprep.subr.bf16.mxu0 %v5401
    %5656 = vmatpush1.bf16.msra.mxu0 %v5400
    %5657 = vmatprep.subr.bf16.mxu0 %v5403
    %5658 = vmatpush1.bf16.msra.mxu0 %v5402
    %5659 = vmatprep.subr.bf16.mxu0 %v5405
    %5660 = vmatpush1.bf16.msra.mxu0 %v5404
    %5661 = vmatprep.subr.bf16.mxu0 %v5407
    %5662 = vmatpush1.bf16.msra.mxu0 %v5406
    %5663 = vmatprep.subr.bf16.mxu0 %v5409
    %5664 = vmatpush1.bf16.msra.mxu0 %v5408
    %5665 = vmatprep.mubr.bf16.mxu0 %v4980
    %5666 = vmatmul.mubr.bf16.gmra.mrb[0].mxu0 %v4979
    %v5667 = vpop.f32.mrb[0].mxu0
    %v5668 = vadd.f32 %v5619, %v5667
    %v5669 = vpop.f32.mrb[0].mxu0
    %v5670 = vadd.f32 %v5621, %v5669
    %v5671 = vpop.f32.mrb[0].mxu0
    %v5672 = vadd.f32 %v5623, %v5671
    %v5673 = vpop.f32.mrb[0].mxu0
    %v5674 = vadd.f32 %v5625, %v5673
    %5675 = vmatprep.mubr.bf16.mxu0 %v4988
    %5676 = vmatmul.mubr.bf16.gmra.mrb[0].mxu0 %v4987
    %v5677 = vpop.f32.mrb[0].mxu0
    %v5678 = vpop.f32.mrb[0].mxu0
    %v5679 = vpop.f32.mrb[0].mxu0
    %v5680 = vpop.f32.mrb[0].mxu0
    %5681 = vdwg.mxu0
    %5682 = vmatprep.subr.bf16.mxu0 %v5411
    %5683 = vmatpush1.bf16.msra.mxu0 %v5410
    %5684 = vmatprep.subr.bf16.mxu0 %v5413
    %5685 = vmatpush1.bf16.msra.mxu0 %v5412
    %5686 = vmatprep.subr.bf16.mxu0 %v5415
    %5687 = vmatpush1.bf16.msra.mxu0 %v5414
    %5688 = vmatprep.subr.bf16.mxu0 %v5417
    %5689 = vmatpush1.bf16.msra.mxu0 %v5416
    %5690 = vmatprep.subr.bf16.mxu0 %v5419
    %5691 = vmatpush1.bf16.msra.mxu0 %v5418
    %5692 = vmatprep.subr.bf16.mxu0 %v5421
    %5693 = vmatpush1.bf16.msra.mxu0 %v5420
    %5694 = vmatprep.subr.bf16.mxu0 %v5423
    %5695 = vmatpush1.bf16.msra.mxu0 %v5422
    %5696 = vmatprep.subr.bf16.mxu0 %v5425
    %5697 = vmatpush1.bf16.msra.mxu0 %v5424
    %5698 = vmatprep.subr.bf16.mxu0 %v5427
    %5699 = vmatpush1.bf16.msra.mxu0 %v5426
    %5700 = vmatprep.subr.bf16.mxu0 %v5429
    %5701 = vmatpush1.bf16.msra.mxu0 %v5428
    %5702 = vmatprep.subr.bf16.mxu0 %v5431
    %5703 = vmatpush1.bf16.msra.mxu0 %v5430
    %5704 = vmatprep.subr.bf16.mxu0 %v5433
    %5705 = vmatpush1.bf16.msra.mxu0 %v5432
    %5706 = vmatprep.subr.bf16.mxu0 %v5435
    %5707 = vmatpush1.bf16.msra.mxu0 %v5434
    %5708 = vmatprep.subr.bf16.mxu0 %v5437
    %5709 = vmatpush1.bf16.msra.mxu0 %v5436
    %5710 = vmatprep.subr.bf16.mxu0 %v5439
    %5711 = vmatpush1.bf16.msra.mxu0 %v5438
    %5712 = vmatprep.subr.bf16.mxu0 %v5441
    %5713 = vmatpush1.bf16.msra.mxu0 %v5440
    %5714 = vmatprep.mubr.bf16.mxu0 %v4982
    %5715 = vmatmul.mubr.bf16.gmra.mrb[0].mxu0 %v4981
    %v5716 = vpop.f32.mrb[0].mxu0
    %v5717 = vadd.f32 %v5668, %v5716
    %v5718 = vpop.f32.mrb[0].mxu0
    %v5719 = vadd.f32 %v5670, %v5718
    %v5720 = vpop.f32.mrb[0].mxu0
    %v5721 = vadd.f32 %v5672, %v5720
    %v5722 = vpop.f32.mrb[0].mxu0
    %v5723 = vadd.f32 %v5674, %v5722
    %5724 = vmatprep.mubr.bf16.mxu0 %v4990
    %5725 = vmatmul.mubr.bf16.gmra.mrb[0].mxu0 %v4989
    %v5726 = vpop.f32.mrb[0].mxu0
    %v5727 = vpop.f32.mrb[0].mxu0
    %v5728 = vpop.f32.mrb[0].mxu0
    %v5729 = vpop.f32.mrb[0].mxu0
    %5730 = vdwg.mxu0
    %5731 = vmatprep.subr.bf16.mxu0 %v5443
    %5732 = vmatpush1.bf16.msra.mxu0 %v5442
    %5733 = vmatprep.subr.bf16.mxu0 %v5445
    %5734 = vmatpush1.bf16.msra.mxu0 %v5444
    %5735 = vmatprep.subr.bf16.mxu0 %v5447
    %5736 = vmatpush1.bf16.msra.mxu0 %v5446
    %5737 = vmatprep.subr.bf16.mxu0 %v5449
    %5738 = vmatpush1.bf16.msra.mxu0 %v5448
    %5739 = vmatprep.subr.bf16.mxu0 %v5451
    %5740 = vmatpush1.bf16.msra.mxu0 %v5450
    %5741 = vmatprep.subr.bf16.mxu0 %v5453
    %5742 = vmatpush1.bf16.msra.mxu0 %v5452
    %5743 = vmatprep.subr.bf16.mxu0 %v5455
    %5744 = vmatpush1.bf16.msra.mxu0 %v5454
    %5745 = vmatprep.subr.bf16.mxu0 %v5457
    %5746 = vmatpush1.bf16.msra.mxu0 %v5456
    %5747 = vmatprep.subr.bf16.mxu0 %v5582
    %5748 = vmatpush1.bf16.msra.mxu0 %v5579
    %5749 = vmatprep.subr.bf16.mxu0 0
    %5750 = vmatpush1.bf16.msra.mxu0 0
    %5751 = vmatprep.subr.bf16.mxu0 0
    %5752 = vmatpush1.bf16.msra.mxu0 0
    %5753 = vmatprep.subr.bf16.mxu0 0
    %5754 = vmatpush1.bf16.msra.mxu0 0
    %5755 = vmatprep.subr.bf16.mxu0 0
    %5756 = vmatpush1.bf16.msra.mxu0 0
    %5757 = vmatprep.subr.bf16.mxu0 0
    %5758 = vmatpush1.bf16.msra.mxu0 0
    %5759 = vmatprep.subr.bf16.mxu0 0
    %5760 = vmatpush1.bf16.msra.mxu0 0
    %5761 = vmatprep.subr.bf16.mxu0 0
    %5762 = vmatpush1.bf16.msra.mxu0 0
    %5763 = vmatprep.mubr.bf16.mxu0 %v5573
    %5764 = vmatmul.mubr.bf16.gmra.mrb[0].mxu0 %v4983
    %v5765 = vpop.f32.mrb[0].mxu0
    %v5766 = vadd.f32 %v5717, %v5765
    %v5767 = vpop.f32.mrb[0].mxu0
    %v5768 = vadd.f32 %v5719, %v5767
    %v5769 = vpop.f32.mrb[0].mxu0
    %v5770 = vadd.f32 %v5721, %v5769
    %v5771 = vpop.f32.mrb[0].mxu0
    %v5772 = vadd.f32 %v5723, %v5771
    %5773 = vmatprep.mubr.bf16.mxu0 %v5576
    %5774 = vmatmul.mubr.bf16.gmra.mrb[0].mxu0 %v4991
    %v5775 = vpop.f32.mrb[0].mxu0
    %v5776 = vpop.f32.mrb[0].mxu0
    %v5777 = vpop.f32.mrb[0].mxu0
    %v5778 = vpop.f32.mrb[0].mxu0
    %5779 = vdwg.mxu0
    %v5780 = vadd.f32 %v4843, %v5766
    %v5781 = vadd.f32 %v4844, %v5768
    %v5782 = vadd.f32 %v4845, %v5770
    %v5783 = vadd.f32 %v4846, %v5772
    %v5784 = vmax.f32 %v5780, %v5782
    %v5785 = vmax.f32 %v5781, %v5783
    %5787 = vrot.lane.b32.xlu0 %v5784, 78
    %v5788 = vpop.permute.xlu0 %5787
    %5791 = vrot.lane.b32.xlu0 %v5784, 28
    %v5792 = vpop.permute.xlu0 %5791
    %5793 = vrot.lane.b32.xlu0 %v5785, 28
    %v5794 = vpop.permute.xlu0 %5793
    %vm5795 = vcmask 228352
    %v5796 = vsel %vm5795, %v5792, %v5794
    %5798 = vrot.lane.b32.xlu0 %v5785, 106
    %v5799 = vpop.permute.xlu0 %5798
    %5801 = vrot.lane.b32.xlu0 %v5785, 56
    %v5802 = vpop.permute.xlu0 %5801
    %v5804 = vcombine.low %v5784, %v5796
    %v5805 = vcombine.high %v5784, %v5796
    %v5807 = vunpack.c.l.s4 1983009808
    %v5808 = vunpack.c.0.s8 %v5807
    %v5809 = vlaneseq
    %v5810 = vshrl.u32 %v5809, 7
    %v5811 = vsub.s32 %v5808, %v5810
    %v5812 = vrot.slane %v5804, %v5811
    %v5814 = vunpack.c.l.s4 1983009808
    %v5815 = vunpack.c.0.s8 %v5814
    %v5816 = vlaneseq
    %v5817 = vshrl.u32 %v5816, 7
    %v5818 = vsub.s32 %v5815, %v5817
    %v5819 = vrot.slane %v5805, %v5818
    %v5820 = vcombine.low %v5788, %v5799
    %v5821 = vcombine.high %v5788, %v5799
    %v5823 = vunpack.c.l.s4 1983009808
    %v5824 = vunpack.c.0.s8 %v5823
    %v5825 = vlaneseq
    %v5826 = vshrl.u32 %v5825, 7
    %v5827 = vsub.s32 %v5824, %v5826
    %v5828 = vrot.slane %v5820, %v5827
    %v5830 = vunpack.c.l.s4 1983009808
    %v5831 = vunpack.c.0.s8 %v5830
    %v5832 = vlaneseq
    %v5833 = vshrl.u32 %v5832, 7
    %v5834 = vsub.s32 %v5831, %v5833
    %v5835 = vrot.slane %v5821, %v5834
    %v5836 = vcombine.high %v5802, 0.0
    %v5838 = vunpack.c.l.s4 1983009808
    %v5839 = vunpack.c.0.s8 %v5838
    %v5840 = vlaneseq
    %v5841 = vshrl.u32 %v5840, 7
    %v5842 = vsub.s32 %v5839, %v5841
    %v5843 = vrot.slane %v5802, %v5842
    %v5845 = vunpack.c.l.s4 1983009808
    %v5846 = vunpack.c.0.s8 %v5845
    %v5847 = vlaneseq
    %v5848 = vshrl.u32 %v5847, 7
    %v5849 = vsub.s32 %v5846, %v5848
    %v5850 = vrot.slane %v5836, %v5849
    %v5851 = vcombine.low %v5812, %v5828
    %v5852 = vcombine.high %v5812, %v5828
    %v5854 = vunpack.c.l.s4 1934713408
    %v5855 = vunpack.c.0.s8 %v5854
    %v5856 = vlaneseq
    %v5857 = vshrl.u32 %v5856, 7
    %v5858 = vsub.s32 %v5855, %v5857
    %v5859 = vrot.slane %v5851, %v5858
    %v5861 = vunpack.c.l.s4 1934713408
    %v5862 = vunpack.c.0.s8 %v5861
    %v5863 = vlaneseq
    %v5864 = vshrl.u32 %v5863, 7
    %v5865 = vsub.s32 %v5862, %v5864
    %v5866 = vrot.slane %v5852, %v5865
    %v5867 = vcombine.low %v5819, %v5835
    %v5868 = vcombine.high %v5819, %v5835
    %v5870 = vunpack.c.l.s4 1934713408
    %v5871 = vunpack.c.0.s8 %v5870
    %v5872 = vlaneseq
    %v5873 = vshrl.u32 %v5872, 7
    %v5874 = vsub.s32 %v5871, %v5873
    %v5875 = vrot.slane %v5867, %v5874
    %v5877 = vunpack.c.l.s4 1934713408
    %v5878 = vunpack.c.0.s8 %v5877
    %v5879 = vlaneseq
    %v5880 = vshrl.u32 %v5879, 7
    %v5881 = vsub.s32 %v5878, %v5880
    %v5882 = vrot.slane %v5868, %v5881
    %v5883 = vcombine.high %v5843, 0.0
    %v5885 = vunpack.c.l.s4 1934713408
    %v5886 = vunpack.c.0.s8 %v5885
    %v5887 = vlaneseq
    %v5888 = vshrl.u32 %v5887, 7
    %v5889 = vsub.s32 %v5886, %v5888
    %v5890 = vrot.slane %v5843, %v5889
    %v5892 = vunpack.c.l.s4 1934713408
    %v5893 = vunpack.c.0.s8 %v5892
    %v5894 = vlaneseq
    %v5895 = vshrl.u32 %v5894, 7
    %v5896 = vsub.s32 %v5893, %v5895
    %v5897 = vrot.slane %v5883, %v5896
    %v5898 = vcombine.high %v5850, 0.0
    %v5900 = vunpack.c.l.s4 1934713408
    %v5901 = vunpack.c.0.s8 %v5900
    %v5902 = vlaneseq
    %v5903 = vshrl.u32 %v5902, 7
    %v5904 = vsub.s32 %v5901, %v5903
    %v5905 = vrot.slane %v5850, %v5904
    %v5907 = vunpack.c.l.s4 1934713408
    %v5908 = vunpack.c.0.s8 %v5907
    %v5909 = vlaneseq
    %v5910 = vshrl.u32 %v5909, 7
    %v5911 = vsub.s32 %v5908, %v5910
    %v5912 = vrot.slane %v5898, %v5911
    %v5913 = vcombine.low %v5859, %v5890
    %v5914 = vcombine.high %v5859, %v5890
    %v5915 = vcombine.low %v5866, %v5897
    %v5916 = vcombine.high %v5866, %v5897
    %v5917 = vcombine.low %v5875, %v5905
    %v5918 = vcombine.high %v5875, %v5905
    %v5919 = vcombine.low %v5882, %v5912
    %v5920 = vcombine.high %v5882, %v5912
    %v5930 = vunpack.c.l.s4 1983009808
    %v5931 = vunpack.c.0.s8 %v5930
    %v5932 = vlaneseq
    %v5933 = vshrl.u32 %v5932, 7
    %v5934 = vsub.s32 %v5931, %v5933
    %v5935 = vrot.slane %v5913, %v5934
    %v5936 = vcombine.high %v5935, %v5935
    %v5938 = vunpack.c.l.s4 1983009808
    %v5939 = vunpack.c.0.s8 %v5938
    %v5940 = vlaneseq
    %v5941 = vshrl.u32 %v5940, 7
    %v5942 = vsub.s32 %v5939, %v5941
    %v5943 = vrot.slane %v5914, %v5942
    %v5944 = vcombine.high %v5943, %v5943
    %v5946 = vunpack.c.l.s4 1983009808
    %v5947 = vunpack.c.0.s8 %v5946
    %v5948 = vlaneseq
    %v5949 = vshrl.u32 %v5948, 7
    %v5950 = vsub.s32 %v5947, %v5949
    %v5951 = vrot.slane %v5915, %v5950
    %v5952 = vcombine.high %v5951, %v5951
    %v5954 = vunpack.c.l.s4 1983009808
    %v5955 = vunpack.c.0.s8 %v5954
    %v5956 = vlaneseq
    %v5957 = vshrl.u32 %v5956, 7
    %v5958 = vsub.s32 %v5955, %v5957
    %v5959 = vrot.slane %v5916, %v5958
    %v5960 = vcombine.high %v5959, %v5959
    %v5962 = vunpack.c.l.s4 1983009808
    %v5963 = vunpack.c.0.s8 %v5962
    %v5964 = vlaneseq
    %v5965 = vshrl.u32 %v5964, 7
    %v5966 = vsub.s32 %v5963, %v5965
    %v5967 = vrot.slane %v5917, %v5966
    %v5968 = vcombine.high %v5967, %v5967
    %v5970 = vunpack.c.l.s4 1983009808
    %v5971 = vunpack.c.0.s8 %v5970
    %v5972 = vlaneseq
    %v5973 = vshrl.u32 %v5972, 7
    %v5974 = vsub.s32 %v5971, %v5973
    %v5975 = vrot.slane %v5918, %v5974
    %v5976 = vcombine.high %v5975, %v5975
    %v5978 = vunpack.c.l.s4 1983009808
    %v5979 = vunpack.c.0.s8 %v5978
    %v5980 = vlaneseq
    %v5981 = vshrl.u32 %v5980, 7
    %v5982 = vsub.s32 %v5979, %v5981
    %v5983 = vrot.slane %v5919, %v5982
    %v5984 = vcombine.high %v5983, %v5983
    %v5986 = vunpack.c.l.s4 1983009808
    %v5987 = vunpack.c.0.s8 %v5986
    %v5988 = vlaneseq
    %v5989 = vshrl.u32 %v5988, 7
    %v5990 = vsub.s32 %v5987, %v5989
    %v5991 = vrot.slane %v5920, %v5990
    %v5992 = vcombine.high %v5991, %v5991
    %v6009 = vrot.slane %v5935, 7
    %v6010 = vrot.slane %v6009, 2
    %v6011 = vrot.slane %v5936, 7
    %v6012 = vrot.slane %v6011, 2
    %v6013 = vrot.slane %v5943, 7
    %v6014 = vrot.slane %v6013, 2
    %v6015 = vrot.slane %v5944, 7
    %v6016 = vrot.slane %v6015, 2
    %v6017 = vrot.slane %v5951, 7
    %v6018 = vrot.slane %v6017, 2
    %v6019 = vrot.slane %v5952, 7
    %v6020 = vrot.slane %v6019, 2
    %v6021 = vrot.slane %v5959, 7
    %v6022 = vrot.slane %v6021, 2
    %v6023 = vrot.slane %v5960, 7
    %v6024 = vrot.slane %v6023, 2
    %v6025 = vrot.slane %v5967, 7
    %v6026 = vrot.slane %v6025, 2
    %v6027 = vrot.slane %v5968, 7
    %v6028 = vrot.slane %v6027, 2
    %v6029 = vrot.slane %v5975, 7
    %v6030 = vrot.slane %v6029, 2
    %v6031 = vrot.slane %v5976, 7
    %v6032 = vrot.slane %v6031, 2
    %v6033 = vrot.slane %v5983, 7
    %v6034 = vrot.slane %v6033, 2
    %v6035 = vrot.slane %v5984, 7
    %v6036 = vrot.slane %v6035, 2
    %v6037 = vrot.slane %v5991, 7
    %v6038 = vrot.slane %v6037, 2
    %v6039 = vrot.slane %v5992, 7
    %v6040 = vrot.slane %v6039, 2
    %v6057 = vmax.f32 %v5935, %v6010
    %v6058 = vmax.f32 %v5936, %v6012
    %v6059 = vmax.f32 %v5943, %v6014
    %v6060 = vmax.f32 %v5944, %v6016
    %v6061 = vmax.f32 %v5951, %v6018
    %v6062 = vmax.f32 %v5952, %v6020
    %v6063 = vmax.f32 %v5959, %v6022
    %v6064 = vmax.f32 %v5960, %v6024
    %v6065 = vmax.f32 %v5967, %v6026
    %v6066 = vmax.f32 %v5968, %v6028
    %v6067 = vmax.f32 %v5975, %v6030
    %v6068 = vmax.f32 %v5976, %v6032
    %v6069 = vmax.f32 %v5983, %v6034
    %v6070 = vmax.f32 %v5984, %v6036
    %v6071 = vmax.f32 %v5991, %v6038
    %v6072 = vmax.f32 %v5992, %v6040
    %vm6089 = vcmask 1044484
    %v6090 = vsel %vm6089, %v6057, %v6057
    %vm6091 = vcmask 1046534
    %v6092 = vsel %vm6091, %v6057, %v6090
    %v6093 = vrot.slane %v6058, 7
    %vm6094 = vcmask 1041409
    %v6095 = vsel %vm6094, %v6093, %v6092
    %vm6096 = vcmask 1043459
    %v6097 = vsel %vm6096, %v6093, %v6095
    %vm6098 = vcmask 1045509
    %v6099 = vsel %vm6098, %v6093, %v6097
    %vm6100 = vcmask 1047559
    %v6101 = vsel %vm6100, %v6093, %v6099
    %v6102 = vsel %vm6089, %v6059, %v6059
    %v6103 = vsel %vm6091, %v6059, %v6102
    %v6104 = vrot.slane %v6060, 7
    %v6105 = vsel %vm6094, %v6104, %v6103
    %v6106 = vsel %vm6096, %v6104, %v6105
    %v6107 = vsel %vm6098, %v6104, %v6106
    %v6108 = vsel %vm6100, %v6104, %v6107
    %v6109 = vsel %vm6089, %v6061, %v6061
    %v6110 = vsel %vm6091, %v6061, %v6109
    %v6111 = vrot.slane %v6062, 7
    %v6112 = vsel %vm6094, %v6111, %v6110
    %v6113 = vsel %vm6096, %v6111, %v6112
    %v6114 = vsel %vm6098, %v6111, %v6113
    %v6115 = vsel %vm6100, %v6111, %v6114
    %v6116 = vsel %vm6089, %v6063, %v6063
    %v6117 = vsel %vm6091, %v6063, %v6116
    %v6118 = vrot.slane %v6064, 7
    %v6119 = vsel %vm6094, %v6118, %v6117
    %v6120 = vsel %vm6096, %v6118, %v6119
    %v6121 = vsel %vm6098, %v6118, %v6120
    %v6122 = vsel %vm6100, %v6118, %v6121
    %v6123 = vsel %vm6089, %v6065, %v6065
    %v6124 = vsel %vm6091, %v6065, %v6123
    %v6125 = vrot.slane %v6066, 7
    %v6126 = vsel %vm6094, %v6125, %v6124
    %v6127 = vsel %vm6096, %v6125, %v6126
    %v6128 = vsel %vm6098, %v6125, %v6127
    %v6129 = vsel %vm6100, %v6125, %v6128
    %v6130 = vsel %vm6089, %v6067, %v6067
    %v6131 = vsel %vm6091, %v6067, %v6130
    %v6132 = vrot.slane %v6068, 7
    %v6133 = vsel %vm6094, %v6132, %v6131
    %v6134 = vsel %vm6096, %v6132, %v6133
    %v6135 = vsel %vm6098, %v6132, %v6134
    %v6136 = vsel %vm6100, %v6132, %v6135
    %v6137 = vsel %vm6089, %v6069, %v6069
    %v6138 = vsel %vm6091, %v6069, %v6137
    %v6139 = vrot.slane %v6070, 7
    %v6140 = vsel %vm6094, %v6139, %v6138
    %v6141 = vsel %vm6096, %v6139, %v6140
    %v6142 = vsel %vm6098, %v6139, %v6141
    %v6143 = vsel %vm6100, %v6139, %v6142
    %v6144 = vsel %vm6089, %v6071, %v6071
    %v6145 = vsel %vm6091, %v6071, %v6144
    %v6146 = vrot.slane %v6072, 7
    %v6147 = vsel %vm6094, %v6146, %v6145
    %v6148 = vsel %vm6096, %v6146, %v6147
    %v6149 = vsel %vm6098, %v6146, %v6148
    %v6150 = vsel %vm6100, %v6146, %v6149
    %v6159 = vcombine.low %v6101, %v6108
    %v6161 = vunpack.c.l.s4 1934713408
    %v6162 = vunpack.c.0.s8 %v6161
    %v6163 = vlaneseq
    %v6164 = vshrl.u32 %v6163, 7
    %v6165 = vsub.s32 %v6162, %v6164
    %v6166 = vrot.slane %v6159, %v6165
    %v6167 = vcombine.high %v6166, 0.0
    %v6168 = vcombine.low %v6115, %v6122
    %v6170 = vunpack.c.l.s4 1934713408
    %v6171 = vunpack.c.0.s8 %v6170
    %v6172 = vlaneseq
    %v6173 = vshrl.u32 %v6172, 7
    %v6174 = vsub.s32 %v6171, %v6173
    %v6175 = vrot.slane %v6168, %v6174
    %v6176 = vcombine.high %v6175, 0.0
    %v6177 = vcombine.low %v6129, %v6136
    %v6179 = vunpack.c.l.s4 1934713408
    %v6180 = vunpack.c.0.s8 %v6179
    %v6181 = vlaneseq
    %v6182 = vshrl.u32 %v6181, 7
    %v6183 = vsub.s32 %v6180, %v6182
    %v6184 = vrot.slane %v6177, %v6183
    %v6185 = vcombine.high %v6184, 0.0
    %v6186 = vcombine.low %v6143, %v6150
    %v6188 = vunpack.c.l.s4 1934713408
    %v6189 = vunpack.c.0.s8 %v6188
    %v6190 = vlaneseq
    %v6191 = vshrl.u32 %v6190, 7
    %v6192 = vsub.s32 %v6189, %v6191
    %v6193 = vrot.slane %v6186, %v6192
    %v6194 = vcombine.high %v6193, 0.0
    %v6199 = vcombine.low %v6166, %v6175
    %v6200 = vcombine.low %v6184, %v6193
    %v6202 = vunpack.c.l.s4 1983009808
    %v6203 = vunpack.c.0.s8 %v6202
    %v6204 = vlaneseq
    %v6205 = vshrl.u32 %v6204, 7
    %v6206 = vsub.s32 %v6203, %v6205
    %v6207 = vrot.slane %v6199, %v6206
    %v6209 = vunpack.c.l.s4 1983009808
    %v6210 = vunpack.c.0.s8 %v6209
    %v6211 = vlaneseq
    %v6212 = vshrl.u32 %v6211, 7
    %v6213 = vsub.s32 %v6210, %v6212
    %v6214 = vrot.slane %v6200, %v6213
    %v6215 = vcombine.low %v6207, %v6214
    %v6221 = vcombine.low %v6167, %v6176
    %v6222 = vcombine.low %v6185, %v6194
    %v6224 = vunpack.c.l.s4 1983009808
    %v6225 = vunpack.c.0.s8 %v6224
    %v6226 = vlaneseq
    %v6227 = vshrl.u32 %v6226, 7
    %v6228 = vsub.s32 %v6225, %v6227
    %v6229 = vrot.slane %v6221, %v6228
    %v6231 = vunpack.c.l.s4 1983009808
    %v6232 = vunpack.c.0.s8 %v6231
    %v6233 = vlaneseq
    %v6234 = vshrl.u32 %v6233, 7
    %v6235 = vsub.s32 %v6232, %v6234
    %v6236 = vrot.slane %v6222, %v6235
    %v6237 = vcombine.low %v6229, %v6236
    %6238 = vrot.lane.b32.xlu0 %v6237, 50
    %v6239 = vpop.permute.xlu0 %6238
    %vm6241 = vcmask 408576
    %v6242 = vsel %vm6241, %v6215, %v6239
    %v6243 = vld [vmem:[#allocation8] sm:$0x1]
    %v6245 = vlaneseq
    %v6246 = vshrl.u32 %v6245, 7
    %v6247 = vsub.s32 0, %v6246
    %v6248 = vrot.slane %v6243, %v6247
    %v6250 = vadd.f32 %v6242, %v6248
    %vm6251 = vcmask 818176
    %v6252 = vsel %vm6251, %v6250, 0.0
    %6253 = vst [vmem:[#allocation10] sm:$0xff] %v6252
    // Predicated region
    $region38: #{tpu_custom_call.1} parent=1 // pred_check
      _
    $region39: #{tpu_custom_call.1} parent=1 // pred_check_branch
      %6255 = sbr.rel (0) target = $region41
    $region40: #{tpu_custom_call.1} parent=1 // pred_region
      %s6257 = ssub.s32 128, 128
      %6258 = vsyncadd [#allocation4], %s6257
      %s6260 = sshll.u32 [#allocation10], 4
      %s6261 = int_to_ptr.vmem [resolvable:$true] %s6260
      %6263 = dma.vmem_to_hbm [thread:$0]  %s6261, 128, %s5, [#allocation4]
    $region41: #{tpu_custom_call.1} parent=1 // pred_fallthru
      _
    // Predicated region
    $region42: #{tpu_custom_call.1} parent=1 // pred_check
      _
    $region43: #{tpu_custom_call.1} parent=1 // pred_check_branch
      %6265 = sbr.rel (0) target = $region45
    $region44: #{tpu_custom_call.1} parent=1 // pred_region
      %6266 = dma.done [#allocation4], 128
    $region45: #{tpu_custom_call.1} parent=1 // pred_fallthru
      _
    %6267 = vsyncpa [#allocation3], 1
    %6268 = vsyncpa [#allocation6], 1
    %6269 = vsyncpa [#allocation9], 1
    %6270 = vsyncpa [#allocation4], 1

</llo_original>
